<compile_context>
chip_gen: v7x
topology: tpu7x:2x2x1
jax: 0.10.0
libtpu: 0.0.40
codegen_flags: <defaults>
</compile_context>

<pallas_src>
import numpy as np
import jax
import jax.numpy as jnp
from jax.experimental import pallas as pl
from jax.experimental.pallas import tpu as pltpu


# ------------------------------ fused kernel --------------------------------
#
# xim_ref : (12*B, 168) bf16, row p1*B + b = concat of input rows 2p1..2p1+5.
# w1t_ref : (168, 512) bf16 Toeplitz conv1 weight, N groups g=hp*2+wp of 128.
# w2t_ref : (768, 512) bf16 Toeplitz conv2 weight (K = 6 groups of 128 lanes).
# w1f_ref : (512, 128) bf16 fc1 weight (NCHW flatten order, BN3-scaled).
# w2f_ref : (128, 128) bf16 fc2 weight (BN4-scaled).
# h*_ref  : (1, 128) f32 per-channel additive shifts (BN+bias folded).
def _net_fused_kernel(xim_ref, w1t_ref, w2t_ref, w1f_ref, w2f_ref,
                      h1_ref, h2_ref, h3_ref, h4_ref, out_ref):
    f32 = jnp.float32
    bf16 = jnp.bfloat16
    B = out_ref.shape[0]

    # ---- conv1 + bn1 -> 2x2 maxpool -> relu : one MXU pass ------------------
    c1 = jnp.dot(xim_ref[...], w1t_ref[...],
                 preferred_element_type=f32)              # (12B, 512)
    m1 = jnp.maximum(jnp.maximum(c1[:, 0:128], c1[:, 128:256]),
                     jnp.maximum(c1[:, 256:384], c1[:, 384:512]))
    a1 = jnp.maximum(m1 + h1_ref[...], 0.0).astype(bf16)  # (12B, 128)
    a1_rows = [a1[q * B:(q + 1) * B, :] for q in range(12)]

    # ---- conv2 LHS: H-im2col over pooled rows (lane concat, K=768) ----------
    lhs2 = jnp.concatenate(
        [jnp.concatenate(a1_rows[2 * p2:2 * p2 + 6], axis=1)
         for p2 in range(4)], axis=0)                     # (4B, 768)

    # ---- conv2 + bn2 -> 2x2 maxpool -> relu : one MXU pass ------------------
    c2 = jnp.dot(lhs2, w2t_ref[...], preferred_element_type=f32)   # (4B, 512)
    m2 = jnp.maximum(jnp.maximum(c2[:, 0:128], c2[:, 128:256]),
                     jnp.maximum(c2[:, 256:384], c2[:, 384:512]))
    a2 = jnp.maximum(m2 + h2_ref[...], 0.0).astype(bf16)  # (4B, 128)

    # ---- fc1 + bn3 + relu (dropout = identity in eval) ----------------------
    fin = jnp.concatenate([a2[p2 * B:(p2 + 1) * B, :] for p2 in range(4)],
                          axis=1)                         # (B, 512)
    z = jnp.dot(fin, w1f_ref[...], preferred_element_type=f32)     # (B, 128)
    z = jnp.maximum(z + h3_ref[...], 0.0).astype(bf16)

    # ---- fc2 + bn4 + log_softmax (classes padded 10 -> 128 lanes) -----------
    z2 = jnp.dot(z, w2f_ref[...], preferred_element_type=f32) + h4_ref[...]
    zmax = jnp.max(z2, axis=-1, keepdims=True)
    lse = jnp.log(jnp.sum(jnp.exp(z2 - zmax), axis=-1, keepdims=True))
    out_ref[...] = z2 - zmax - lse


# --------------------------- one-time weight prep ---------------------------

def _bn_fold(bias, bn, eps=1e-5):
    bias = np.asarray(bias, np.float32)
    gamma, beta, mean, var = (np.asarray(t, np.float32) for t in bn)
    inv = gamma / np.sqrt(var + eps)
    return inv, beta + (bias - mean) * inv


def prepare_params(p):
    w1 = np.asarray(p['conv1_w'], np.float32)           # (10, 1, 5, 5)
    w2 = np.asarray(p['conv2_w'], np.float32)           # (20, 10, 5, 5)
    fc1 = np.asarray(p['fc1_w'], np.float32)            # (50, 320)
    fc2 = np.asarray(p['fc2_w'], np.float32)            # (10, 50)

    s1, h1 = _bn_fold(p['conv1_b'], p['bn1'])
    s2, h2 = _bn_fold(p['conv2_b'], p['bn2'])
    s3, h3 = _bn_fold(p['fc1_b'], p['bn3'])
    s4, h4 = _bn_fold(p['fc2_b'], p['bn4'])

    w1s = w1 * s1[:, None, None, None]                   # fold BN1 scale
    w2s = w2 * s2[:, None, None, None]                   # fold BN2 scale

    # conv1 Toeplitz: rows = (input row offset dr)*28 + input col,
    # cols = (hp*2+wp)*128 + co*12 + j  (pooled col j, pooling phases hp/wp).
    W1T = np.zeros((168, 512), np.float32)
    for hp in range(2):
        for wp in range(2):
            g = hp * 2 + wp
            for co in range(10):
                for j in range(12):
                    for dh in range(5):
                        for dw in range(5):
                            W1T[(hp + dh) * 28 + 2 * j + wp + dw,
                                g * 128 + co * 12 + j] = w1s[co, 0, dh, dw]

    # conv2 Toeplitz: rows = dr*128 + ci*12 + pooled1-col, cols like conv1.
    W2T = np.zeros((768, 512), np.float32)
    for hp in range(2):
        for wp in range(2):
            g = hp * 2 + wp
            for co2 in range(20):
                for j2 in range(4):
                    for ci in range(10):
                        for dh in range(5):
                            for dw in range(5):
                                W2T[(hp + dh) * 128 + ci * 12 + 2 * j2 + wp + dw,
                                    g * 128 + co2 * 4 + j2] = w2s[co2, ci, dh, dw]

    # fc1 weight: rows p2*128 + co2*4 + j2  <->  PyTorch feature co2*16+p2*4+j2.
    W1F = np.zeros((512, 128), np.float32)
    for p2 in range(4):
        for co2 in range(20):
            for j2 in range(4):
                W1F[p2 * 128 + co2 * 4 + j2, :50] = (
                    fc1[:, co2 * 16 + p2 * 4 + j2] * s3)

    W2F = np.zeros((128, 128), np.float32)
    W2F[:50, :10] = fc2.T * s4[None, :]

    h1v = np.zeros((1, 128), np.float32); h1v[0, :120] = np.repeat(h1, 12)
    h2v = np.zeros((1, 128), np.float32); h2v[0, :80] = np.repeat(h2, 4)
    h3v = np.zeros((1, 128), np.float32); h3v[0, :50] = h3
    h4v = np.full((1, 128), -1e9, np.float32); h4v[0, :10] = h4   # mask pads

    return {
        'w1t': jnp.asarray(W1T, jnp.bfloat16),
        'w2t': jnp.asarray(W2T, jnp.bfloat16),
        'w1f': jnp.asarray(W1F, jnp.bfloat16),
        'w2f': jnp.asarray(W2F, jnp.bfloat16),
        'h1': jnp.asarray(h1v), 'h2': jnp.asarray(h2v),
        'h3': jnp.asarray(h3v), 'h4': jnp.asarray(h4v),
    }


# --------------------------------- forward ----------------------------------

def _round_up(x, m):
    return ((x + m - 1) // m) * m


def net_forward(x_nchw, prep, *, block_batch=128):
    """x_nchw: (N, 1, 28, 28) -> (N, 10) log-probs.

    block_batch: images per grid step.  Pick so that N/block_batch >= 2 on v7x
    (two TensorCores share the parallel grid axis)."""
    N = x_nchw.shape[0]
    B = _round_up(min(block_batch, _round_up(N, 16)), 16)   # bf16 tile aligned
    Npad = _round_up(N, B)
    grid = Npad // B

    # Wrapper-side prep (single fused XLA pass, bf16 transport):
    #   H-only im2col for conv1: per pooled row p1 the 6 input rows 2p1..2p1+5,
    #   flattened to K=168, laid out so each grid block is (12*B, 168) with
    #   rows ordered p1-major / image-minor (no in-kernel reshape needed).
    x = x_nchw.reshape(N, 28, 28).astype(jnp.bfloat16)
    if Npad != N:
        x = jnp.concatenate(
            [x, jnp.zeros((Npad - N, 28, 28), jnp.bfloat16)], axis=0)
    ridx = 2 * jnp.arange(12)[:, None] + jnp.arange(6)[None, :]   # (12, 6)
    xim = x[:, ridx, :]                                   # (Npad, 12, 6, 28)
    xim = (xim.reshape(grid, B, 12, 168)
              .transpose(0, 2, 1, 3)
              .reshape(grid * 12 * B, 168))

    out = pl.pallas_call(
        _net_fused_kernel,
        grid=(grid,),
        out_shape=jax.ShapeDtypeStruct((Npad, 128), jnp.float32),
        in_specs=[
            pl.BlockSpec((12 * B, 168), lambda n: (n, 0)),   # im2col'd images
            pl.BlockSpec((168, 512), lambda n: (0, 0)),      # conv1 Toeplitz
            pl.BlockSpec((768, 512), lambda n: (0, 0)),      # conv2 Toeplitz
            pl.BlockSpec((512, 128), lambda n: (0, 0)),      # fc1
            pl.BlockSpec((128, 128), lambda n: (0, 0)),      # fc2
            pl.BlockSpec((1, 128), lambda n: (0, 0)),        # bn1 shift
            pl.BlockSpec((1, 128), lambda n: (0, 0)),        # bn2 shift
            pl.BlockSpec((1, 128), lambda n: (0, 0)),        # bn3 shift
            pl.BlockSpec((1, 128), lambda n: (0, 0)),        # bn4 shift (+mask)
        ],
        out_specs=pl.BlockSpec((B, 128), lambda n: (n, 0)),
        compiler_params=pltpu.CompilerParams(
            dimension_semantics=("parallel",)),
    )(xim, prep['w1t'], prep['w2t'], prep['w1f'], prep['w2f'],
      prep['h1'], prep['h2'], prep['h3'], prep['h4'])
    return out[:N, :10]


# ------------------------- params / pure-JAX reference ----------------------

def init_params(key):
    ks = jax.random.split(key, 24)

    def unif(k, shape, fan_in):
        b = 1.0 / np.sqrt(fan_in)
        return jax.random.uniform(k, shape, jnp.float32, -b, b)

    def bn(k0, k1, k2, k3, n):
        return (1.0 + 0.1 * jax.random.normal(k0, (n,), jnp.float32),   # gamma
                0.1 * jax.random.normal(k1, (n,), jnp.float32),         # beta
                0.1 * jax.random.normal(k2, (n,), jnp.float32),         # mean
                jax.random.uniform(k3, (n,), jnp.float32, 0.5, 1.5))    # var

    return {
        'conv1_w': unif(ks[0], (10, 1, 5, 5), 25),
        'conv1_b': unif(ks[1], (10,), 25),
        'conv2_w': unif(ks[2], (20, 10, 5, 5), 250),
        'conv2_b': unif(ks[3], (20,), 250),
        'fc1_w': unif(ks[4], (50, 320), 320),
        'fc1_b': unif(ks[5], (50,), 320),
        'fc2_w': unif(ks[6], (10, 50), 50),
        'fc2_b': unif(ks[7], (10,), 50),
        'bn1': bn(ks[8], ks[9], ks[10], ks[11], 10),
        'bn2': bn(ks[12], ks[13], ks[14], ks[15], 20),
        'bn3': bn(ks[16], ks[17], ks[18], ks[19], 50),
        'bn4': bn(ks[20], ks[21], ks[22], ks[23], 10),
    }


def reference_forward(x_nchw, p):
    hi = jax.lax.Precision.HIGHEST

    def bn(z, bnp, c_axis):
        gamma, beta, mean, var = bnp
        shape = [1] * z.ndim
        shape[c_axis] = -1
        inv = gamma / jnp.sqrt(var + 1e-5)
        return z * inv.reshape(shape) + (beta - mean * inv).reshape(shape)

    z = jax.lax.conv_general_dilated(
        x_nchw.astype(jnp.float32), p['conv1_w'], (1, 1), 'VALID',
        dimension_numbers=('NCHW', 'OIHW', 'NCHW'), precision=hi)
    z = bn(z + p['conv1_b'].reshape(1, -1, 1, 1), p['bn1'], 1)
    z = jax.lax.reduce_window(z, -jnp.inf, jax.lax.max,
                              (1, 1, 2, 2), (1, 1, 2, 2), 'VALID')
    z = jnp.maximum(z, 0.0)
    z = jax.lax.conv_general_dilated(
        z, p['conv2_w'], (1, 1), 'VALID',
        dimension_numbers=('NCHW', 'OIHW', 'NCHW'), precision=hi)
    z = bn(z + p['conv2_b'].reshape(1, -1, 1, 1), p['bn2'], 1)
    z = jax.lax.reduce_window(z, -jnp.inf, jax.lax.max,
                              (1, 1, 2, 2), (1, 1, 2, 2), 'VALID')
    z = jnp.maximum(z, 0.0)
    z = z.reshape(z.shape[0], 320)
    z = bn(jnp.dot(z, p['fc1_w'].T, precision=hi) + p['fc1_b'], p['bn3'], 1)
    z = jnp.maximum(z, 0.0)
    z = bn(jnp.dot(z, p['fc2_w'].T, precision=hi) + p['fc2_b'], p['bn4'], 1)
    return jax.nn.log_softmax(z, axis=-1)


if __name__ == "__main__":
    key = jax.random.PRNGKey(0)
    k_params, k_x = jax.random.split(key)
    params = init_params(k_params)
    prep = prepare_params(params)                      # one-time weight prep

    N = 24
    x = jax.random.normal(k_x, (N, 1, 28, 28), jnp.float32)
    ref = reference_forward(x, params)

    # Multi-step grid path (B_TILE=16 -> grid of 2, exercises batch padding).
    fwd_tiled = jax.jit(lambda xb: net_forward(xb, prep, block_batch=16))
    out = jax.block_until_ready(fwd_tiled(x))
    assert out.shape == (N, 10), out.shape
    assert bool(jnp.all(jnp.isfinite(out)))
    assert bool(jnp.all(jnp.abs(jnp.sum(jnp.exp(out), axis=-1) - 1.0) < 1e-3))
    err = float(jnp.max(jnp.abs(out - ref)))
    assert err < 0.1, f"mismatch vs pure-JAX reference (tiled): {err}"

    # Default single-step path (whole batch in one grid step).
    fwd = jax.jit(lambda xb: net_forward(xb, prep))
    out2 = jax.block_until_ready(fwd(x))
    err2 = float(jnp.max(jnp.abs(out2 - ref)))
    assert err2 < 0.1, f"mismatch vs pure-JAX reference (single): {err2}"

    print("KERNEL_OK")
</pallas_src>

<mosaic_0001>
module attributes {stable_mosaic.version = 11 : i64} {
  func.func @_net_fused_kernel(%arg0: i32, %arg1: memref<192x168xbf16, #tpu.memory_space<vmem>>, %arg2: memref<168x512xbf16, #tpu.memory_space<vmem>>, %arg3: memref<768x512xbf16, #tpu.memory_space<vmem>>, %arg4: memref<512x128xbf16, #tpu.memory_space<vmem>>, %arg5: memref<128x128xbf16, #tpu.memory_space<vmem>>, %arg6: memref<1x128xf32, #tpu.memory_space<vmem>>, %arg7: memref<1x128xf32, #tpu.memory_space<vmem>>, %arg8: memref<1x128xf32, #tpu.memory_space<vmem>>, %arg9: memref<1x128xf32, #tpu.memory_space<vmem>>, %arg10: memref<16x128xf32, #tpu.memory_space<vmem>>) attributes {dimension_semantics = [#tpu.dimension_semantics<parallel>], iteration_bounds = array<i64: 2>, scalar_prefetch = 0 : i64, scratch_operands = 0 : i64, tpu.core_type = #tpu.core_type<tc>, window_params = [{transform_indices = @transform_0, window_bounds = array<i64: 192, 168>}, {pipeline_mode = #tpu.pipeline_mode<synchronous>, transform_indices = @transform_1, window_bounds = array<i64: 168, 512>}, {pipeline_mode = #tpu.pipeline_mode<synchronous>, transform_indices = @transform_2, window_bounds = array<i64: 768, 512>}, {pipeline_mode = #tpu.pipeline_mode<synchronous>, transform_indices = @transform_3, window_bounds = array<i64: 512, 128>}, {pipeline_mode = #tpu.pipeline_mode<synchronous>, transform_indices = @transform_4, window_bounds = array<i64: 128, 128>}, {pipeline_mode = #tpu.pipeline_mode<synchronous>, transform_indices = @transform_5, window_bounds = array<i64: 1, 128>}, {pipeline_mode = #tpu.pipeline_mode<synchronous>, transform_indices = @transform_6, window_bounds = array<i64: 1, 128>}, {pipeline_mode = #tpu.pipeline_mode<synchronous>, transform_indices = @transform_7, window_bounds = array<i64: 1, 128>}, {pipeline_mode = #tpu.pipeline_mode<synchronous>, transform_indices = @transform_8, window_bounds = array<i64: 1, 128>}, {transform_indices = @transform_9, window_bounds = array<i64: 16, 128>}]} {
    %c0 = arith.constant 0 : index
    %c0_0 = arith.constant 0 : index
    %0 = vector.load %arg1[%c0, %c0_0] : memref<192x168xbf16, #tpu.memory_space<vmem>>, vector<192x168xbf16>
    %c0_1 = arith.constant 0 : index
    %c0_2 = arith.constant 0 : index
    %1 = vector.load %arg2[%c0_1, %c0_2] : memref<168x512xbf16, #tpu.memory_space<vmem>>, vector<168x512xbf16>
    %cst = arith.constant dense<0.000000e+00> : vector<192x512xf32>
    %2 = tpu.matmul %0, %1, %cst {dimension_numbers = #tpu.dot_dimension_numbers<[1], [0], [0], [1], [0, 0, 1, 1], [], []>} : vector<192x168xbf16>, vector<168x512xbf16>, vector<192x512xf32> -> vector<192x512xf32>
    %3 = vector.extract_strided_slice %2 {offsets = [0, 0], sizes = [192, 128], strides = [1, 1]} : vector<192x512xf32> to vector<192x128xf32>
    %4 = vector.extract_strided_slice %2 {offsets = [0, 128], sizes = [192, 128], strides = [1, 1]} : vector<192x512xf32> to vector<192x128xf32>
    %5 = arith.maximumf %3, %4 : vector<192x128xf32>
    %6 = vector.extract_strided_slice %2 {offsets = [0, 256], sizes = [192, 128], strides = [1, 1]} : vector<192x512xf32> to vector<192x128xf32>
    %7 = vector.extract_strided_slice %2 {offsets = [0, 384], sizes = [192, 128], strides = [1, 1]} : vector<192x512xf32> to vector<192x128xf32>
    %8 = arith.maximumf %6, %7 : vector<192x128xf32>
    %9 = arith.maximumf %5, %8 : vector<192x128xf32>
    %c0_3 = arith.constant 0 : index
    %c0_4 = arith.constant 0 : index
    %10 = vector.load %arg6[%c0_3, %c0_4] : memref<1x128xf32, #tpu.memory_space<vmem>>, vector<1x128xf32>
    %11 = vector.broadcast %10 : vector<1x128xf32> to vector<192x128xf32>
    %12 = arith.addf %9, %11 : vector<192x128xf32>
    %cst_5 = arith.constant 0.000000e+00 : f32
    %13 = vector.broadcast %cst_5 : f32 to vector<192x128xf32>
    %14 = arith.maximumf %12, %13 : vector<192x128xf32>
    %15 = arith.truncf %14 : vector<192x128xf32> to vector<192x128xbf16>
    %16 = vector.extract_strided_slice %15 {offsets = [0, 0], sizes = [16, 128], strides = [1, 1]} : vector<192x128xbf16> to vector<16x128xbf16>
    %17 = vector.extract_strided_slice %15 {offsets = [16, 0], sizes = [16, 128], strides = [1, 1]} : vector<192x128xbf16> to vector<16x128xbf16>
    %18 = vector.extract_strided_slice %15 {offsets = [32, 0], sizes = [16, 128], strides = [1, 1]} : vector<192x128xbf16> to vector<16x128xbf16>
    %19 = vector.extract_strided_slice %15 {offsets = [48, 0], sizes = [16, 128], strides = [1, 1]} : vector<192x128xbf16> to vector<16x128xbf16>
    %20 = vector.extract_strided_slice %15 {offsets = [64, 0], sizes = [16, 128], strides = [1, 1]} : vector<192x128xbf16> to vector<16x128xbf16>
    %21 = vector.extract_strided_slice %15 {offsets = [80, 0], sizes = [16, 128], strides = [1, 1]} : vector<192x128xbf16> to vector<16x128xbf16>
    %22 = vector.extract_strided_slice %15 {offsets = [96, 0], sizes = [16, 128], strides = [1, 1]} : vector<192x128xbf16> to vector<16x128xbf16>
    %23 = vector.extract_strided_slice %15 {offsets = [112, 0], sizes = [16, 128], strides = [1, 1]} : vector<192x128xbf16> to vector<16x128xbf16>
    %24 = vector.extract_strided_slice %15 {offsets = [128, 0], sizes = [16, 128], strides = [1, 1]} : vector<192x128xbf16> to vector<16x128xbf16>
    %25 = vector.extract_strided_slice %15 {offsets = [144, 0], sizes = [16, 128], strides = [1, 1]} : vector<192x128xbf16> to vector<16x128xbf16>
    %26 = vector.extract_strided_slice %15 {offsets = [160, 0], sizes = [16, 128], strides = [1, 1]} : vector<192x128xbf16> to vector<16x128xbf16>
    %27 = vector.extract_strided_slice %15 {offsets = [176, 0], sizes = [16, 128], strides = [1, 1]} : vector<192x128xbf16> to vector<16x128xbf16>
    %28 = tpu.concatenate %16, %17, %18, %19, %20, %21 in 1 : vector<16x128xbf16>, vector<16x128xbf16>, vector<16x128xbf16>, vector<16x128xbf16>, vector<16x128xbf16>, vector<16x128xbf16> -> vector<16x768xbf16>
    %29 = tpu.concatenate %18, %19, %20, %21, %22, %23 in 1 : vector<16x128xbf16>, vector<16x128xbf16>, vector<16x128xbf16>, vector<16x128xbf16>, vector<16x128xbf16>, vector<16x128xbf16> -> vector<16x768xbf16>
    %30 = tpu.concatenate %20, %21, %22, %23, %24, %25 in 1 : vector<16x128xbf16>, vector<16x128xbf16>, vector<16x128xbf16>, vector<16x128xbf16>, vector<16x128xbf16>, vector<16x128xbf16> -> vector<16x768xbf16>
    %31 = tpu.concatenate %22, %23, %24, %25, %26, %27 in 1 : vector<16x128xbf16>, vector<16x128xbf16>, vector<16x128xbf16>, vector<16x128xbf16>, vector<16x128xbf16>, vector<16x128xbf16> -> vector<16x768xbf16>
    %32 = tpu.concatenate %28, %29, %30, %31 in 0 : vector<16x768xbf16>, vector<16x768xbf16>, vector<16x768xbf16>, vector<16x768xbf16> -> vector<64x768xbf16>
    %c0_6 = arith.constant 0 : index
    %c0_7 = arith.constant 0 : index
    %33 = vector.load %arg3[%c0_6, %c0_7] : memref<768x512xbf16, #tpu.memory_space<vmem>>, vector<768x512xbf16>
    %cst_8 = arith.constant dense<0.000000e+00> : vector<64x512xf32>
    %34 = tpu.matmul %32, %33, %cst_8 {dimension_numbers = #tpu.dot_dimension_numbers<[1], [0], [0], [1], [0, 0, 1, 1], [], []>} : vector<64x768xbf16>, vector<768x512xbf16>, vector<64x512xf32> -> vector<64x512xf32>
    %35 = vector.extract_strided_slice %34 {offsets = [0, 0], sizes = [64, 128], strides = [1, 1]} : vector<64x512xf32> to vector<64x128xf32>
    %36 = vector.extract_strided_slice %34 {offsets = [0, 128], sizes = [64, 128], strides = [1, 1]} : vector<64x512xf32> to vector<64x128xf32>
    %37 = arith.maximumf %35, %36 : vector<64x128xf32>
    %38 = vector.extract_strided_slice %34 {offsets = [0, 256], sizes = [64, 128], strides = [1, 1]} : vector<64x512xf32> to vector<64x128xf32>
    %39 = vector.extract_strided_slice %34 {offsets = [0, 384], sizes = [64, 128], strides = [1, 1]} : vector<64x512xf32> to vector<64x128xf32>
    %40 = arith.maximumf %38, %39 : vector<64x128xf32>
    %41 = arith.maximumf %37, %40 : vector<64x128xf32>
    %c0_9 = arith.constant 0 : index
    %c0_10 = arith.constant 0 : index
    %42 = vector.load %arg7[%c0_9, %c0_10] : memref<1x128xf32, #tpu.memory_space<vmem>>, vector<1x128xf32>
    %43 = vector.broadcast %42 : vector<1x128xf32> to vector<64x128xf32>
    %44 = arith.addf %41, %43 : vector<64x128xf32>
    %cst_11 = arith.constant 0.000000e+00 : f32
    %45 = vector.broadcast %cst_11 : f32 to vector<64x128xf32>
    %46 = arith.maximumf %44, %45 : vector<64x128xf32>
    %47 = arith.truncf %46 : vector<64x128xf32> to vector<64x128xbf16>
    %48 = vector.extract_strided_slice %47 {offsets = [0, 0], sizes = [16, 128], strides = [1, 1]} : vector<64x128xbf16> to vector<16x128xbf16>
    %49 = vector.extract_strided_slice %47 {offsets = [16, 0], sizes = [16, 128], strides = [1, 1]} : vector<64x128xbf16> to vector<16x128xbf16>
    %50 = vector.extract_strided_slice %47 {offsets = [32, 0], sizes = [16, 128], strides = [1, 1]} : vector<64x128xbf16> to vector<16x128xbf16>
    %51 = vector.extract_strided_slice %47 {offsets = [48, 0], sizes = [16, 128], strides = [1, 1]} : vector<64x128xbf16> to vector<16x128xbf16>
    %52 = tpu.concatenate %48, %49, %50, %51 in 1 : vector<16x128xbf16>, vector<16x128xbf16>, vector<16x128xbf16>, vector<16x128xbf16> -> vector<16x512xbf16>
    %c0_12 = arith.constant 0 : index
    %c0_13 = arith.constant 0 : index
    %53 = vector.load %arg4[%c0_12, %c0_13] : memref<512x128xbf16, #tpu.memory_space<vmem>>, vector<512x128xbf16>
    %cst_14 = arith.constant dense<0.000000e+00> : vector<16x128xf32>
    %54 = tpu.matmul %52, %53, %cst_14 {dimension_numbers = #tpu.dot_dimension_numbers<[1], [0], [0], [1], [0, 0, 1, 1], [], []>} : vector<16x512xbf16>, vector<512x128xbf16>, vector<16x128xf32> -> vector<16x128xf32>
    %c0_15 = arith.constant 0 : index
    %c0_16 = arith.constant 0 : index
    %55 = vector.load %arg8[%c0_15, %c0_16] : memref<1x128xf32, #tpu.memory_space<vmem>>, vector<1x128xf32>
    %56 = vector.broadcast %55 : vector<1x128xf32> to vector<16x128xf32>
    %57 = arith.addf %54, %56 : vector<16x128xf32>
    %cst_17 = arith.constant 0.000000e+00 : f32
    %58 = vector.broadcast %cst_17 : f32 to vector<16x128xf32>
    %59 = arith.maximumf %57, %58 : vector<16x128xf32>
    %60 = arith.truncf %59 : vector<16x128xf32> to vector<16x128xbf16>
    %c0_18 = arith.constant 0 : index
    %c0_19 = arith.constant 0 : index
    %61 = vector.load %arg5[%c0_18, %c0_19] : memref<128x128xbf16, #tpu.memory_space<vmem>>, vector<128x128xbf16>
    %cst_20 = arith.constant dense<0.000000e+00> : vector<16x128xf32>
    %62 = tpu.matmul %60, %61, %cst_20 {dimension_numbers = #tpu.dot_dimension_numbers<[1], [0], [0], [1], [0, 0, 1, 1], [], []>} : vector<16x128xbf16>, vector<128x128xbf16>, vector<16x128xf32> -> vector<16x128xf32>
    %c0_21 = arith.constant 0 : index
    %c0_22 = arith.constant 0 : index
    %63 = vector.load %arg9[%c0_21, %c0_22] : memref<1x128xf32, #tpu.memory_space<vmem>>, vector<1x128xf32>
    %64 = vector.broadcast %63 : vector<1x128xf32> to vector<16x128xf32>
    %65 = arith.addf %62, %64 : vector<16x128xf32>
    %cst_23 = arith.constant dense<0xFF800000> : vector<16xf32>
    %66 = vector.multi_reduction <maximumf>, %65, %cst_23 [1] : vector<16x128xf32> to vector<16xf32>
    %67 = vector.shape_cast %66 : vector<16xf32> to vector<16x1xf32>
    %68 = vector.broadcast %67 : vector<16x1xf32> to vector<16x128xf32>
    %69 = arith.subf %65, %68 : vector<16x128xf32>
    %70 = math.exp %69 : vector<16x128xf32>
    %cst_24 = arith.constant dense<0.000000e+00> : vector<16xf32>
    %71 = vector.multi_reduction <add>, %70, %cst_24 [1] : vector<16x128xf32> to vector<16xf32>
    %72 = vector.shape_cast %71 : vector<16xf32> to vector<16x1xf32>
    %73 = math.log %72 : vector<16x1xf32>
    %74 = vector.broadcast %67 : vector<16x1xf32> to vector<16x128xf32>
    %75 = arith.subf %65, %74 : vector<16x128xf32>
    %76 = vector.broadcast %73 : vector<16x1xf32> to vector<16x128xf32>
    %77 = arith.subf %75, %76 : vector<16x128xf32>
    %c0_25 = arith.constant 0 : index
    %c0_26 = arith.constant 0 : index
    %78 = vector.load %arg10[%c0_25, %c0_26] : memref<16x128xf32, #tpu.memory_space<vmem>>, vector<16x128xf32>
    tpu.vector_store %arg10[%c0_25, %c0_26], %77 {strides = array<i32>} : memref<16x128xf32, #tpu.memory_space<vmem>>, vector<16x128xf32>,
    return
  }
  func.func @transform_0(%arg0: i32) -> (i32, i32) {
    %c0_i32 = arith.constant 0 : i32
    %c0_i32_0 = arith.constant 0 : i32
    return %arg0, %c0_i32 : i32, i32
  }
  func.func @transform_1(%arg0: i32) -> (i32, i32) {
    %c0_i32 = arith.constant 0 : i32
    %c0_i32_0 = arith.constant 0 : i32
    %c0_i32_1 = arith.constant 0 : i32
    return %c0_i32, %c0_i32_0 : i32, i32
  }
  func.func @transform_2(%arg0: i32) -> (i32, i32) {
    %c0_i32 = arith.constant 0 : i32
    %c0_i32_0 = arith.constant 0 : i32
    %c0_i32_1 = arith.constant 0 : i32
    return %c0_i32, %c0_i32_0 : i32, i32
  }
  func.func @transform_3(%arg0: i32) -> (i32, i32) {
    %c0_i32 = arith.constant 0 : i32
    %c0_i32_0 = arith.constant 0 : i32
    %c0_i32_1 = arith.constant 0 : i32
    return %c0_i32, %c0_i32_0 : i32, i32
  }
  func.func @transform_4(%arg0: i32) -> (i32, i32) {
    %c0_i32 = arith.constant 0 : i32
    %c0_i32_0 = arith.constant 0 : i32
    %c0_i32_1 = arith.constant 0 : i32
    return %c0_i32, %c0_i32_0 : i32, i32
  }
  func.func @transform_5(%arg0: i32) -> (i32, i32) {
    %c0_i32 = arith.constant 0 : i32
    %c0_i32_0 = arith.constant 0 : i32
    %c0_i32_1 = arith.constant 0 : i32
    return %c0_i32, %c0_i32_0 : i32, i32
  }
  func.func @transform_6(%arg0: i32) -> (i32, i32) {
    %c0_i32 = arith.constant 0 : i32
    %c0_i32_0 = arith.constant 0 : i32
    %c0_i32_1 = arith.constant 0 : i32
    return %c0_i32, %c0_i32_0 : i32, i32
  }
  func.func @transform_7(%arg0: i32) -> (i32, i32) {
    %c0_i32 = arith.constant 0 : i32
    %c0_i32_0 = arith.constant 0 : i32
    %c0_i32_1 = arith.constant 0 : i32
    return %c0_i32, %c0_i32_0 : i32, i32
  }
  func.func @transform_8(%arg0: i32) -> (i32, i32) {
    %c0_i32 = arith.constant 0 : i32
    %c0_i32_0 = arith.constant 0 : i32
    %c0_i32_1 = arith.constant 0 : i32
    return %c0_i32, %c0_i32_0 : i32, i32
  }
  func.func @transform_9(%arg0: i32) -> (i32, i32) {
    %c0_i32 = arith.constant 0 : i32
    %c0_i32_0 = arith.constant 0 : i32
    return %arg0, %c0_i32 : i32, i32
  }
}

</mosaic_0001>

<llo_original>
// kernel: _lambda_.1
$region0: #{_lambda_.1}
  #allocation0 [shape = 'u32[]', space=smem, size = 0x4, offset = 0x4, fixed_abs, tag = 'smem constant byte address 0x4 - core index']
  #allocation1 [shape = 'u32[144,128]{1,0:T(1,128)}', space=vmem, size = 0x12000, scoped, tag = 'internal scratch']
  %s0 = inlined_call_operand.vmem [shape: bf16[384,168], index: 0, kind: input, shape index: {}]
  %s1 = inlined_call_operand.vmem [shape: bf16[168,512], index: 1, kind: input, shape index: {}]
  %s2 = inlined_call_operand.vmem [shape: bf16[768,512], index: 2, kind: input, shape index: {}]
  %s3 = inlined_call_operand.vmem [shape: bf16[512,128], index: 3, kind: input, shape index: {}]
  %s4 = inlined_call_operand.vmem [shape: bf16[128,128], index: 4, kind: input, shape index: {}]
  %s5 = inlined_call_operand.vmem [shape: f32[1,128], index: 5, kind: input, shape index: {}]
  %s6 = inlined_call_operand.vmem [shape: f32[1,128], index: 6, kind: input, shape index: {}]
  %s7 = inlined_call_operand.vmem [shape: f32[1,128], index: 7, kind: input, shape index: {}]
  %s8 = inlined_call_operand.vmem [shape: f32[1,128], index: 8, kind: input, shape index: {}]
  %s9 = inlined_call_operand.vmem [shape: f32[32,128], index: 9, kind: output, shape index: {}]
  %s10 = sld [smem:[#allocation0]]
  $region69: #{_lambda_.1} parent=0
    _
  %s12 = ssub.s32 1, %s10
  %s13 = scalar_select 0, %s12, %s10
  loop: start=0, step=1, limit=4
  $region2: #{_lambda_.1} parent=0 // loop_pre_header
    _
  $region3: #{_lambda_.1} parent=0 // loop_header
    %s15 = sphi 0, %s19
    %p16 = scmp.ge.s32.totalorder %s15, 4
    %s25 = sphi 0, %s27
    %s28 = sphi 0, %s25
    %s29 = sphi 0, %s28
    %s45 = sphi 0, %s29
    %s49 = sphi 0, %s49
    %s51 = sphi 0, %s49
    %s52 = sphi 0, %s51
    %s66 = sphi 0, %s52
    %s70 = sphi 0, %s70
    %s72 = sphi 0, %s70
    %s73 = sphi 0, %s72
    %s87 = sphi 0, %s73
    %s91 = sphi 0, %s91
    %s93 = sphi 0, %s91
    %s94 = sphi 0, %s93
    %s108 = sphi 0, %s94
    %s112 = sphi 0, %s112
    %s114 = sphi 0, %s112
    %s115 = sphi 0, %s114
    %s129 = sphi 0, %s115
    %s133 = sphi 0, %s133
    %s135 = sphi 0, %s133
    %s136 = sphi 0, %s135
    %s150 = sphi 0, %s136
    %s154 = sphi 0, %s154
    %s156 = sphi 0, %s154
    %s157 = sphi 0, %s156
    %s171 = sphi 0, %s157
    %s175 = sphi 0, %s175
    %s177 = sphi 0, %s175
    %s178 = sphi 0, %s177
    %s192 = sphi 0, %s178
    %s196 = sphi 0, %s196
    %s198 = sphi 0, %s196
    %s199 = sphi 0, %s198
    %s213 = sphi 0, %s199
    %s219 = sphi 0, %s221
    %s222 = sphi 0, %s219
    %s223 = sphi 0, %s222
    %s239 = sphi 0, %s223
  $region4: #{_lambda_.1} parent=0 // loop_header_branch
    %18 = sbr.rel (%p16) target = $region8
  $region5: #{_lambda_.1} parent=0 // loop_body
    %s20 = ssub.s32 %s15, 1
    %s21 = ssub.s32 %s15, 2
    %s22 = sadd.s32 %s15, 1
    %s23 = ssub.s32 %s15, %s22
    %p24 = scmp.eq.s32.totalorder %s23, 0
    %s26 = sadd.s32 %s25, 1
    %s27 = scalar_select %p24, %s25, %s26
    %p30 = pneg %p24
    %p31 = scmp.eq.s32.totalorder %s15, 1
    %p32 = por %p30, %p31
    %p33 = scmp.ne.s32.totalorder %s25, %s28
    %p34 = scmp.eq.s32.totalorder %s15, 0
    %p35 = por %p33, %p34
    %p36 = scmp.ne.s32.totalorder %s25, %s28
    %p37 = scmp.eq.s32.totalorder %s20, 1
    %p38 = por %p36, %p37
    %p39 = scmp.ne.s32.totalorder %s28, %s29
    %p40 = scmp.eq.s32.totalorder %s20, 0
    %p41 = por %p39, %p40
    %p42 = scmp.ne.s32.totalorder %s28, %s29
    %p43 = scmp.eq.s32.totalorder %s21, 1
    %p44 = por %p42, %p43
    %p46 = scmp.ne.s32.totalorder %s29, %s45
    %p47 = scmp.eq.s32.totalorder %s21, 0
    %p48 = por %p46, %p47
    %s50 = sadd.s32 %s49, 1
    %p53 = scmp.eq.s32.totalorder %s15, 1
    %p54 = scmp.ne.s32.totalorder %s49, %s51
    %p55 = scmp.eq.s32.totalorder %s15, 0
    %p56 = por %p54, %p55
    %p57 = scmp.ne.s32.totalorder %s49, %s51
    %p58 = scmp.eq.s32.totalorder %s20, 1
    %p59 = por %p57, %p58
    %p60 = scmp.ne.s32.totalorder %s51, %s52
    %p61 = scmp.eq.s32.totalorder %s20, 0
    %p62 = por %p60, %p61
    %p63 = scmp.ne.s32.totalorder %s51, %s52
    %p64 = scmp.eq.s32.totalorder %s21, 1
    %p65 = por %p63, %p64
    %p67 = scmp.ne.s32.totalorder %s52, %s66
    %p68 = scmp.eq.s32.totalorder %s21, 0
    %p69 = por %p67, %p68
    %s71 = sadd.s32 %s70, 1
    %p74 = scmp.eq.s32.totalorder %s15, 1
    %p75 = scmp.ne.s32.totalorder %s70, %s72
    %p76 = scmp.eq.s32.totalorder %s15, 0
    %p77 = por %p75, %p76
    %p78 = scmp.ne.s32.totalorder %s70, %s72
    %p79 = scmp.eq.s32.totalorder %s20, 1
    %p80 = por %p78, %p79
    %p81 = scmp.ne.s32.totalorder %s72, %s73
    %p82 = scmp.eq.s32.totalorder %s20, 0
    %p83 = por %p81, %p82
    %p84 = scmp.ne.s32.totalorder %s72, %s73
    %p85 = scmp.eq.s32.totalorder %s21, 1
    %p86 = por %p84, %p85
    %p88 = scmp.ne.s32.totalorder %s73, %s87
    %p89 = scmp.eq.s32.totalorder %s21, 0
    %p90 = por %p88, %p89
    %s92 = sadd.s32 %s91, 1
    %p95 = scmp.eq.s32.totalorder %s15, 1
    %p96 = scmp.ne.s32.totalorder %s91, %s93
    %p97 = scmp.eq.s32.totalorder %s15, 0
    %p98 = por %p96, %p97
    %p99 = scmp.ne.s32.totalorder %s91, %s93
    %p100 = scmp.eq.s32.totalorder %s20, 1
    %p101 = por %p99, %p100
    %p102 = scmp.ne.s32.totalorder %s93, %s94
    %p103 = scmp.eq.s32.totalorder %s20, 0
    %p104 = por %p102, %p103
    %p105 = scmp.ne.s32.totalorder %s93, %s94
    %p106 = scmp.eq.s32.totalorder %s21, 1
    %p107 = por %p105, %p106
    %p109 = scmp.ne.s32.totalorder %s94, %s108
    %p110 = scmp.eq.s32.totalorder %s21, 0
    %p111 = por %p109, %p110
    %s113 = sadd.s32 %s112, 1
    %p116 = scmp.eq.s32.totalorder %s15, 1
    %p117 = scmp.ne.s32.totalorder %s112, %s114
    %p118 = scmp.eq.s32.totalorder %s15, 0
    %p119 = por %p117, %p118
    %p120 = scmp.ne.s32.totalorder %s112, %s114
    %p121 = scmp.eq.s32.totalorder %s20, 1
    %p122 = por %p120, %p121
    %p123 = scmp.ne.s32.totalorder %s114, %s115
    %p124 = scmp.eq.s32.totalorder %s20, 0
    %p125 = por %p123, %p124
    %p126 = scmp.ne.s32.totalorder %s114, %s115
    %p127 = scmp.eq.s32.totalorder %s21, 1
    %p128 = por %p126, %p127
    %p130 = scmp.ne.s32.totalorder %s115, %s129
    %p131 = scmp.eq.s32.totalorder %s21, 0
    %p132 = por %p130, %p131
    %s134 = sadd.s32 %s133, 1
    %p137 = scmp.eq.s32.totalorder %s15, 1
    %p138 = scmp.ne.s32.totalorder %s133, %s135
    %p139 = scmp.eq.s32.totalorder %s15, 0
    %p140 = por %p138, %p139
    %p141 = scmp.ne.s32.totalorder %s133, %s135
    %p142 = scmp.eq.s32.totalorder %s20, 1
    %p143 = por %p141, %p142
    %p144 = scmp.ne.s32.totalorder %s135, %s136
    %p145 = scmp.eq.s32.totalorder %s20, 0
    %p146 = por %p144, %p145
    %p147 = scmp.ne.s32.totalorder %s135, %s136
    %p148 = scmp.eq.s32.totalorder %s21, 1
    %p149 = por %p147, %p148
    %p151 = scmp.ne.s32.totalorder %s136, %s150
    %p152 = scmp.eq.s32.totalorder %s21, 0
    %p153 = por %p151, %p152
    %s155 = sadd.s32 %s154, 1
    %p158 = scmp.eq.s32.totalorder %s15, 1
    %p159 = scmp.ne.s32.totalorder %s154, %s156
    %p160 = scmp.eq.s32.totalorder %s15, 0
    %p161 = por %p159, %p160
    %p162 = scmp.ne.s32.totalorder %s154, %s156
    %p163 = scmp.eq.s32.totalorder %s20, 1
    %p164 = por %p162, %p163
    %p165 = scmp.ne.s32.totalorder %s156, %s157
    %p166 = scmp.eq.s32.totalorder %s20, 0
    %p167 = por %p165, %p166
    %p168 = scmp.ne.s32.totalorder %s156, %s157
    %p169 = scmp.eq.s32.totalorder %s21, 1
    %p170 = por %p168, %p169
    %p172 = scmp.ne.s32.totalorder %s157, %s171
    %p173 = scmp.eq.s32.totalorder %s21, 0
    %p174 = por %p172, %p173
    %s176 = sadd.s32 %s175, 1
    %p179 = scmp.eq.s32.totalorder %s15, 1
    %p180 = scmp.ne.s32.totalorder %s175, %s177
    %p181 = scmp.eq.s32.totalorder %s15, 0
    %p182 = por %p180, %p181
    %p183 = scmp.ne.s32.totalorder %s175, %s177
    %p184 = scmp.eq.s32.totalorder %s20, 1
    %p185 = por %p183, %p184
    %p186 = scmp.ne.s32.totalorder %s177, %s178
    %p187 = scmp.eq.s32.totalorder %s20, 0
    %p188 = por %p186, %p187
    %p189 = scmp.ne.s32.totalorder %s177, %s178
    %p190 = scmp.eq.s32.totalorder %s21, 1
    %p191 = por %p189, %p190
    %p193 = scmp.ne.s32.totalorder %s178, %s192
    %p194 = scmp.eq.s32.totalorder %s21, 0
    %p195 = por %p193, %p194
    %s197 = sadd.s32 %s196, 1
    %p200 = scmp.eq.s32.totalorder %s15, 1
    %p201 = scmp.ne.s32.totalorder %s196, %s198
    %p202 = scmp.eq.s32.totalorder %s15, 0
    %p203 = por %p201, %p202
    %p204 = scmp.ne.s32.totalorder %s196, %s198
    %p205 = scmp.eq.s32.totalorder %s20, 1
    %p206 = por %p204, %p205
    %p207 = scmp.ne.s32.totalorder %s198, %s199
    %p208 = scmp.eq.s32.totalorder %s20, 0
    %p209 = por %p207, %p208
    %p210 = scmp.ne.s32.totalorder %s198, %s199
    %p211 = scmp.eq.s32.totalorder %s21, 1
    %p212 = por %p210, %p211
    %p214 = scmp.ne.s32.totalorder %s199, %s213
    %p215 = scmp.eq.s32.totalorder %s21, 0
    %p216 = por %p214, %p215
    %s217 = ssub.s32 %s15, %s22
    %p218 = scmp.eq.s32.totalorder %s217, 0
    %s220 = sadd.s32 %s219, 1
    %s221 = scalar_select %p218, %s219, %s220
    %p224 = pneg %p218
    %p225 = scmp.eq.s32.totalorder %s15, 1
    %p226 = por %p224, %p225
    %p227 = scmp.ne.s32.totalorder %s219, %s222
    %p228 = scmp.eq.s32.totalorder %s15, 0
    %p229 = por %p227, %p228
    %p230 = scmp.ne.s32.totalorder %s219, %s222
    %p231 = scmp.eq.s32.totalorder %s20, 1
    %p232 = por %p230, %p231
    %p233 = scmp.ne.s32.totalorder %s222, %s223
    %p234 = scmp.eq.s32.totalorder %s20, 0
    %p235 = por %p233, %p234
    %p236 = scmp.ne.s32.totalorder %s222, %s223
    %p237 = scmp.eq.s32.totalorder %s21, 1
    %p238 = por %p236, %p237
    %p240 = scmp.ne.s32.totalorder %s223, %s239
    %p241 = scmp.eq.s32.totalorder %s21, 0
    %p242 = por %p240, %p241
    %p243 = scmp.le.s32.totalorder 1, %s15
    %p244 = scmp.lt.s32.totalorder %s15, 3
    %p245 = pnand %p243, %p244
    %p246 = pneg %p245
    // Predicated region
    $region9: #{_lambda_.1} parent=5 // pred_check
      _
    $region10: #{_lambda_.1} parent=5 // pred_check_branch
      %248 = sbr.rel (%p245) target = $region12
    $region11: #{_lambda_.1} parent=5 // pred_region
      %s249 = ssub.s32 %s15, 1
      // Predicated region
      $region13: #{_lambda_.1} parent=11 // pred_check
        %p250 = pneg %p62
      $region14: #{_lambda_.1} parent=11 // pred_check_branch
        %252 = sbr.rel (%p250) target = $region16
      $region15: #{_lambda_.1} parent=11 // pred_region
        _
      $region16: #{_lambda_.1} parent=11 // pred_fallthru
        _
      // Predicated region
      $region17: #{_lambda_.1} parent=11 // pred_check
        %p253 = pneg %p83
      $region18: #{_lambda_.1} parent=11 // pred_check_branch
        %255 = sbr.rel (%p253) target = $region20
      $region19: #{_lambda_.1} parent=11 // pred_region
        _
      $region20: #{_lambda_.1} parent=11 // pred_fallthru
        _
      // Predicated region
      $region21: #{_lambda_.1} parent=11 // pred_check
        %p256 = pneg %p104
      $region22: #{_lambda_.1} parent=11 // pred_check_branch
        %258 = sbr.rel (%p256) target = $region24
      $region23: #{_lambda_.1} parent=11 // pred_region
        _
      $region24: #{_lambda_.1} parent=11 // pred_fallthru
        _
      // Predicated region
      $region25: #{_lambda_.1} parent=11 // pred_check
        %p259 = pneg %p125
      $region26: #{_lambda_.1} parent=11 // pred_check_branch
        %261 = sbr.rel (%p259) target = $region28
      $region27: #{_lambda_.1} parent=11 // pred_region
        _
      $region28: #{_lambda_.1} parent=11 // pred_fallthru
        _
      // Predicated region
      $region29: #{_lambda_.1} parent=11 // pred_check
        %p262 = pneg %p146
      $region30: #{_lambda_.1} parent=11 // pred_check_branch
        %264 = sbr.rel (%p262) target = $region32
      $region31: #{_lambda_.1} parent=11 // pred_region
        _
      $region32: #{_lambda_.1} parent=11 // pred_fallthru
        _
      // Predicated region
      $region33: #{_lambda_.1} parent=11 // pred_check
        %p265 = pneg %p167
      $region34: #{_lambda_.1} parent=11 // pred_check_branch
        %267 = sbr.rel (%p265) target = $region36
      $region35: #{_lambda_.1} parent=11 // pred_region
        _
      $region36: #{_lambda_.1} parent=11 // pred_fallthru
        _
      // Predicated region
      $region37: #{_lambda_.1} parent=11 // pred_check
        %p268 = pneg %p188
      $region38: #{_lambda_.1} parent=11 // pred_check_branch
        %270 = sbr.rel (%p268) target = $region40
      $region39: #{_lambda_.1} parent=11 // pred_region
        _
      $region40: #{_lambda_.1} parent=11 // pred_fallthru
        _
      // Predicated region
      $region41: #{_lambda_.1} parent=11 // pred_check
        %p271 = pneg %p209
      $region42: #{_lambda_.1} parent=11 // pred_check_branch
        %273 = sbr.rel (%p271) target = $region44
      $region43: #{_lambda_.1} parent=11 // pred_region
        _
      $region44: #{_lambda_.1} parent=11 // pred_fallthru
        _
    $region12: #{_lambda_.1} parent=5 // pred_fallthru
      _
    %p274 = scmp.lt.s32.totalorder %s15, 2
    // Predicated region
    $region45: #{_lambda_.1} parent=5 // pred_check
      %p275 = pneg %p274
    $region46: #{_lambda_.1} parent=5 // pred_check_branch
      %277 = sbr.rel (%p275) target = $region48
    $region47: #{_lambda_.1} parent=5 // pred_region
      // Predicated region
      $region49: #{_lambda_.1} parent=47 // pred_check
        %p278 = pneg %p35
      $region50: #{_lambda_.1} parent=47 // pred_check_branch
        %280 = sbr.rel (%p278) target = $region52
      $region51: #{_lambda_.1} parent=47 // pred_region
        %s281 = smul.u32 24, %s15
        %p282 = scmp.lt.s32.totalorder %s281, 47
        %s283 = scalar_select %p282, %s281, 47
        %s284 = smul.addr %s283, 2
        %s285 = smul.addr %s284, 4
        %s286 = scalar_lea.vmem %s0, %s285
        %s287 = smul.u32 24, %s15
      $region52: #{_lambda_.1} parent=47 // pred_fallthru
        _
    $region48: #{_lambda_.1} parent=5 // pred_fallthru
      _
    %p288 = scmp.le.s32.totalorder 1, %s15
    %p289 = scmp.lt.s32.totalorder %s15, 3
    %p290 = pnand %p288, %p289
    %p291 = pneg %p290
    // Predicated region
    $region53: #{_lambda_.1} parent=5 // pred_check
      _
    $region54: #{_lambda_.1} parent=5 // pred_check_branch
      %293 = sbr.rel (%p290) target = $region56
    $region55: #{_lambda_.1} parent=5 // pred_region
      %s294 = ssub.s32 %s15, 1
      %s295 = smul.u32 24, %s20
      %p296 = scmp.lt.s32.totalorder %s295, 47
      %s297 = scalar_select %p296, %s295, 47
      %s298 = smul.addr %s297, 2
      %s299 = smul.addr %s298, 4
      %s300 = scalar_lea.vmem %s0, %s299
      %p301 = pneg %p41
      %p302 = pneg %p38
      %p303 = pneg %p62
      %p304 = pneg %p59
      %p305 = pneg %p83
      %p306 = pneg %p80
      %p307 = pneg %p104
      %p308 = pneg %p101
      %p309 = pneg %p125
      %p310 = pneg %p122
      %p311 = pneg %p146
      %p312 = pneg %p143
      %p313 = pneg %p167
      %p314 = pneg %p164
      %p315 = pneg %p188
      %p316 = pneg %p185
      %p317 = pneg %p209
      %p318 = pneg %p206
      %p319 = pneg %p235
      %p320 = pneg %p232
      %s321 = smul.u32 2, %s20
      %p322 = scmp.lt.s32.totalorder %s321, 3
      %s323 = scalar_select %p322, %s321, 3
      %s324 = smul.addr %s323, 8
      %s325 = scalar_lea.vmem %s9, %s324
      %s326 = smul.u32 24, %s20
      %p327 = scmp.lt.s32.totalorder %s326, 47
      %s328 = scalar_select %p327, %s326, 47
      %s329 = smul.addr %s328, 2
      %s330 = smul.addr %s329, 4
      %s331 = scalar_lea.vmem %s0, %s330
      %s332 = smul.u32 24, %s20
      %s333 = smul.u32 2, %s20
      %p334 = scmp.lt.s32.totalorder %s333, 3
      %s335 = scalar_select %p334, %s333, 3
      %s336 = smul.addr %s335, 8
      %s337 = scalar_lea.vmem %s9, %s336
      %s338 = smul.u32 2, %s20
      %v340 = vld [vmem:[%s331] sm:$0xff]
      %v341 = vld [vmem:[%s331 + $0x8] sm:$0xff]
      %v342 = vld [vmem:[%s331 + $0x10] sm:$0xff]
      %v343 = vld [vmem:[%s331 + $0x18] sm:$0xff]
      %v344 = vld [vmem:[%s331 + $0x20] sm:$0xff]
      %v345 = vld [vmem:[%s331 + $0x28] sm:$0xff]
      %v346 = vld [vmem:[%s331 + $0x30] sm:$0xff]
      %v347 = vld [vmem:[%s331 + $0x38] sm:$0xff]
      %v348 = vld [vmem:[%s331 + $0x40] sm:$0xff]
      %v349 = vld [vmem:[%s331 + $0x48] sm:$0xff]
      %v350 = vld [vmem:[%s331 + $0x50] sm:$0xff]
      %v351 = vld [vmem:[%s331 + $0x58] sm:$0xff]
      %v352 = vld [vmem:[%s331 + $0x60] sm:$0xff]
      %v353 = vld [vmem:[%s331 + $0x68] sm:$0xff]
      %v354 = vld [vmem:[%s331 + $0x70] sm:$0xff]
      %v355 = vld [vmem:[%s331 + $0x78] sm:$0xff]
      %v356 = vld [vmem:[%s331 + $0x80] sm:$0xff]
      %v357 = vld [vmem:[%s331 + $0x88] sm:$0xff]
      %v358 = vld [vmem:[%s331 + $0x90] sm:$0xff]
      %v359 = vld [vmem:[%s331 + $0x98] sm:$0xff]
      %v360 = vld [vmem:[%s331 + $0xa0] sm:$0xff]
      %v361 = vld [vmem:[%s331 + $0xa8] sm:$0xff]
      %v362 = vld [vmem:[%s331 + $0xb0] sm:$0xff]
      %v363 = vld [vmem:[%s331 + $0xb8] sm:$0xff]
      %v364 = vld [vmem:[%s1] sm:$0xff]
      %v365 = vld [vmem:[%s1 + $0x8] sm:$0xff]
      %v366 = vld [vmem:[%s1 + $0x10] sm:$0xff]
      %v367 = vld [vmem:[%s1 + $0x18] sm:$0xff]
      %v368 = vld [vmem:[%s1 + $0x20] sm:$0xff]
      %v369 = vld [vmem:[%s1 + $0x28] sm:$0xff]
      %v370 = vld [vmem:[%s1 + $0x30] sm:$0xff]
      %v371 = vld [vmem:[%s1 + $0x38] sm:$0xff]
      %v372 = vld [vmem:[%s1 + $0x40] sm:$0xff]
      %v373 = vld [vmem:[%s1 + $0x48] sm:$0xff]
      %v374 = vld [vmem:[%s1 + $0x50] sm:$0xff]
      %v375 = vld [vmem:[%s1 + $0x58] sm:$0xff]
      %v376 = vld [vmem:[%s1 + $0x60] sm:$0xff]
      %v377 = vld [vmem:[%s1 + $0x68] sm:$0xff]
      %v378 = vld [vmem:[%s1 + $0x70] sm:$0xff]
      %v379 = vld [vmem:[%s1 + $0x78] sm:$0xff]
      %v380 = vld [vmem:[%s1 + $0x80] sm:$0xff]
      %v381 = vld [vmem:[%s1 + $0x88] sm:$0xff]
      %v382 = vld [vmem:[%s1 + $0x90] sm:$0xff]
      %v383 = vld [vmem:[%s1 + $0x98] sm:$0xff]
      %v384 = vld [vmem:[%s1 + $0xa0] sm:$0xff]
      %v385 = vld [vmem:[%s1 + $0xa8] sm:$0xff]
      %v386 = vld [vmem:[%s1 + $0xb0] sm:$0xff]
      %v387 = vld [vmem:[%s1 + $0xb8] sm:$0xff]
      %v388 = vld [vmem:[%s1 + $0xc0] sm:$0xff]
      %v389 = vld [vmem:[%s1 + $0xc8] sm:$0xff]
      %v390 = vld [vmem:[%s1 + $0xd0] sm:$0xff]
      %v391 = vld [vmem:[%s1 + $0xd8] sm:$0xff]
      %v392 = vld [vmem:[%s1 + $0xe0] sm:$0xff]
      %v393 = vld [vmem:[%s1 + $0xe8] sm:$0xff]
      %v394 = vld [vmem:[%s1 + $0xf0] sm:$0xff]
      %v395 = vld [vmem:[%s1 + $0xf8] sm:$0xff]
      %v396 = vld [vmem:[%s1 + $0x100] sm:$0xff]
      %v397 = vld [vmem:[%s1 + $0x108] sm:$0xff]
      %v398 = vld [vmem:[%s1 + $0x110] sm:$0xff]
      %v399 = vld [vmem:[%s1 + $0x118] sm:$0xff]
      %v400 = vld [vmem:[%s1 + $0x120] sm:$0xff]
      %v401 = vld [vmem:[%s1 + $0x128] sm:$0xff]
      %v402 = vld [vmem:[%s1 + $0x130] sm:$0xff]
      %v403 = vld [vmem:[%s1 + $0x138] sm:$0xff]
      %v404 = vld [vmem:[%s1 + $0x140] sm:$0xff]
      %v405 = vld [vmem:[%s1 + $0x148] sm:$0xff]
      %v430 = vunpack.c.l.b16 %v340
      %v431 = vunpack.c.h.b16 %v340
      %v432 = vunpack.c.l.b16 %v341
      %v433 = vunpack.c.h.b16 %v341
      %v434 = vunpack.c.l.b16 %v342
      %v435 = vunpack.c.h.b16 %v342
      %v436 = vunpack.c.l.b16 %v343
      %v437 = vunpack.c.h.b16 %v343
      %v438 = vunpack.c.l.b16 %v344
      %v439 = vunpack.c.h.b16 %v344
      %v440 = vunpack.c.l.b16 %v345
      %v441 = vunpack.c.h.b16 %v345
      %v442 = vunpack.c.l.b16 %v346
      %v443 = vunpack.c.h.b16 %v346
      %v444 = vunpack.c.l.b16 %v347
      %v445 = vunpack.c.h.b16 %v347
      %v446 = vunpack.c.l.b16 %v348
      %v447 = vunpack.c.h.b16 %v348
      %v448 = vunpack.c.l.b16 %v349
      %v449 = vunpack.c.h.b16 %v349
      %v450 = vunpack.c.l.b16 %v350
      %v451 = vunpack.c.h.b16 %v350
      %v452 = vunpack.c.l.b16 %v351
      %v453 = vunpack.c.h.b16 %v351
      %v454 = vunpack.c.l.b16 %v352
      %v455 = vunpack.c.h.b16 %v352
      %v456 = vunpack.c.l.b16 %v353
      %v457 = vunpack.c.h.b16 %v353
      %v458 = vunpack.c.l.b16 %v354
      %v459 = vunpack.c.h.b16 %v354
      %v460 = vunpack.c.l.b16 %v355
      %v461 = vunpack.c.h.b16 %v355
      %v462 = vunpack.c.l.b16 %v356
      %v463 = vunpack.c.h.b16 %v356
      %v464 = vunpack.c.l.b16 %v357
      %v465 = vunpack.c.h.b16 %v357
      %v466 = vunpack.c.l.b16 %v358
      %v467 = vunpack.c.h.b16 %v358
      %v468 = vunpack.c.l.b16 %v359
      %v469 = vunpack.c.h.b16 %v359
      %v470 = vunpack.c.l.b16 %v360
      %v471 = vunpack.c.h.b16 %v360
      %v472 = vunpack.c.l.b16 %v361
      %v473 = vunpack.c.h.b16 %v361
      %v474 = vunpack.c.l.b16 %v362
      %v475 = vunpack.c.h.b16 %v362
      %v476 = vunpack.c.l.b16 %v363
      %v477 = vunpack.c.h.b16 %v363
      %v478 = vpack.c.b16 %v432, %v430
      %v479 = vpack.c.b16 %v433, %v431
      %v480 = vpack.c.b16 %v436, %v434
      %v481 = vpack.c.b16 %v437, %v435
      %v482 = vpack.c.b16 %v440, %v438
      %v483 = vpack.c.b16 %v441, %v439
      %v484 = vpack.c.b16 %v444, %v442
      %v485 = vpack.c.b16 %v445, %v443
      %v486 = vpack.c.b16 %v448, %v446
      %v487 = vpack.c.b16 %v449, %v447
      %v488 = vpack.c.b16 %v452, %v450
      %v489 = vpack.c.b16 %v453, %v451
      %v490 = vpack.c.b16 %v456, %v454
      %v491 = vpack.c.b16 %v457, %v455
      %v492 = vpack.c.b16 %v460, %v458
      %v493 = vpack.c.b16 %v461, %v459
      %v494 = vpack.c.b16 %v464, %v462
      %v495 = vpack.c.b16 %v465, %v463
      %v496 = vpack.c.b16 %v468, %v466
      %v497 = vpack.c.b16 %v469, %v467
      %v498 = vpack.c.b16 %v472, %v470
      %v499 = vpack.c.b16 %v473, %v471
      %v500 = vpack.c.b16 %v476, %v474
      %v501 = vpack.c.b16 %v477, %v475
      %v556 = vunpack.c.l.b16 %v364
      %v557 = vunpack.c.h.b16 %v364
      %v558 = vunpack.c.l.b16 %v365
      %v559 = vunpack.c.h.b16 %v365
      %v560 = vunpack.c.l.b16 %v366
      %v561 = vunpack.c.h.b16 %v366
      %v562 = vunpack.c.l.b16 %v367
      %v563 = vunpack.c.h.b16 %v367
      %v564 = vunpack.c.l.b16 %v368
      %v565 = vunpack.c.h.b16 %v368
      %v566 = vunpack.c.l.b16 %v369
      %v567 = vunpack.c.h.b16 %v369
      %v568 = vunpack.c.l.b16 %v370
      %v569 = vunpack.c.h.b16 %v370
      %v570 = vunpack.c.l.b16 %v371
      %v571 = vunpack.c.h.b16 %v371
      %v572 = vunpack.c.l.b16 %v372
      %v573 = vunpack.c.h.b16 %v372
      %v574 = vunpack.c.l.b16 %v373
      %v575 = vunpack.c.h.b16 %v373
      %v576 = vunpack.c.l.b16 %v374
      %v577 = vunpack.c.h.b16 %v374
      %v578 = vunpack.c.l.b16 %v375
      %v579 = vunpack.c.h.b16 %v375
      %v580 = vunpack.c.l.b16 %v376
      %v581 = vunpack.c.h.b16 %v376
      %v582 = vunpack.c.l.b16 %v377
      %v583 = vunpack.c.h.b16 %v377
      %v584 = vunpack.c.l.b16 %v378
      %v585 = vunpack.c.h.b16 %v378
      %v586 = vunpack.c.l.b16 %v379
      %v587 = vunpack.c.h.b16 %v379
      %v588 = vunpack.c.l.b16 %v380
      %v589 = vunpack.c.h.b16 %v380
      %v590 = vunpack.c.l.b16 %v381
      %v591 = vunpack.c.h.b16 %v381
      %v592 = vunpack.c.l.b16 %v382
      %v593 = vunpack.c.h.b16 %v382
      %v594 = vunpack.c.l.b16 %v383
      %v595 = vunpack.c.h.b16 %v383
      %v596 = vunpack.c.l.b16 %v384
      %v597 = vunpack.c.h.b16 %v384
      %v598 = vunpack.c.l.b16 %v385
      %v599 = vunpack.c.h.b16 %v385
      %v600 = vunpack.c.l.b16 %v386
      %v601 = vunpack.c.h.b16 %v386
      %v602 = vunpack.c.l.b16 %v387
      %v603 = vunpack.c.h.b16 %v387
      %v604 = vunpack.c.l.b16 %v388
      %v605 = vunpack.c.h.b16 %v388
      %v606 = vunpack.c.l.b16 %v389
      %v607 = vunpack.c.h.b16 %v389
      %v608 = vunpack.c.l.b16 %v390
      %v609 = vunpack.c.h.b16 %v390
      %v610 = vunpack.c.l.b16 %v391
      %v611 = vunpack.c.h.b16 %v391
      %v612 = vunpack.c.l.b16 %v392
      %v613 = vunpack.c.h.b16 %v392
      %v614 = vunpack.c.l.b16 %v393
      %v615 = vunpack.c.h.b16 %v393
      %v616 = vunpack.c.l.b16 %v394
      %v617 = vunpack.c.h.b16 %v394
      %v618 = vunpack.c.l.b16 %v395
      %v619 = vunpack.c.h.b16 %v395
      %v620 = vunpack.c.l.b16 %v396
      %v621 = vunpack.c.h.b16 %v396
      %v622 = vunpack.c.l.b16 %v397
      %v623 = vunpack.c.h.b16 %v397
      %v624 = vunpack.c.l.b16 %v398
      %v625 = vunpack.c.h.b16 %v398
      %v626 = vunpack.c.l.b16 %v399
      %v627 = vunpack.c.h.b16 %v399
      %v628 = vunpack.c.l.b16 %v400
      %v629 = vunpack.c.h.b16 %v400
      %v630 = vunpack.c.l.b16 %v401
      %v631 = vunpack.c.h.b16 %v401
      %v632 = vunpack.c.l.b16 %v402
      %v633 = vunpack.c.h.b16 %v402
      %v634 = vunpack.c.l.b16 %v403
      %v635 = vunpack.c.h.b16 %v403
      %v636 = vunpack.c.l.b16 %v404
      %v637 = vunpack.c.h.b16 %v404
      %v638 = vunpack.c.l.b16 %v405
      %v639 = vunpack.c.h.b16 %v405
      %v640 = vpack.c.b16 %v560, %v556
      %v641 = vpack.c.b16 %v561, %v557
      %v642 = vpack.c.b16 %v562, %v558
      %v643 = vpack.c.b16 %v563, %v559
      %v644 = vpack.c.b16 %v568, %v564
      %v645 = vpack.c.b16 %v569, %v565
      %v646 = vpack.c.b16 %v570, %v566
      %v647 = vpack.c.b16 %v571, %v567
      %v648 = vpack.c.b16 %v576, %v572
      %v649 = vpack.c.b16 %v577, %v573
      %v650 = vpack.c.b16 %v578, %v574
      %v651 = vpack.c.b16 %v579, %v575
      %v652 = vpack.c.b16 %v584, %v580
      %v653 = vpack.c.b16 %v585, %v581
      %v654 = vpack.c.b16 %v586, %v582
      %v655 = vpack.c.b16 %v587, %v583
      %v656 = vpack.c.b16 %v592, %v588
      %v657 = vpack.c.b16 %v593, %v589
      %v658 = vpack.c.b16 %v594, %v590
      %v659 = vpack.c.b16 %v595, %v591
      %v660 = vpack.c.b16 %v600, %v596
      %v661 = vpack.c.b16 %v601, %v597
      %v662 = vpack.c.b16 %v602, %v598
      %v663 = vpack.c.b16 %v603, %v599
      %v664 = vpack.c.b16 %v608, %v604
      %v665 = vpack.c.b16 %v609, %v605
      %v666 = vpack.c.b16 %v610, %v606
      %v667 = vpack.c.b16 %v611, %v607
      %v668 = vpack.c.b16 %v616, %v612
      %v669 = vpack.c.b16 %v617, %v613
      %v670 = vpack.c.b16 %v618, %v614
      %v671 = vpack.c.b16 %v619, %v615
      %v672 = vpack.c.b16 %v624, %v620
      %v673 = vpack.c.b16 %v625, %v621
      %v674 = vpack.c.b16 %v626, %v622
      %v675 = vpack.c.b16 %v627, %v623
      %v676 = vpack.c.b16 %v632, %v628
      %v677 = vpack.c.b16 %v633, %v629
      %v678 = vpack.c.b16 %v634, %v630
      %v679 = vpack.c.b16 %v635, %v631
      %v680 = vpack.c.b16 %v636, %v636
      %v681 = vpack.c.b16 %v637, %v637
      %v682 = vpack.c.b16 %v638, %v638
      %v683 = vpack.c.b16 %v639, %v639
      %vm724 = vcmask 326656
      %v726 = vsel %vm724, %v479, 0
      %v729 = vsel %vm724, %v481, 0
      %v732 = vsel %vm724, %v483, 0
      %v735 = vsel %vm724, %v485, 0
      %v738 = vsel %vm724, %v487, 0
      %v741 = vsel %vm724, %v489, 0
      %v744 = vsel %vm724, %v491, 0
      %v747 = vsel %vm724, %v493, 0
      %v750 = vsel %vm724, %v495, 0
      %v753 = vsel %vm724, %v497, 0
      %v756 = vsel %vm724, %v499, 0
      %v759 = vsel %vm724, %v501, 0
      %vm761 = vcmask 1043456
      %v763 = vsel %vm761, %v680, 0
      %v766 = vsel %vm761, %v681, 0
      %v769 = vsel %vm761, %v682, 0
      %v772 = vsel %vm761, %v683, 0
      %774 = vmatprep.subr.bf16.mxu0 %v641
      %775 = vmatpush1.bf16.msra.mxu0 %v640
      %776 = vmatprep.subr.bf16.mxu0 %v645
      %777 = vmatpush1.bf16.msra.mxu0 %v644
      %778 = vmatprep.subr.bf16.mxu0 %v649
      %779 = vmatpush1.bf16.msra.mxu0 %v648
      %780 = vmatprep.subr.bf16.mxu0 %v653
      %781 = vmatpush1.bf16.msra.mxu0 %v652
      %782 = vmatprep.subr.bf16.mxu0 %v657
      %783 = vmatpush1.bf16.msra.mxu0 %v656
      %784 = vmatprep.subr.bf16.mxu0 %v661
      %785 = vmatpush1.bf16.msra.mxu0 %v660
      %786 = vmatprep.subr.bf16.mxu0 %v665
      %787 = vmatpush1.bf16.msra.mxu0 %v664
      %788 = vmatprep.subr.bf16.mxu0 %v669
      %789 = vmatpush1.bf16.msra.mxu0 %v668
      %790 = vmatprep.subr.bf16.mxu0 %v673
      %791 = vmatpush1.bf16.msra.mxu0 %v672
      %792 = vmatprep.subr.bf16.mxu0 %v677
      %793 = vmatpush1.bf16.msra.mxu0 %v676
      %794 = vmatprep.subr.bf16.mxu0 %v766
      %795 = vmatpush1.bf16.msra.mxu0 %v763
      %796 = vmatprep.subr.bf16.mxu0 0
      %797 = vmatpush1.bf16.msra.mxu0 0
      %798 = vmatprep.subr.bf16.mxu0 0
      %799 = vmatpush1.bf16.msra.mxu0 0
      %800 = vmatprep.subr.bf16.mxu0 0
      %801 = vmatpush1.bf16.msra.mxu0 0
      %802 = vmatprep.subr.bf16.mxu0 0
      %803 = vmatpush1.bf16.msra.mxu0 0
      %804 = vmatprep.subr.bf16.mxu0 0
      %805 = vmatpush1.bf16.msra.mxu0 0
      %806 = vmatprep.mubr.bf16.mxu0 %v726
      %807 = vmatmul.mubr.bf16.gmra.mrb[0].mxu0 %v478
      %v808 = vpop.f32.mrb[0].mxu0
      %v809 = vadd.f32 0.0, %v808
      %v810 = vpop.f32.mrb[0].mxu0
      %v811 = vadd.f32 0.0, %v810
      %v812 = vpop.f32.mrb[0].mxu0
      %v813 = vadd.f32 0.0, %v812
      %v814 = vpop.f32.mrb[0].mxu0
      %v815 = vadd.f32 0.0, %v814
      %816 = vmatprep.mubr.bf16.mxu0 %v729
      %817 = vmatmul.mubr.bf16.gmra.mrb[0].mxu0 %v480
      %v818 = vpop.f32.mrb[0].mxu0
      %v819 = vadd.f32 0.0, %v818
      %v820 = vpop.f32.mrb[0].mxu0
      %v821 = vadd.f32 0.0, %v820
      %v822 = vpop.f32.mrb[0].mxu0
      %v823 = vadd.f32 0.0, %v822
      %v824 = vpop.f32.mrb[0].mxu0
      %v825 = vadd.f32 0.0, %v824
      %826 = vmatprep.mubr.bf16.mxu0 %v732
      %827 = vmatmul.mubr.bf16.gmra.mrb[0].mxu0 %v482
      %v828 = vpop.f32.mrb[0].mxu0
      %v829 = vadd.f32 0.0, %v828
      %v830 = vpop.f32.mrb[0].mxu0
      %v831 = vadd.f32 0.0, %v830
      %v832 = vpop.f32.mrb[0].mxu0
      %v833 = vadd.f32 0.0, %v832
      %v834 = vpop.f32.mrb[0].mxu0
      %v835 = vadd.f32 0.0, %v834
      %836 = vmatprep.mubr.bf16.mxu0 %v735
      %837 = vmatmul.mubr.bf16.gmra.mrb[0].mxu0 %v484
      %v838 = vpop.f32.mrb[0].mxu0
      %v839 = vadd.f32 0.0, %v838
      %v840 = vpop.f32.mrb[0].mxu0
      %v841 = vadd.f32 0.0, %v840
      %v842 = vpop.f32.mrb[0].mxu0
      %v843 = vadd.f32 0.0, %v842
      %v844 = vpop.f32.mrb[0].mxu0
      %v845 = vadd.f32 0.0, %v844
      %846 = vmatprep.mubr.bf16.mxu0 %v738
      %847 = vmatmul.mubr.bf16.gmra.mrb[0].mxu0 %v486
      %v848 = vpop.f32.mrb[0].mxu0
      %v849 = vadd.f32 0.0, %v848
      %v850 = vpop.f32.mrb[0].mxu0
      %v851 = vadd.f32 0.0, %v850
      %v852 = vpop.f32.mrb[0].mxu0
      %v853 = vadd.f32 0.0, %v852
      %v854 = vpop.f32.mrb[0].mxu0
      %v855 = vadd.f32 0.0, %v854
      %856 = vmatprep.mubr.bf16.mxu0 %v741
      %857 = vmatmul.mubr.bf16.gmra.mrb[0].mxu0 %v488
      %v858 = vpop.f32.mrb[0].mxu0
      %v859 = vadd.f32 0.0, %v858
      %v860 = vpop.f32.mrb[0].mxu0
      %v861 = vadd.f32 0.0, %v860
      %v862 = vpop.f32.mrb[0].mxu0
      %v863 = vadd.f32 0.0, %v862
      %v864 = vpop.f32.mrb[0].mxu0
      %v865 = vadd.f32 0.0, %v864
      %866 = vmatprep.mubr.bf16.mxu0 %v744
      %867 = vmatmul.mubr.bf16.gmra.mrb[0].mxu0 %v490
      %v868 = vpop.f32.mrb[0].mxu0
      %v869 = vadd.f32 0.0, %v868
      %v870 = vpop.f32.mrb[0].mxu0
      %v871 = vadd.f32 0.0, %v870
      %v872 = vpop.f32.mrb[0].mxu0
      %v873 = vadd.f32 0.0, %v872
      %v874 = vpop.f32.mrb[0].mxu0
      %v875 = vadd.f32 0.0, %v874
      %876 = vmatprep.mubr.bf16.mxu0 %v747
      %877 = vmatmul.mubr.bf16.gmra.mrb[0].mxu0 %v492
      %v878 = vpop.f32.mrb[0].mxu0
      %v879 = vadd.f32 0.0, %v878
      %v880 = vpop.f32.mrb[0].mxu0
      %v881 = vadd.f32 0.0, %v880
      %v882 = vpop.f32.mrb[0].mxu0
      %v883 = vadd.f32 0.0, %v882
      %v884 = vpop.f32.mrb[0].mxu0
      %v885 = vadd.f32 0.0, %v884
      %886 = vmatprep.mubr.bf16.mxu0 %v750
      %887 = vmatmul.mubr.bf16.gmra.mrb[0].mxu0 %v494
      %v888 = vpop.f32.mrb[0].mxu0
      %v889 = vadd.f32 0.0, %v888
      %v890 = vpop.f32.mrb[0].mxu0
      %v891 = vadd.f32 0.0, %v890
      %v892 = vpop.f32.mrb[0].mxu0
      %v893 = vadd.f32 0.0, %v892
      %v894 = vpop.f32.mrb[0].mxu0
      %v895 = vadd.f32 0.0, %v894
      %896 = vmatprep.mubr.bf16.mxu0 %v753
      %897 = vmatmul.mubr.bf16.gmra.mrb[0].mxu0 %v496
      %v898 = vpop.f32.mrb[0].mxu0
      %v899 = vadd.f32 0.0, %v898
      %v900 = vpop.f32.mrb[0].mxu0
      %v901 = vadd.f32 0.0, %v900
      %v902 = vpop.f32.mrb[0].mxu0
      %v903 = vadd.f32 0.0, %v902
      %v904 = vpop.f32.mrb[0].mxu0
      %v905 = vadd.f32 0.0, %v904
      %906 = vmatprep.mubr.bf16.mxu0 %v756
      %907 = vmatmul.mubr.bf16.gmra.mrb[0].mxu0 %v498
      %v908 = vpop.f32.mrb[0].mxu0
      %v909 = vadd.f32 0.0, %v908
      %v910 = vpop.f32.mrb[0].mxu0
      %v911 = vadd.f32 0.0, %v910
      %v912 = vpop.f32.mrb[0].mxu0
      %v913 = vadd.f32 0.0, %v912
      %v914 = vpop.f32.mrb[0].mxu0
      %v915 = vadd.f32 0.0, %v914
      %916 = vmatprep.mubr.bf16.mxu0 %v759
      %917 = vmatmul.mubr.bf16.gmra.mrb[0].mxu0 %v500
      %v918 = vpop.f32.mrb[0].mxu0
      %v919 = vadd.f32 0.0, %v918
      %v920 = vpop.f32.mrb[0].mxu0
      %v921 = vadd.f32 0.0, %v920
      %v922 = vpop.f32.mrb[0].mxu0
      %v923 = vadd.f32 0.0, %v922
      %v924 = vpop.f32.mrb[0].mxu0
      %v925 = vadd.f32 0.0, %v924
      %926 = vdwg.mxu0
      %927 = vmatprep.subr.bf16.mxu0 %v643
      %928 = vmatpush1.bf16.msra.mxu0 %v642
      %929 = vmatprep.subr.bf16.mxu0 %v647
      %930 = vmatpush1.bf16.msra.mxu0 %v646
      %931 = vmatprep.subr.bf16.mxu0 %v651
      %932 = vmatpush1.bf16.msra.mxu0 %v650
      %933 = vmatprep.subr.bf16.mxu0 %v655
      %934 = vmatpush1.bf16.msra.mxu0 %v654
      %935 = vmatprep.subr.bf16.mxu0 %v659
      %936 = vmatpush1.bf16.msra.mxu0 %v658
      %937 = vmatprep.subr.bf16.mxu0 %v663
      %938 = vmatpush1.bf16.msra.mxu0 %v662
      %939 = vmatprep.subr.bf16.mxu0 %v667
      %940 = vmatpush1.bf16.msra.mxu0 %v666
      %941 = vmatprep.subr.bf16.mxu0 %v671
      %942 = vmatpush1.bf16.msra.mxu0 %v670
      %943 = vmatprep.subr.bf16.mxu0 %v675
      %944 = vmatpush1.bf16.msra.mxu0 %v674
      %945 = vmatprep.subr.bf16.mxu0 %v679
      %946 = vmatpush1.bf16.msra.mxu0 %v678
      %947 = vmatprep.subr.bf16.mxu0 %v772
      %948 = vmatpush1.bf16.msra.mxu0 %v769
      %949 = vmatprep.subr.bf16.mxu0 0
      %950 = vmatpush1.bf16.msra.mxu0 0
      %951 = vmatprep.subr.bf16.mxu0 0
      %952 = vmatpush1.bf16.msra.mxu0 0
      %953 = vmatprep.subr.bf16.mxu0 0
      %954 = vmatpush1.bf16.msra.mxu0 0
      %955 = vmatprep.subr.bf16.mxu0 0
      %956 = vmatpush1.bf16.msra.mxu0 0
      %957 = vmatprep.subr.bf16.mxu0 0
      %958 = vmatpush1.bf16.msra.mxu0 0
      %959 = vmatprep.mubr.bf16.mxu0 %v726
      %960 = vmatmul.mubr.bf16.gmra.mrb[0].mxu0 %v478
      %v961 = vpop.f32.mrb[0].mxu0
      %v962 = vadd.f32 0.0, %v961
      %v963 = vpop.f32.mrb[0].mxu0
      %v964 = vadd.f32 0.0, %v963
      %v965 = vpop.f32.mrb[0].mxu0
      %v966 = vadd.f32 0.0, %v965
      %v967 = vpop.f32.mrb[0].mxu0
      %v968 = vadd.f32 0.0, %v967
      %969 = vmatprep.mubr.bf16.mxu0 %v729
      %970 = vmatmul.mubr.bf16.gmra.mrb[0].mxu0 %v480
      %v971 = vpop.f32.mrb[0].mxu0
      %v972 = vadd.f32 0.0, %v971
      %v973 = vpop.f32.mrb[0].mxu0
      %v974 = vadd.f32 0.0, %v973
      %v975 = vpop.f32.mrb[0].mxu0
      %v976 = vadd.f32 0.0, %v975
      %v977 = vpop.f32.mrb[0].mxu0
      %v978 = vadd.f32 0.0, %v977
      %979 = vmatprep.mubr.bf16.mxu0 %v732
      %980 = vmatmul.mubr.bf16.gmra.mrb[0].mxu0 %v482
      %v981 = vpop.f32.mrb[0].mxu0
      %v982 = vadd.f32 0.0, %v981
      %v983 = vpop.f32.mrb[0].mxu0
      %v984 = vadd.f32 0.0, %v983
      %v985 = vpop.f32.mrb[0].mxu0
      %v986 = vadd.f32 0.0, %v985
      %v987 = vpop.f32.mrb[0].mxu0
      %v988 = vadd.f32 0.0, %v987
      %989 = vmatprep.mubr.bf16.mxu0 %v735
      %990 = vmatmul.mubr.bf16.gmra.mrb[0].mxu0 %v484
      %v991 = vpop.f32.mrb[0].mxu0
      %v992 = vadd.f32 0.0, %v991
      %v993 = vpop.f32.mrb[0].mxu0
      %v994 = vadd.f32 0.0, %v993
      %v995 = vpop.f32.mrb[0].mxu0
      %v996 = vadd.f32 0.0, %v995
      %v997 = vpop.f32.mrb[0].mxu0
      %v998 = vadd.f32 0.0, %v997
      %999 = vmatprep.mubr.bf16.mxu0 %v738
      %1000 = vmatmul.mubr.bf16.gmra.mrb[0].mxu0 %v486
      %v1001 = vpop.f32.mrb[0].mxu0
      %v1002 = vadd.f32 0.0, %v1001
      %v1003 = vpop.f32.mrb[0].mxu0
      %v1004 = vadd.f32 0.0, %v1003
      %v1005 = vpop.f32.mrb[0].mxu0
      %v1006 = vadd.f32 0.0, %v1005
      %v1007 = vpop.f32.mrb[0].mxu0
      %v1008 = vadd.f32 0.0, %v1007
      %1009 = vmatprep.mubr.bf16.mxu0 %v741
      %1010 = vmatmul.mubr.bf16.gmra.mrb[0].mxu0 %v488
      %v1011 = vpop.f32.mrb[0].mxu0
      %v1012 = vadd.f32 0.0, %v1011
      %v1013 = vpop.f32.mrb[0].mxu0
      %v1014 = vadd.f32 0.0, %v1013
      %v1015 = vpop.f32.mrb[0].mxu0
      %v1016 = vadd.f32 0.0, %v1015
      %v1017 = vpop.f32.mrb[0].mxu0
      %v1018 = vadd.f32 0.0, %v1017
      %1019 = vmatprep.mubr.bf16.mxu0 %v744
      %1020 = vmatmul.mubr.bf16.gmra.mrb[0].mxu0 %v490
      %v1021 = vpop.f32.mrb[0].mxu0
      %v1022 = vadd.f32 0.0, %v1021
      %v1023 = vpop.f32.mrb[0].mxu0
      %v1024 = vadd.f32 0.0, %v1023
      %v1025 = vpop.f32.mrb[0].mxu0
      %v1026 = vadd.f32 0.0, %v1025
      %v1027 = vpop.f32.mrb[0].mxu0
      %v1028 = vadd.f32 0.0, %v1027
      %1029 = vmatprep.mubr.bf16.mxu0 %v747
      %1030 = vmatmul.mubr.bf16.gmra.mrb[0].mxu0 %v492
      %v1031 = vpop.f32.mrb[0].mxu0
      %v1032 = vadd.f32 0.0, %v1031
      %v1033 = vpop.f32.mrb[0].mxu0
      %v1034 = vadd.f32 0.0, %v1033
      %v1035 = vpop.f32.mrb[0].mxu0
      %v1036 = vadd.f32 0.0, %v1035
      %v1037 = vpop.f32.mrb[0].mxu0
      %v1038 = vadd.f32 0.0, %v1037
      %1039 = vmatprep.mubr.bf16.mxu0 %v750
      %1040 = vmatmul.mubr.bf16.gmra.mrb[0].mxu0 %v494
      %v1041 = vpop.f32.mrb[0].mxu0
      %v1042 = vadd.f32 0.0, %v1041
      %v1043 = vpop.f32.mrb[0].mxu0
      %v1044 = vadd.f32 0.0, %v1043
      %v1045 = vpop.f32.mrb[0].mxu0
      %v1046 = vadd.f32 0.0, %v1045
      %v1047 = vpop.f32.mrb[0].mxu0
      %v1048 = vadd.f32 0.0, %v1047
      %1049 = vmatprep.mubr.bf16.mxu0 %v753
      %1050 = vmatmul.mubr.bf16.gmra.mrb[0].mxu0 %v496
      %v1051 = vpop.f32.mrb[0].mxu0
      %v1052 = vadd.f32 0.0, %v1051
      %v1053 = vpop.f32.mrb[0].mxu0
      %v1054 = vadd.f32 0.0, %v1053
      %v1055 = vpop.f32.mrb[0].mxu0
      %v1056 = vadd.f32 0.0, %v1055
      %v1057 = vpop.f32.mrb[0].mxu0
      %v1058 = vadd.f32 0.0, %v1057
      %1059 = vmatprep.mubr.bf16.mxu0 %v756
      %1060 = vmatmul.mubr.bf16.gmra.mrb[0].mxu0 %v498
      %v1061 = vpop.f32.mrb[0].mxu0
      %v1062 = vadd.f32 0.0, %v1061
      %v1063 = vpop.f32.mrb[0].mxu0
      %v1064 = vadd.f32 0.0, %v1063
      %v1065 = vpop.f32.mrb[0].mxu0
      %v1066 = vadd.f32 0.0, %v1065
      %v1067 = vpop.f32.mrb[0].mxu0
      %v1068 = vadd.f32 0.0, %v1067
      %1069 = vmatprep.mubr.bf16.mxu0 %v759
      %1070 = vmatmul.mubr.bf16.gmra.mrb[0].mxu0 %v500
      %v1071 = vpop.f32.mrb[0].mxu0
      %v1072 = vadd.f32 0.0, %v1071
      %v1073 = vpop.f32.mrb[0].mxu0
      %v1074 = vadd.f32 0.0, %v1073
      %v1075 = vpop.f32.mrb[0].mxu0
      %v1076 = vadd.f32 0.0, %v1075
      %v1077 = vpop.f32.mrb[0].mxu0
      %v1078 = vadd.f32 0.0, %v1077
      %1079 = vdwg.mxu0
      %v1080 = vmax.f32 %v809, %v811
      %v1081 = vmax.f32 %v813, %v815
      %v1082 = vmax.f32 %v819, %v821
      %v1083 = vmax.f32 %v823, %v825
      %v1084 = vmax.f32 %v829, %v831
      %v1085 = vmax.f32 %v833, %v835
      %v1086 = vmax.f32 %v839, %v841
      %v1087 = vmax.f32 %v843, %v845
      %v1088 = vmax.f32 %v849, %v851
      %v1089 = vmax.f32 %v853, %v855
      %v1090 = vmax.f32 %v859, %v861
      %v1091 = vmax.f32 %v863, %v865
      %v1092 = vmax.f32 %v869, %v871
      %v1093 = vmax.f32 %v873, %v875
      %v1094 = vmax.f32 %v879, %v881
      %v1095 = vmax.f32 %v883, %v885
      %v1096 = vmax.f32 %v889, %v891
      %v1097 = vmax.f32 %v893, %v895
      %v1098 = vmax.f32 %v899, %v901
      %v1099 = vmax.f32 %v903, %v905
      %v1100 = vmax.f32 %v909, %v911
      %v1101 = vmax.f32 %v913, %v915
      %v1102 = vmax.f32 %v919, %v921
      %v1103 = vmax.f32 %v923, %v925
      %v1104 = vmax.f32 %v962, %v964
      %v1105 = vmax.f32 %v966, %v968
      %v1106 = vmax.f32 %v972, %v974
      %v1107 = vmax.f32 %v976, %v978
      %v1108 = vmax.f32 %v982, %v984
      %v1109 = vmax.f32 %v986, %v988
      %v1110 = vmax.f32 %v992, %v994
      %v1111 = vmax.f32 %v996, %v998
      %v1112 = vmax.f32 %v1002, %v1004
      %v1113 = vmax.f32 %v1006, %v1008
      %v1114 = vmax.f32 %v1012, %v1014
      %v1115 = vmax.f32 %v1016, %v1018
      %v1116 = vmax.f32 %v1022, %v1024
      %v1117 = vmax.f32 %v1026, %v1028
      %v1118 = vmax.f32 %v1032, %v1034
      %v1119 = vmax.f32 %v1036, %v1038
      %v1120 = vmax.f32 %v1042, %v1044
      %v1121 = vmax.f32 %v1046, %v1048
      %v1122 = vmax.f32 %v1052, %v1054
      %v1123 = vmax.f32 %v1056, %v1058
      %v1124 = vmax.f32 %v1062, %v1064
      %v1125 = vmax.f32 %v1066, %v1068
      %v1126 = vmax.f32 %v1072, %v1074
      %v1127 = vmax.f32 %v1076, %v1078
      %v1128 = vmax.f32 %v1080, %v1104
      %v1129 = vmax.f32 %v1081, %v1105
      %v1130 = vmax.f32 %v1082, %v1106
      %v1131 = vmax.f32 %v1083, %v1107
      %v1132 = vmax.f32 %v1084, %v1108
      %v1133 = vmax.f32 %v1085, %v1109
      %v1134 = vmax.f32 %v1086, %v1110
      %v1135 = vmax.f32 %v1087, %v1111
      %v1136 = vmax.f32 %v1088, %v1112
      %v1137 = vmax.f32 %v1089, %v1113
      %v1138 = vmax.f32 %v1090, %v1114
      %v1139 = vmax.f32 %v1091, %v1115
      %v1140 = vmax.f32 %v1092, %v1116
      %v1141 = vmax.f32 %v1093, %v1117
      %v1142 = vmax.f32 %v1094, %v1118
      %v1143 = vmax.f32 %v1095, %v1119
      %v1144 = vmax.f32 %v1096, %v1120
      %v1145 = vmax.f32 %v1097, %v1121
      %v1146 = vmax.f32 %v1098, %v1122
      %v1147 = vmax.f32 %v1099, %v1123
      %v1148 = vmax.f32 %v1100, %v1124
      %v1149 = vmax.f32 %v1101, %v1125
      %v1150 = vmax.f32 %v1102, %v1126
      %v1151 = vmax.f32 %v1103, %v1127
      %v1152 = vld [vmem:[%s5] sm:$0x1]
      %v1154 = vlaneseq
      %v1155 = vshrl.u32 %v1154, 7
      %v1156 = vsub.s32 0, %v1155
      %v1157 = vrot.slane %v1152, %v1156
      %v1159 = vadd.f32 %v1128, %v1157
      %v1160 = vadd.f32 %v1129, %v1157
      %v1161 = vadd.f32 %v1130, %v1157
      %v1162 = vadd.f32 %v1131, %v1157
      %v1163 = vadd.f32 %v1132, %v1157
      %v1164 = vadd.f32 %v1133, %v1157
      %v1165 = vadd.f32 %v1134, %v1157
      %v1166 = vadd.f32 %v1135, %v1157
      %v1167 = vadd.f32 %v1136, %v1157
      %v1168 = vadd.f32 %v1137, %v1157
      %v1169 = vadd.f32 %v1138, %v1157
      %v1170 = vadd.f32 %v1139, %v1157
      %v1171 = vadd.f32 %v1140, %v1157
      %v1172 = vadd.f32 %v1141, %v1157
      %v1173 = vadd.f32 %v1142, %v1157
      %v1174 = vadd.f32 %v1143, %v1157
      %v1175 = vadd.f32 %v1144, %v1157
      %v1176 = vadd.f32 %v1145, %v1157
      %v1177 = vadd.f32 %v1146, %v1157
      %v1178 = vadd.f32 %v1147, %v1157
      %v1179 = vadd.f32 %v1148, %v1157
      %v1180 = vadd.f32 %v1149, %v1157
      %v1181 = vadd.f32 %v1150, %v1157
      %v1182 = vadd.f32 %v1151, %v1157
      %v1183 = vmax.f32 %v1159, 0.0
      %v1184 = vmax.f32 %v1160, 0.0
      %v1185 = vmax.f32 %v1161, 0.0
      %v1186 = vmax.f32 %v1162, 0.0
      %v1187 = vmax.f32 %v1163, 0.0
      %v1188 = vmax.f32 %v1164, 0.0
      %v1189 = vmax.f32 %v1165, 0.0
      %v1190 = vmax.f32 %v1166, 0.0
      %v1191 = vmax.f32 %v1167, 0.0
      %v1192 = vmax.f32 %v1168, 0.0
      %v1193 = vmax.f32 %v1169, 0.0
      %v1194 = vmax.f32 %v1170, 0.0
      %v1195 = vmax.f32 %v1171, 0.0
      %v1196 = vmax.f32 %v1172, 0.0
      %v1197 = vmax.f32 %v1173, 0.0
      %v1198 = vmax.f32 %v1174, 0.0
      %v1199 = vmax.f32 %v1175, 0.0
      %v1200 = vmax.f32 %v1176, 0.0
      %v1201 = vmax.f32 %v1177, 0.0
      %v1202 = vmax.f32 %v1178, 0.0
      %v1203 = vmax.f32 %v1179, 0.0
      %v1204 = vmax.f32 %v1180, 0.0
      %v1205 = vmax.f32 %v1181, 0.0
      %v1206 = vmax.f32 %v1182, 0.0
      %v1207 = vpack.c.bf16 %v1184, %v1183
      %v1208 = vpack.c.bf16 %v1186, %v1185
      %v1209 = vpack.c.bf16 %v1188, %v1187
      %v1210 = vpack.c.bf16 %v1190, %v1189
      %v1211 = vpack.c.bf16 %v1192, %v1191
      %v1212 = vpack.c.bf16 %v1194, %v1193
      %v1213 = vpack.c.bf16 %v1196, %v1195
      %v1214 = vpack.c.bf16 %v1198, %v1197
      %v1215 = vpack.c.bf16 %v1200, %v1199
      %v1216 = vpack.c.bf16 %v1202, %v1201
      %v1217 = vpack.c.bf16 %v1204, %v1203
      %v1218 = vpack.c.bf16 %v1206, %v1205
      %v1219 = vld [vmem:[%s2] sm:$0xff]
      %v1220 = vld [vmem:[%s2 + $0x8] sm:$0xff]
      %v1221 = vld [vmem:[%s2 + $0x10] sm:$0xff]
      %v1222 = vld [vmem:[%s2 + $0x18] sm:$0xff]
      %v1223 = vld [vmem:[%s2 + $0x20] sm:$0xff]
      %v1224 = vld [vmem:[%s2 + $0x28] sm:$0xff]
      %v1225 = vld [vmem:[%s2 + $0x30] sm:$0xff]
      %v1226 = vld [vmem:[%s2 + $0x38] sm:$0xff]
      %v1227 = vld [vmem:[%s2 + $0x40] sm:$0xff]
      %v1228 = vld [vmem:[%s2 + $0x48] sm:$0xff]
      %v1229 = vld [vmem:[%s2 + $0x50] sm:$0xff]
      %v1230 = vld [vmem:[%s2 + $0x58] sm:$0xff]
      %v1231 = vld [vmem:[%s2 + $0x60] sm:$0xff]
      %v1232 = vld [vmem:[%s2 + $0x68] sm:$0xff]
      %v1233 = vld [vmem:[%s2 + $0x70] sm:$0xff]
      %v1234 = vld [vmem:[%s2 + $0x78] sm:$0xff]
      %v1235 = vld [vmem:[%s2 + $0x80] sm:$0xff]
      %v1236 = vld [vmem:[%s2 + $0x88] sm:$0xff]
      %v1237 = vld [vmem:[%s2 + $0x90] sm:$0xff]
      %v1238 = vld [vmem:[%s2 + $0x98] sm:$0xff]
      %v1239 = vld [vmem:[%s2 + $0xa0] sm:$0xff]
      %v1240 = vld [vmem:[%s2 + $0xa8] sm:$0xff]
      %v1241 = vld [vmem:[%s2 + $0xb0] sm:$0xff]
      %v1242 = vld [vmem:[%s2 + $0xb8] sm:$0xff]
      %v1243 = vld [vmem:[%s2 + $0xc0] sm:$0xff]
      %v1244 = vld [vmem:[%s2 + $0xc8] sm:$0xff]
      %v1245 = vld [vmem:[%s2 + $0xd0] sm:$0xff]
      %v1246 = vld [vmem:[%s2 + $0xd8] sm:$0xff]
      %v1247 = vld [vmem:[%s2 + $0xe0] sm:$0xff]
      %v1248 = vld [vmem:[%s2 + $0xe8] sm:$0xff]
      %v1249 = vld [vmem:[%s2 + $0xf0] sm:$0xff]
      %v1250 = vld [vmem:[%s2 + $0xf8] sm:$0xff]
      %v1251 = vld [vmem:[%s2 + $0x100] sm:$0xff]
      %v1252 = vld [vmem:[%s2 + $0x108] sm:$0xff]
      %v1253 = vld [vmem:[%s2 + $0x110] sm:$0xff]
      %v1254 = vld [vmem:[%s2 + $0x118] sm:$0xff]
      %v1255 = vld [vmem:[%s2 + $0x120] sm:$0xff]
      %v1256 = vld [vmem:[%s2 + $0x128] sm:$0xff]
      %v1257 = vld [vmem:[%s2 + $0x130] sm:$0xff]
      %v1258 = vld [vmem:[%s2 + $0x138] sm:$0xff]
      %v1259 = vld [vmem:[%s2 + $0x140] sm:$0xff]
      %v1260 = vld [vmem:[%s2 + $0x148] sm:$0xff]
      %v1261 = vld [vmem:[%s2 + $0x150] sm:$0xff]
      %v1262 = vld [vmem:[%s2 + $0x158] sm:$0xff]
      %v1263 = vld [vmem:[%s2 + $0x160] sm:$0xff]
      %v1264 = vld [vmem:[%s2 + $0x168] sm:$0xff]
      %v1265 = vld [vmem:[%s2 + $0x170] sm:$0xff]
      %v1266 = vld [vmem:[%s2 + $0x178] sm:$0xff]
      %v1267 = vld [vmem:[%s2 + $0x180] sm:$0xff]
      %v1268 = vld [vmem:[%s2 + $0x188] sm:$0xff]
      %v1269 = vld [vmem:[%s2 + $0x190] sm:$0xff]
      %v1270 = vld [vmem:[%s2 + $0x198] sm:$0xff]
      %v1271 = vld [vmem:[%s2 + $0x1a0] sm:$0xff]
      %v1272 = vld [vmem:[%s2 + $0x1a8] sm:$0xff]
      %v1273 = vld [vmem:[%s2 + $0x1b0] sm:$0xff]
      %v1274 = vld [vmem:[%s2 + $0x1b8] sm:$0xff]
      %v1275 = vld [vmem:[%s2 + $0x1c0] sm:$0xff]
      %v1276 = vld [vmem:[%s2 + $0x1c8] sm:$0xff]
      %v1277 = vld [vmem:[%s2 + $0x1d0] sm:$0xff]
      %v1278 = vld [vmem:[%s2 + $0x1d8] sm:$0xff]
      %v1279 = vld [vmem:[%s2 + $0x1e0] sm:$0xff]
      %v1280 = vld [vmem:[%s2 + $0x1e8] sm:$0xff]
      %v1281 = vld [vmem:[%s2 + $0x1f0] sm:$0xff]
      %v1282 = vld [vmem:[%s2 + $0x1f8] sm:$0xff]
      %v1283 = vld [vmem:[%s2 + $0x200] sm:$0xff]
      %v1284 = vld [vmem:[%s2 + $0x208] sm:$0xff]
      %v1285 = vld [vmem:[%s2 + $0x210] sm:$0xff]
      %v1286 = vld [vmem:[%s2 + $0x218] sm:$0xff]
      %v1287 = vld [vmem:[%s2 + $0x220] sm:$0xff]
      %v1288 = vld [vmem:[%s2 + $0x228] sm:$0xff]
      %v1289 = vld [vmem:[%s2 + $0x230] sm:$0xff]
      %v1290 = vld [vmem:[%s2 + $0x238] sm:$0xff]
      %v1291 = vld [vmem:[%s2 + $0x240] sm:$0xff]
      %v1292 = vld [vmem:[%s2 + $0x248] sm:$0xff]
      %v1293 = vld [vmem:[%s2 + $0x250] sm:$0xff]
      %v1294 = vld [vmem:[%s2 + $0x258] sm:$0xff]
      %v1295 = vld [vmem:[%s2 + $0x260] sm:$0xff]
      %v1296 = vld [vmem:[%s2 + $0x268] sm:$0xff]
      %v1297 = vld [vmem:[%s2 + $0x270] sm:$0xff]
      %v1298 = vld [vmem:[%s2 + $0x278] sm:$0xff]
      %v1299 = vld [vmem:[%s2 + $0x280] sm:$0xff]
      %v1300 = vld [vmem:[%s2 + $0x288] sm:$0xff]
      %v1301 = vld [vmem:[%s2 + $0x290] sm:$0xff]
      %v1302 = vld [vmem:[%s2 + $0x298] sm:$0xff]
      %v1303 = vld [vmem:[%s2 + $0x2a0] sm:$0xff]
      %v1304 = vld [vmem:[%s2 + $0x2a8] sm:$0xff]
      %v1305 = vld [vmem:[%s2 + $0x2b0] sm:$0xff]
      %v1306 = vld [vmem:[%s2 + $0x2b8] sm:$0xff]
      %v1307 = vld [vmem:[%s2 + $0x2c0] sm:$0xff]
      %v1308 = vld [vmem:[%s2 + $0x2c8] sm:$0xff]
      %v1309 = vld [vmem:[%s2 + $0x2d0] sm:$0xff]
      %v1310 = vld [vmem:[%s2 + $0x2d8] sm:$0xff]
      %v1311 = vld [vmem:[%s2 + $0x2e0] sm:$0xff]
      %v1312 = vld [vmem:[%s2 + $0x2e8] sm:$0xff]
      %v1313 = vld [vmem:[%s2 + $0x2f0] sm:$0xff]
      %v1314 = vld [vmem:[%s2 + $0x2f8] sm:$0xff]
      %v1315 = vld [vmem:[%s2 + $0x300] sm:$0xff]
      %v1316 = vld [vmem:[%s2 + $0x308] sm:$0xff]
      %v1317 = vld [vmem:[%s2 + $0x310] sm:$0xff]
      %v1318 = vld [vmem:[%s2 + $0x318] sm:$0xff]
      %v1319 = vld [vmem:[%s2 + $0x320] sm:$0xff]
      %v1320 = vld [vmem:[%s2 + $0x328] sm:$0xff]
      %v1321 = vld [vmem:[%s2 + $0x330] sm:$0xff]
      %v1322 = vld [vmem:[%s2 + $0x338] sm:$0xff]
      %v1323 = vld [vmem:[%s2 + $0x340] sm:$0xff]
      %v1324 = vld [vmem:[%s2 + $0x348] sm:$0xff]
      %v1325 = vld [vmem:[%s2 + $0x350] sm:$0xff]
      %v1326 = vld [vmem:[%s2 + $0x358] sm:$0xff]
      %v1327 = vld [vmem:[%s2 + $0x360] sm:$0xff]
      %v1328 = vld [vmem:[%s2 + $0x368] sm:$0xff]
      %v1329 = vld [vmem:[%s2 + $0x370] sm:$0xff]
      %v1330 = vld [vmem:[%s2 + $0x378] sm:$0xff]
      %v1331 = vld [vmem:[%s2 + $0x380] sm:$0xff]
      %v1332 = vld [vmem:[%s2 + $0x388] sm:$0xff]
      %v1333 = vld [vmem:[%s2 + $0x390] sm:$0xff]
      %v1334 = vld [vmem:[%s2 + $0x398] sm:$0xff]
      %v1335 = vld [vmem:[%s2 + $0x3a0] sm:$0xff]
      %v1336 = vld [vmem:[%s2 + $0x3a8] sm:$0xff]
      %v1337 = vld [vmem:[%s2 + $0x3b0] sm:$0xff]
      %v1338 = vld [vmem:[%s2 + $0x3b8] sm:$0xff]
      %v1339 = vld [vmem:[%s2 + $0x3c0] sm:$0xff]
      %v1340 = vld [vmem:[%s2 + $0x3c8] sm:$0xff]
      %v1341 = vld [vmem:[%s2 + $0x3d0] sm:$0xff]
      %v1342 = vld [vmem:[%s2 + $0x3d8] sm:$0xff]
      %v1343 = vld [vmem:[%s2 + $0x3e0] sm:$0xff]
      %v1344 = vld [vmem:[%s2 + $0x3e8] sm:$0xff]
      %v1345 = vld [vmem:[%s2 + $0x3f0] sm:$0xff]
      %v1346 = vld [vmem:[%s2 + $0x3f8] sm:$0xff]
      %v1347 = vld [vmem:[%s2 + $0x400] sm:$0xff]
      %v1348 = vld [vmem:[%s2 + $0x408] sm:$0xff]
      %v1349 = vld [vmem:[%s2 + $0x410] sm:$0xff]
      %v1350 = vld [vmem:[%s2 + $0x418] sm:$0xff]
      %v1351 = vld [vmem:[%s2 + $0x420] sm:$0xff]
      %v1352 = vld [vmem:[%s2 + $0x428] sm:$0xff]
      %v1353 = vld [vmem:[%s2 + $0x430] sm:$0xff]
      %v1354 = vld [vmem:[%s2 + $0x438] sm:$0xff]
      %v1355 = vld [vmem:[%s2 + $0x440] sm:$0xff]
      %v1356 = vld [vmem:[%s2 + $0x448] sm:$0xff]
      %v1357 = vld [vmem:[%s2 + $0x450] sm:$0xff]
      %v1358 = vld [vmem:[%s2 + $0x458] sm:$0xff]
      %v1359 = vld [vmem:[%s2 + $0x460] sm:$0xff]
      %v1360 = vld [vmem:[%s2 + $0x468] sm:$0xff]
      %v1361 = vld [vmem:[%s2 + $0x470] sm:$0xff]
      %v1362 = vld [vmem:[%s2 + $0x478] sm:$0xff]
      %v1363 = vld [vmem:[%s2 + $0x480] sm:$0xff]
      %v1364 = vld [vmem:[%s2 + $0x488] sm:$0xff]
      %v1365 = vld [vmem:[%s2 + $0x490] sm:$0xff]
      %v1366 = vld [vmem:[%s2 + $0x498] sm:$0xff]
      %v1367 = vld [vmem:[%s2 + $0x4a0] sm:$0xff]
      %v1368 = vld [vmem:[%s2 + $0x4a8] sm:$0xff]
      %v1369 = vld [vmem:[%s2 + $0x4b0] sm:$0xff]
      %v1370 = vld [vmem:[%s2 + $0x4b8] sm:$0xff]
      %v1371 = vld [vmem:[%s2 + $0x4c0] sm:$0xff]
      %v1372 = vld [vmem:[%s2 + $0x4c8] sm:$0xff]
      %v1373 = vld [vmem:[%s2 + $0x4d0] sm:$0xff]
      %v1374 = vld [vmem:[%s2 + $0x4d8] sm:$0xff]
      %v1375 = vld [vmem:[%s2 + $0x4e0] sm:$0xff]
      %v1376 = vld [vmem:[%s2 + $0x4e8] sm:$0xff]
      %v1377 = vld [vmem:[%s2 + $0x4f0] sm:$0xff]
      %v1378 = vld [vmem:[%s2 + $0x4f8] sm:$0xff]
      %v1379 = vld [vmem:[%s2 + $0x500] sm:$0xff]
      %v1380 = vld [vmem:[%s2 + $0x508] sm:$0xff]
      %v1381 = vld [vmem:[%s2 + $0x510] sm:$0xff]
      %v1382 = vld [vmem:[%s2 + $0x518] sm:$0xff]
      %v1383 = vld [vmem:[%s2 + $0x520] sm:$0xff]
      %v1384 = vld [vmem:[%s2 + $0x528] sm:$0xff]
      %v1385 = vld [vmem:[%s2 + $0x530] sm:$0xff]
      %v1386 = vld [vmem:[%s2 + $0x538] sm:$0xff]
      %v1387 = vld [vmem:[%s2 + $0x540] sm:$0xff]
      %v1388 = vld [vmem:[%s2 + $0x548] sm:$0xff]
      %v1389 = vld [vmem:[%s2 + $0x550] sm:$0xff]
      %v1390 = vld [vmem:[%s2 + $0x558] sm:$0xff]
      %v1391 = vld [vmem:[%s2 + $0x560] sm:$0xff]
      %v1392 = vld [vmem:[%s2 + $0x568] sm:$0xff]
      %v1393 = vld [vmem:[%s2 + $0x570] sm:$0xff]
      %v1394 = vld [vmem:[%s2 + $0x578] sm:$0xff]
      %v1395 = vld [vmem:[%s2 + $0x580] sm:$0xff]
      %v1396 = vld [vmem:[%s2 + $0x588] sm:$0xff]
      %v1397 = vld [vmem:[%s2 + $0x590] sm:$0xff]
      %v1398 = vld [vmem:[%s2 + $0x598] sm:$0xff]
      %v1399 = vld [vmem:[%s2 + $0x5a0] sm:$0xff]
      %v1400 = vld [vmem:[%s2 + $0x5a8] sm:$0xff]
      %v1401 = vld [vmem:[%s2 + $0x5b0] sm:$0xff]
      %v1402 = vld [vmem:[%s2 + $0x5b8] sm:$0xff]
      %v1403 = vld [vmem:[%s2 + $0x5c0] sm:$0xff]
      %v1404 = vld [vmem:[%s2 + $0x5c8] sm:$0xff]
      %v1405 = vld [vmem:[%s2 + $0x5d0] sm:$0xff]
      %v1406 = vld [vmem:[%s2 + $0x5d8] sm:$0xff]
      %v1407 = vld [vmem:[%s2 + $0x5e0] sm:$0xff]
      %v1408 = vld [vmem:[%s2 + $0x5e8] sm:$0xff]
      %v1409 = vld [vmem:[%s2 + $0x5f0] sm:$0xff]
      %v1410 = vld [vmem:[%s2 + $0x5f8] sm:$0xff]
      %v1603 = vunpack.c.l.b16 %v1219
      %v1604 = vunpack.c.h.b16 %v1219
      %v1605 = vunpack.c.l.b16 %v1220
      %v1606 = vunpack.c.h.b16 %v1220
      %v1607 = vunpack.c.l.b16 %v1221
      %v1608 = vunpack.c.h.b16 %v1221
      %v1609 = vunpack.c.l.b16 %v1222
      %v1610 = vunpack.c.h.b16 %v1222
      %v1611 = vunpack.c.l.b16 %v1223
      %v1612 = vunpack.c.h.b16 %v1223
      %v1613 = vunpack.c.l.b16 %v1224
      %v1614 = vunpack.c.h.b16 %v1224
      %v1615 = vunpack.c.l.b16 %v1225
      %v1616 = vunpack.c.h.b16 %v1225
      %v1617 = vunpack.c.l.b16 %v1226
      %v1618 = vunpack.c.h.b16 %v1226
      %v1619 = vunpack.c.l.b16 %v1227
      %v1620 = vunpack.c.h.b16 %v1227
      %v1621 = vunpack.c.l.b16 %v1228
      %v1622 = vunpack.c.h.b16 %v1228
      %v1623 = vunpack.c.l.b16 %v1229
      %v1624 = vunpack.c.h.b16 %v1229
      %v1625 = vunpack.c.l.b16 %v1230
      %v1626 = vunpack.c.h.b16 %v1230
      %v1627 = vunpack.c.l.b16 %v1231
      %v1628 = vunpack.c.h.b16 %v1231
      %v1629 = vunpack.c.l.b16 %v1232
      %v1630 = vunpack.c.h.b16 %v1232
      %v1631 = vunpack.c.l.b16 %v1233
      %v1632 = vunpack.c.h.b16 %v1233
      %v1633 = vunpack.c.l.b16 %v1234
      %v1634 = vunpack.c.h.b16 %v1234
      %v1635 = vunpack.c.l.b16 %v1235
      %v1636 = vunpack.c.h.b16 %v1235
      %v1637 = vunpack.c.l.b16 %v1236
      %v1638 = vunpack.c.h.b16 %v1236
      %v1639 = vunpack.c.l.b16 %v1237
      %v1640 = vunpack.c.h.b16 %v1237
      %v1641 = vunpack.c.l.b16 %v1238
      %v1642 = vunpack.c.h.b16 %v1238
      %v1643 = vunpack.c.l.b16 %v1239
      %v1644 = vunpack.c.h.b16 %v1239
      %v1645 = vunpack.c.l.b16 %v1240
      %v1646 = vunpack.c.h.b16 %v1240
      %v1647 = vunpack.c.l.b16 %v1241
      %v1648 = vunpack.c.h.b16 %v1241
      %v1649 = vunpack.c.l.b16 %v1242
      %v1650 = vunpack.c.h.b16 %v1242
      %v1651 = vunpack.c.l.b16 %v1243
      %v1652 = vunpack.c.h.b16 %v1243
      %v1653 = vunpack.c.l.b16 %v1244
      %v1654 = vunpack.c.h.b16 %v1244
      %v1655 = vunpack.c.l.b16 %v1245
      %v1656 = vunpack.c.h.b16 %v1245
      %v1657 = vunpack.c.l.b16 %v1246
      %v1658 = vunpack.c.h.b16 %v1246
      %v1659 = vunpack.c.l.b16 %v1247
      %v1660 = vunpack.c.h.b16 %v1247
      %v1661 = vunpack.c.l.b16 %v1248
      %v1662 = vunpack.c.h.b16 %v1248
      %v1663 = vunpack.c.l.b16 %v1249
      %v1664 = vunpack.c.h.b16 %v1249
      %v1665 = vunpack.c.l.b16 %v1250
      %v1666 = vunpack.c.h.b16 %v1250
      %v1667 = vunpack.c.l.b16 %v1251
      %v1668 = vunpack.c.h.b16 %v1251
      %v1669 = vunpack.c.l.b16 %v1252
      %v1670 = vunpack.c.h.b16 %v1252
      %v1671 = vunpack.c.l.b16 %v1253
      %v1672 = vunpack.c.h.b16 %v1253
      %v1673 = vunpack.c.l.b16 %v1254
      %v1674 = vunpack.c.h.b16 %v1254
      %v1675 = vunpack.c.l.b16 %v1255
      %v1676 = vunpack.c.h.b16 %v1255
      %v1677 = vunpack.c.l.b16 %v1256
      %v1678 = vunpack.c.h.b16 %v1256
      %v1679 = vunpack.c.l.b16 %v1257
      %v1680 = vunpack.c.h.b16 %v1257
      %v1681 = vunpack.c.l.b16 %v1258
      %v1682 = vunpack.c.h.b16 %v1258
      %v1683 = vunpack.c.l.b16 %v1259
      %v1684 = vunpack.c.h.b16 %v1259
      %v1685 = vunpack.c.l.b16 %v1260
      %v1686 = vunpack.c.h.b16 %v1260
      %v1687 = vunpack.c.l.b16 %v1261
      %v1688 = vunpack.c.h.b16 %v1261
      %v1689 = vunpack.c.l.b16 %v1262
      %v1690 = vunpack.c.h.b16 %v1262
      %v1691 = vunpack.c.l.b16 %v1263
      %v1692 = vunpack.c.h.b16 %v1263
      %v1693 = vunpack.c.l.b16 %v1264
      %v1694 = vunpack.c.h.b16 %v1264
      %v1695 = vunpack.c.l.b16 %v1265
      %v1696 = vunpack.c.h.b16 %v1265
      %v1697 = vunpack.c.l.b16 %v1266
      %v1698 = vunpack.c.h.b16 %v1266
      %v1699 = vunpack.c.l.b16 %v1267
      %v1700 = vunpack.c.h.b16 %v1267
      %v1701 = vunpack.c.l.b16 %v1268
      %v1702 = vunpack.c.h.b16 %v1268
      %v1703 = vunpack.c.l.b16 %v1269
      %v1704 = vunpack.c.h.b16 %v1269
      %v1705 = vunpack.c.l.b16 %v1270
      %v1706 = vunpack.c.h.b16 %v1270
      %v1707 = vunpack.c.l.b16 %v1271
      %v1708 = vunpack.c.h.b16 %v1271
      %v1709 = vunpack.c.l.b16 %v1272
      %v1710 = vunpack.c.h.b16 %v1272
      %v1711 = vunpack.c.l.b16 %v1273
      %v1712 = vunpack.c.h.b16 %v1273
      %v1713 = vunpack.c.l.b16 %v1274
      %v1714 = vunpack.c.h.b16 %v1274
      %v1715 = vunpack.c.l.b16 %v1275
      %v1716 = vunpack.c.h.b16 %v1275
      %v1717 = vunpack.c.l.b16 %v1276
      %v1718 = vunpack.c.h.b16 %v1276
      %v1719 = vunpack.c.l.b16 %v1277
      %v1720 = vunpack.c.h.b16 %v1277
      %v1721 = vunpack.c.l.b16 %v1278
      %v1722 = vunpack.c.h.b16 %v1278
      %v1723 = vunpack.c.l.b16 %v1279
      %v1724 = vunpack.c.h.b16 %v1279
      %v1725 = vunpack.c.l.b16 %v1280
      %v1726 = vunpack.c.h.b16 %v1280
      %v1727 = vunpack.c.l.b16 %v1281
      %v1728 = vunpack.c.h.b16 %v1281
      %v1729 = vunpack.c.l.b16 %v1282
      %v1730 = vunpack.c.h.b16 %v1282
      %v1731 = vunpack.c.l.b16 %v1283
      %v1732 = vunpack.c.h.b16 %v1283
      %v1733 = vunpack.c.l.b16 %v1284
      %v1734 = vunpack.c.h.b16 %v1284
      %v1735 = vunpack.c.l.b16 %v1285
      %v1736 = vunpack.c.h.b16 %v1285
      %v1737 = vunpack.c.l.b16 %v1286
      %v1738 = vunpack.c.h.b16 %v1286
      %v1739 = vunpack.c.l.b16 %v1287
      %v1740 = vunpack.c.h.b16 %v1287
      %v1741 = vunpack.c.l.b16 %v1288
      %v1742 = vunpack.c.h.b16 %v1288
      %v1743 = vunpack.c.l.b16 %v1289
      %v1744 = vunpack.c.h.b16 %v1289
      %v1745 = vunpack.c.l.b16 %v1290
      %v1746 = vunpack.c.h.b16 %v1290
      %v1747 = vunpack.c.l.b16 %v1291
      %v1748 = vunpack.c.h.b16 %v1291
      %v1749 = vunpack.c.l.b16 %v1292
      %v1750 = vunpack.c.h.b16 %v1292
      %v1751 = vunpack.c.l.b16 %v1293
      %v1752 = vunpack.c.h.b16 %v1293
      %v1753 = vunpack.c.l.b16 %v1294
      %v1754 = vunpack.c.h.b16 %v1294
      %v1755 = vunpack.c.l.b16 %v1295
      %v1756 = vunpack.c.h.b16 %v1295
      %v1757 = vunpack.c.l.b16 %v1296
      %v1758 = vunpack.c.h.b16 %v1296
      %v1759 = vunpack.c.l.b16 %v1297
      %v1760 = vunpack.c.h.b16 %v1297
      %v1761 = vunpack.c.l.b16 %v1298
      %v1762 = vunpack.c.h.b16 %v1298
      %v1763 = vunpack.c.l.b16 %v1299
      %v1764 = vunpack.c.h.b16 %v1299
      %v1765 = vunpack.c.l.b16 %v1300
      %v1766 = vunpack.c.h.b16 %v1300
      %v1767 = vunpack.c.l.b16 %v1301
      %v1768 = vunpack.c.h.b16 %v1301
      %v1769 = vunpack.c.l.b16 %v1302
      %v1770 = vunpack.c.h.b16 %v1302
      %v1771 = vunpack.c.l.b16 %v1303
      %v1772 = vunpack.c.h.b16 %v1303
      %v1773 = vunpack.c.l.b16 %v1304
      %v1774 = vunpack.c.h.b16 %v1304
      %v1775 = vunpack.c.l.b16 %v1305
      %v1776 = vunpack.c.h.b16 %v1305
      %v1777 = vunpack.c.l.b16 %v1306
      %v1778 = vunpack.c.h.b16 %v1306
      %v1779 = vunpack.c.l.b16 %v1307
      %v1780 = vunpack.c.h.b16 %v1307
      %v1781 = vunpack.c.l.b16 %v1308
      %v1782 = vunpack.c.h.b16 %v1308
      %v1783 = vunpack.c.l.b16 %v1309
      %v1784 = vunpack.c.h.b16 %v1309
      %v1785 = vunpack.c.l.b16 %v1310
      %v1786 = vunpack.c.h.b16 %v1310
      %v1787 = vunpack.c.l.b16 %v1311
      %v1788 = vunpack.c.h.b16 %v1311
      %v1789 = vunpack.c.l.b16 %v1312
      %v1790 = vunpack.c.h.b16 %v1312
      %v1791 = vunpack.c.l.b16 %v1313
      %v1792 = vunpack.c.h.b16 %v1313
      %v1793 = vunpack.c.l.b16 %v1314
      %v1794 = vunpack.c.h.b16 %v1314
      %v1795 = vunpack.c.l.b16 %v1315
      %v1796 = vunpack.c.h.b16 %v1315
      %v1797 = vunpack.c.l.b16 %v1316
      %v1798 = vunpack.c.h.b16 %v1316
      %v1799 = vunpack.c.l.b16 %v1317
      %v1800 = vunpack.c.h.b16 %v1317
      %v1801 = vunpack.c.l.b16 %v1318
      %v1802 = vunpack.c.h.b16 %v1318
      %v1803 = vunpack.c.l.b16 %v1319
      %v1804 = vunpack.c.h.b16 %v1319
      %v1805 = vunpack.c.l.b16 %v1320
      %v1806 = vunpack.c.h.b16 %v1320
      %v1807 = vunpack.c.l.b16 %v1321
      %v1808 = vunpack.c.h.b16 %v1321
      %v1809 = vunpack.c.l.b16 %v1322
      %v1810 = vunpack.c.h.b16 %v1322
      %v1811 = vunpack.c.l.b16 %v1323
      %v1812 = vunpack.c.h.b16 %v1323
      %v1813 = vunpack.c.l.b16 %v1324
      %v1814 = vunpack.c.h.b16 %v1324
      %v1815 = vunpack.c.l.b16 %v1325
      %v1816 = vunpack.c.h.b16 %v1325
      %v1817 = vunpack.c.l.b16 %v1326
      %v1818 = vunpack.c.h.b16 %v1326
      %v1819 = vunpack.c.l.b16 %v1327
      %v1820 = vunpack.c.h.b16 %v1327
      %v1821 = vunpack.c.l.b16 %v1328
      %v1822 = vunpack.c.h.b16 %v1328
      %v1823 = vunpack.c.l.b16 %v1329
      %v1824 = vunpack.c.h.b16 %v1329
      %v1825 = vunpack.c.l.b16 %v1330
      %v1826 = vunpack.c.h.b16 %v1330
      %v1827 = vunpack.c.l.b16 %v1331
      %v1828 = vunpack.c.h.b16 %v1331
      %v1829 = vunpack.c.l.b16 %v1332
      %v1830 = vunpack.c.h.b16 %v1332
      %v1831 = vunpack.c.l.b16 %v1333
      %v1832 = vunpack.c.h.b16 %v1333
      %v1833 = vunpack.c.l.b16 %v1334
      %v1834 = vunpack.c.h.b16 %v1334
      %v1835 = vunpack.c.l.b16 %v1335
      %v1836 = vunpack.c.h.b16 %v1335
      %v1837 = vunpack.c.l.b16 %v1336
      %v1838 = vunpack.c.h.b16 %v1336
      %v1839 = vunpack.c.l.b16 %v1337
      %v1840 = vunpack.c.h.b16 %v1337
      %v1841 = vunpack.c.l.b16 %v1338
      %v1842 = vunpack.c.h.b16 %v1338
      %v1843 = vunpack.c.l.b16 %v1339
      %v1844 = vunpack.c.h.b16 %v1339
      %v1845 = vunpack.c.l.b16 %v1340
      %v1846 = vunpack.c.h.b16 %v1340
      %v1847 = vunpack.c.l.b16 %v1341
      %v1848 = vunpack.c.h.b16 %v1341
      %v1849 = vunpack.c.l.b16 %v1342
      %v1850 = vunpack.c.h.b16 %v1342
      %v1851 = vunpack.c.l.b16 %v1343
      %v1852 = vunpack.c.h.b16 %v1343
      %v1853 = vunpack.c.l.b16 %v1344
      %v1854 = vunpack.c.h.b16 %v1344
      %v1855 = vunpack.c.l.b16 %v1345
      %v1856 = vunpack.c.h.b16 %v1345
      %v1857 = vunpack.c.l.b16 %v1346
      %v1858 = vunpack.c.h.b16 %v1346
      %v1859 = vunpack.c.l.b16 %v1347
      %v1860 = vunpack.c.h.b16 %v1347
      %v1861 = vunpack.c.l.b16 %v1348
      %v1862 = vunpack.c.h.b16 %v1348
      %v1863 = vunpack.c.l.b16 %v1349
      %v1864 = vunpack.c.h.b16 %v1349
      %v1865 = vunpack.c.l.b16 %v1350
      %v1866 = vunpack.c.h.b16 %v1350
      %v1867 = vunpack.c.l.b16 %v1351
      %v1868 = vunpack.c.h.b16 %v1351
      %v1869 = vunpack.c.l.b16 %v1352
      %v1870 = vunpack.c.h.b16 %v1352
      %v1871 = vunpack.c.l.b16 %v1353
      %v1872 = vunpack.c.h.b16 %v1353
      %v1873 = vunpack.c.l.b16 %v1354
      %v1874 = vunpack.c.h.b16 %v1354
      %v1875 = vunpack.c.l.b16 %v1355
      %v1876 = vunpack.c.h.b16 %v1355
      %v1877 = vunpack.c.l.b16 %v1356
      %v1878 = vunpack.c.h.b16 %v1356
      %v1879 = vunpack.c.l.b16 %v1357
      %v1880 = vunpack.c.h.b16 %v1357
      %v1881 = vunpack.c.l.b16 %v1358
      %v1882 = vunpack.c.h.b16 %v1358
      %v1883 = vunpack.c.l.b16 %v1359
      %v1884 = vunpack.c.h.b16 %v1359
      %v1885 = vunpack.c.l.b16 %v1360
      %v1886 = vunpack.c.h.b16 %v1360
      %v1887 = vunpack.c.l.b16 %v1361
      %v1888 = vunpack.c.h.b16 %v1361
      %v1889 = vunpack.c.l.b16 %v1362
      %v1890 = vunpack.c.h.b16 %v1362
      %v1891 = vunpack.c.l.b16 %v1363
      %v1892 = vunpack.c.h.b16 %v1363
      %v1893 = vunpack.c.l.b16 %v1364
      %v1894 = vunpack.c.h.b16 %v1364
      %v1895 = vunpack.c.l.b16 %v1365
      %v1896 = vunpack.c.h.b16 %v1365
      %v1897 = vunpack.c.l.b16 %v1366
      %v1898 = vunpack.c.h.b16 %v1366
      %v1899 = vunpack.c.l.b16 %v1367
      %v1900 = vunpack.c.h.b16 %v1367
      %v1901 = vunpack.c.l.b16 %v1368
      %v1902 = vunpack.c.h.b16 %v1368
      %v1903 = vunpack.c.l.b16 %v1369
      %v1904 = vunpack.c.h.b16 %v1369
      %v1905 = vunpack.c.l.b16 %v1370
      %v1906 = vunpack.c.h.b16 %v1370
      %v1907 = vunpack.c.l.b16 %v1371
      %v1908 = vunpack.c.h.b16 %v1371
      %v1909 = vunpack.c.l.b16 %v1372
      %v1910 = vunpack.c.h.b16 %v1372
      %v1911 = vunpack.c.l.b16 %v1373
      %v1912 = vunpack.c.h.b16 %v1373
      %v1913 = vunpack.c.l.b16 %v1374
      %v1914 = vunpack.c.h.b16 %v1374
      %v1915 = vunpack.c.l.b16 %v1375
      %v1916 = vunpack.c.h.b16 %v1375
      %v1917 = vunpack.c.l.b16 %v1376
      %v1918 = vunpack.c.h.b16 %v1376
      %v1919 = vunpack.c.l.b16 %v1377
      %v1920 = vunpack.c.h.b16 %v1377
      %v1921 = vunpack.c.l.b16 %v1378
      %v1922 = vunpack.c.h.b16 %v1378
      %v1923 = vunpack.c.l.b16 %v1379
      %v1924 = vunpack.c.h.b16 %v1379
      %v1925 = vunpack.c.l.b16 %v1380
      %v1926 = vunpack.c.h.b16 %v1380
      %v1927 = vunpack.c.l.b16 %v1381
      %v1928 = vunpack.c.h.b16 %v1381
      %v1929 = vunpack.c.l.b16 %v1382
      %v1930 = vunpack.c.h.b16 %v1382
      %v1931 = vunpack.c.l.b16 %v1383
      %v1932 = vunpack.c.h.b16 %v1383
      %v1933 = vunpack.c.l.b16 %v1384
      %v1934 = vunpack.c.h.b16 %v1384
      %v1935 = vunpack.c.l.b16 %v1385
      %v1936 = vunpack.c.h.b16 %v1385
      %v1937 = vunpack.c.l.b16 %v1386
      %v1938 = vunpack.c.h.b16 %v1386
      %v1939 = vunpack.c.l.b16 %v1387
      %v1940 = vunpack.c.h.b16 %v1387
      %v1941 = vunpack.c.l.b16 %v1388
      %v1942 = vunpack.c.h.b16 %v1388
      %v1943 = vunpack.c.l.b16 %v1389
      %v1944 = vunpack.c.h.b16 %v1389
      %v1945 = vunpack.c.l.b16 %v1390
      %v1946 = vunpack.c.h.b16 %v1390
      %v1947 = vunpack.c.l.b16 %v1391
      %v1948 = vunpack.c.h.b16 %v1391
      %v1949 = vunpack.c.l.b16 %v1392
      %v1950 = vunpack.c.h.b16 %v1392
      %v1951 = vunpack.c.l.b16 %v1393
      %v1952 = vunpack.c.h.b16 %v1393
      %v1953 = vunpack.c.l.b16 %v1394
      %v1954 = vunpack.c.h.b16 %v1394
      %v1955 = vunpack.c.l.b16 %v1395
      %v1956 = vunpack.c.h.b16 %v1395
      %v1957 = vunpack.c.l.b16 %v1396
      %v1958 = vunpack.c.h.b16 %v1396
      %v1959 = vunpack.c.l.b16 %v1397
      %v1960 = vunpack.c.h.b16 %v1397
      %v1961 = vunpack.c.l.b16 %v1398
      %v1962 = vunpack.c.h.b16 %v1398
      %v1963 = vunpack.c.l.b16 %v1399
      %v1964 = vunpack.c.h.b16 %v1399
      %v1965 = vunpack.c.l.b16 %v1400
      %v1966 = vunpack.c.h.b16 %v1400
      %v1967 = vunpack.c.l.b16 %v1401
      %v1968 = vunpack.c.h.b16 %v1401
      %v1969 = vunpack.c.l.b16 %v1402
      %v1970 = vunpack.c.h.b16 %v1402
      %v1971 = vunpack.c.l.b16 %v1403
      %v1972 = vunpack.c.h.b16 %v1403
      %v1973 = vunpack.c.l.b16 %v1404
      %v1974 = vunpack.c.h.b16 %v1404
      %v1975 = vunpack.c.l.b16 %v1405
      %v1976 = vunpack.c.h.b16 %v1405
      %v1977 = vunpack.c.l.b16 %v1406
      %v1978 = vunpack.c.h.b16 %v1406
      %v1979 = vunpack.c.l.b16 %v1407
      %v1980 = vunpack.c.h.b16 %v1407
      %v1981 = vunpack.c.l.b16 %v1408
      %v1982 = vunpack.c.h.b16 %v1408
      %v1983 = vunpack.c.l.b16 %v1409
      %v1984 = vunpack.c.h.b16 %v1409
      %v1985 = vunpack.c.l.b16 %v1410
      %v1986 = vunpack.c.h.b16 %v1410
      %v1987 = vpack.c.b16 %v1607, %v1603
      %v1988 = vpack.c.b16 %v1608, %v1604
      %v1989 = vpack.c.b16 %v1609, %v1605
      %v1990 = vpack.c.b16 %v1610, %v1606
      %v1991 = vpack.c.b16 %v1615, %v1611
      %v1992 = vpack.c.b16 %v1616, %v1612
      %v1993 = vpack.c.b16 %v1617, %v1613
      %v1994 = vpack.c.b16 %v1618, %v1614
      %v1995 = vpack.c.b16 %v1623, %v1619
      %v1996 = vpack.c.b16 %v1624, %v1620
      %v1997 = vpack.c.b16 %v1625, %v1621
      %v1998 = vpack.c.b16 %v1626, %v1622
      %v1999 = vpack.c.b16 %v1631, %v1627
      %v2000 = vpack.c.b16 %v1632, %v1628
      %v2001 = vpack.c.b16 %v1633, %v1629
      %v2002 = vpack.c.b16 %v1634, %v1630
      %v2003 = vpack.c.b16 %v1639, %v1635
      %v2004 = vpack.c.b16 %v1640, %v1636
      %v2005 = vpack.c.b16 %v1641, %v1637
      %v2006 = vpack.c.b16 %v1642, %v1638
      %v2007 = vpack.c.b16 %v1647, %v1643
      %v2008 = vpack.c.b16 %v1648, %v1644
      %v2009 = vpack.c.b16 %v1649, %v1645
      %v2010 = vpack.c.b16 %v1650, %v1646
      %v2011 = vpack.c.b16 %v1655, %v1651
      %v2012 = vpack.c.b16 %v1656, %v1652
      %v2013 = vpack.c.b16 %v1657, %v1653
      %v2014 = vpack.c.b16 %v1658, %v1654
      %v2015 = vpack.c.b16 %v1663, %v1659
      %v2016 = vpack.c.b16 %v1664, %v1660
      %v2017 = vpack.c.b16 %v1665, %v1661
      %v2018 = vpack.c.b16 %v1666, %v1662
      %v2019 = vpack.c.b16 %v1671, %v1667
      %v2020 = vpack.c.b16 %v1672, %v1668
      %v2021 = vpack.c.b16 %v1673, %v1669
      %v2022 = vpack.c.b16 %v1674, %v1670
      %v2023 = vpack.c.b16 %v1679, %v1675
      %v2024 = vpack.c.b16 %v1680, %v1676
      %v2025 = vpack.c.b16 %v1681, %v1677
      %v2026 = vpack.c.b16 %v1682, %v1678
      %v2027 = vpack.c.b16 %v1687, %v1683
      %v2028 = vpack.c.b16 %v1688, %v1684
      %v2029 = vpack.c.b16 %v1689, %v1685
      %v2030 = vpack.c.b16 %v1690, %v1686
      %v2031 = vpack.c.b16 %v1695, %v1691
      %v2032 = vpack.c.b16 %v1696, %v1692
      %v2033 = vpack.c.b16 %v1697, %v1693
      %v2034 = vpack.c.b16 %v1698, %v1694
      %v2035 = vpack.c.b16 %v1703, %v1699
      %v2036 = vpack.c.b16 %v1704, %v1700
      %v2037 = vpack.c.b16 %v1705, %v1701
      %v2038 = vpack.c.b16 %v1706, %v1702
      %v2039 = vpack.c.b16 %v1711, %v1707
      %v2040 = vpack.c.b16 %v1712, %v1708
      %v2041 = vpack.c.b16 %v1713, %v1709
      %v2042 = vpack.c.b16 %v1714, %v1710
      %v2043 = vpack.c.b16 %v1719, %v1715
      %v2044 = vpack.c.b16 %v1720, %v1716
      %v2045 = vpack.c.b16 %v1721, %v1717
      %v2046 = vpack.c.b16 %v1722, %v1718
      %v2047 = vpack.c.b16 %v1727, %v1723
      %v2048 = vpack.c.b16 %v1728, %v1724
      %v2049 = vpack.c.b16 %v1729, %v1725
      %v2050 = vpack.c.b16 %v1730, %v1726
      %v2051 = vpack.c.b16 %v1735, %v1731
      %v2052 = vpack.c.b16 %v1736, %v1732
      %v2053 = vpack.c.b16 %v1737, %v1733
      %v2054 = vpack.c.b16 %v1738, %v1734
      %v2055 = vpack.c.b16 %v1743, %v1739
      %v2056 = vpack.c.b16 %v1744, %v1740
      %v2057 = vpack.c.b16 %v1745, %v1741
      %v2058 = vpack.c.b16 %v1746, %v1742
      %v2059 = vpack.c.b16 %v1751, %v1747
      %v2060 = vpack.c.b16 %v1752, %v1748
      %v2061 = vpack.c.b16 %v1753, %v1749
      %v2062 = vpack.c.b16 %v1754, %v1750
      %v2063 = vpack.c.b16 %v1759, %v1755
      %v2064 = vpack.c.b16 %v1760, %v1756
      %v2065 = vpack.c.b16 %v1761, %v1757
      %v2066 = vpack.c.b16 %v1762, %v1758
      %v2067 = vpack.c.b16 %v1767, %v1763
      %v2068 = vpack.c.b16 %v1768, %v1764
      %v2069 = vpack.c.b16 %v1769, %v1765
      %v2070 = vpack.c.b16 %v1770, %v1766
      %v2071 = vpack.c.b16 %v1775, %v1771
      %v2072 = vpack.c.b16 %v1776, %v1772
      %v2073 = vpack.c.b16 %v1777, %v1773
      %v2074 = vpack.c.b16 %v1778, %v1774
      %v2075 = vpack.c.b16 %v1783, %v1779
      %v2076 = vpack.c.b16 %v1784, %v1780
      %v2077 = vpack.c.b16 %v1785, %v1781
      %v2078 = vpack.c.b16 %v1786, %v1782
      %v2079 = vpack.c.b16 %v1791, %v1787
      %v2080 = vpack.c.b16 %v1792, %v1788
      %v2081 = vpack.c.b16 %v1793, %v1789
      %v2082 = vpack.c.b16 %v1794, %v1790
      %v2083 = vpack.c.b16 %v1799, %v1795
      %v2084 = vpack.c.b16 %v1800, %v1796
      %v2085 = vpack.c.b16 %v1801, %v1797
      %v2086 = vpack.c.b16 %v1802, %v1798
      %v2087 = vpack.c.b16 %v1807, %v1803
      %v2088 = vpack.c.b16 %v1808, %v1804
      %v2089 = vpack.c.b16 %v1809, %v1805
      %v2090 = vpack.c.b16 %v1810, %v1806
      %v2091 = vpack.c.b16 %v1815, %v1811
      %v2092 = vpack.c.b16 %v1816, %v1812
      %v2093 = vpack.c.b16 %v1817, %v1813
      %v2094 = vpack.c.b16 %v1818, %v1814
      %v2095 = vpack.c.b16 %v1823, %v1819
      %v2096 = vpack.c.b16 %v1824, %v1820
      %v2097 = vpack.c.b16 %v1825, %v1821
      %v2098 = vpack.c.b16 %v1826, %v1822
      %v2099 = vpack.c.b16 %v1831, %v1827
      %v2100 = vpack.c.b16 %v1832, %v1828
      %v2101 = vpack.c.b16 %v1833, %v1829
      %v2102 = vpack.c.b16 %v1834, %v1830
      %v2103 = vpack.c.b16 %v1839, %v1835
      %v2104 = vpack.c.b16 %v1840, %v1836
      %v2105 = vpack.c.b16 %v1841, %v1837
      %v2106 = vpack.c.b16 %v1842, %v1838
      %v2107 = vpack.c.b16 %v1847, %v1843
      %v2108 = vpack.c.b16 %v1848, %v1844
      %v2109 = vpack.c.b16 %v1849, %v1845
      %v2110 = vpack.c.b16 %v1850, %v1846
      %v2111 = vpack.c.b16 %v1855, %v1851
      %v2112 = vpack.c.b16 %v1856, %v1852
      %v2113 = vpack.c.b16 %v1857, %v1853
      %v2114 = vpack.c.b16 %v1858, %v1854
      %v2115 = vpack.c.b16 %v1863, %v1859
      %v2116 = vpack.c.b16 %v1864, %v1860
      %v2117 = vpack.c.b16 %v1865, %v1861
      %v2118 = vpack.c.b16 %v1866, %v1862
      %v2119 = vpack.c.b16 %v1871, %v1867
      %v2120 = vpack.c.b16 %v1872, %v1868
      %v2121 = vpack.c.b16 %v1873, %v1869
      %v2122 = vpack.c.b16 %v1874, %v1870
      %v2123 = vpack.c.b16 %v1879, %v1875
      %v2124 = vpack.c.b16 %v1880, %v1876
      %v2125 = vpack.c.b16 %v1881, %v1877
      %v2126 = vpack.c.b16 %v1882, %v1878
      %v2127 = vpack.c.b16 %v1887, %v1883
      %v2128 = vpack.c.b16 %v1888, %v1884
      %v2129 = vpack.c.b16 %v1889, %v1885
      %v2130 = vpack.c.b16 %v1890, %v1886
      %v2131 = vpack.c.b16 %v1895, %v1891
      %v2132 = vpack.c.b16 %v1896, %v1892
      %v2133 = vpack.c.b16 %v1897, %v1893
      %v2134 = vpack.c.b16 %v1898, %v1894
      %v2135 = vpack.c.b16 %v1903, %v1899
      %v2136 = vpack.c.b16 %v1904, %v1900
      %v2137 = vpack.c.b16 %v1905, %v1901
      %v2138 = vpack.c.b16 %v1906, %v1902
      %v2139 = vpack.c.b16 %v1911, %v1907
      %v2140 = vpack.c.b16 %v1912, %v1908
      %v2141 = vpack.c.b16 %v1913, %v1909
      %v2142 = vpack.c.b16 %v1914, %v1910
      %v2143 = vpack.c.b16 %v1919, %v1915
      %v2144 = vpack.c.b16 %v1920, %v1916
      %v2145 = vpack.c.b16 %v1921, %v1917
      %v2146 = vpack.c.b16 %v1922, %v1918
      %v2147 = vpack.c.b16 %v1927, %v1923
      %v2148 = vpack.c.b16 %v1928, %v1924
      %v2149 = vpack.c.b16 %v1929, %v1925
      %v2150 = vpack.c.b16 %v1930, %v1926
      %v2151 = vpack.c.b16 %v1935, %v1931
      %v2152 = vpack.c.b16 %v1936, %v1932
      %v2153 = vpack.c.b16 %v1937, %v1933
      %v2154 = vpack.c.b16 %v1938, %v1934
      %v2155 = vpack.c.b16 %v1943, %v1939
      %v2156 = vpack.c.b16 %v1944, %v1940
      %v2157 = vpack.c.b16 %v1945, %v1941
      %v2158 = vpack.c.b16 %v1946, %v1942
      %v2159 = vpack.c.b16 %v1951, %v1947
      %v2160 = vpack.c.b16 %v1952, %v1948
      %v2161 = vpack.c.b16 %v1953, %v1949
      %v2162 = vpack.c.b16 %v1954, %v1950
      %v2163 = vpack.c.b16 %v1959, %v1955
      %v2164 = vpack.c.b16 %v1960, %v1956
      %v2165 = vpack.c.b16 %v1961, %v1957
      %v2166 = vpack.c.b16 %v1962, %v1958
      %v2167 = vpack.c.b16 %v1967, %v1963
      %v2168 = vpack.c.b16 %v1968, %v1964
      %v2169 = vpack.c.b16 %v1969, %v1965
      %v2170 = vpack.c.b16 %v1970, %v1966
      %v2171 = vpack.c.b16 %v1975, %v1971
      %v2172 = vpack.c.b16 %v1976, %v1972
      %v2173 = vpack.c.b16 %v1977, %v1973
      %v2174 = vpack.c.b16 %v1978, %v1974
      %v2175 = vpack.c.b16 %v1983, %v1979
      %v2176 = vpack.c.b16 %v1984, %v1980
      %v2177 = vpack.c.b16 %v1985, %v1981
      %v2178 = vpack.c.b16 %v1986, %v1982
      %2371 = vmatprep.subr.bf16.mxu0 %v1988
      %2372 = vmatpush1.bf16.msra.mxu0 %v1987
      %2373 = vmatprep.subr.bf16.mxu0 %v1992
      %2374 = vmatpush1.bf16.msra.mxu0 %v1991
      %2375 = vmatprep.subr.bf16.mxu0 %v1996
      %2376 = vmatpush1.bf16.msra.mxu0 %v1995
      %2377 = vmatprep.subr.bf16.mxu0 %v2000
      %2378 = vmatpush1.bf16.msra.mxu0 %v1999
      %2379 = vmatprep.subr.bf16.mxu0 %v2004
      %2380 = vmatpush1.bf16.msra.mxu0 %v2003
      %2381 = vmatprep.subr.bf16.mxu0 %v2008
      %2382 = vmatpush1.bf16.msra.mxu0 %v2007
      %2383 = vmatprep.subr.bf16.mxu0 %v2012
      %2384 = vmatpush1.bf16.msra.mxu0 %v2011
      %2385 = vmatprep.subr.bf16.mxu0 %v2016
      %2386 = vmatpush1.bf16.msra.mxu0 %v2015
      %2387 = vmatprep.subr.bf16.mxu0 %v2020
      %2388 = vmatpush1.bf16.msra.mxu0 %v2019
      %2389 = vmatprep.subr.bf16.mxu0 %v2024
      %2390 = vmatpush1.bf16.msra.mxu0 %v2023
      %2391 = vmatprep.subr.bf16.mxu0 %v2028
      %2392 = vmatpush1.bf16.msra.mxu0 %v2027
      %2393 = vmatprep.subr.bf16.mxu0 %v2032
      %2394 = vmatpush1.bf16.msra.mxu0 %v2031
      %2395 = vmatprep.subr.bf16.mxu0 %v2036
      %2396 = vmatpush1.bf16.msra.mxu0 %v2035
      %2397 = vmatprep.subr.bf16.mxu0 %v2040
      %2398 = vmatpush1.bf16.msra.mxu0 %v2039
      %2399 = vmatprep.subr.bf16.mxu0 %v2044
      %2400 = vmatpush1.bf16.msra.mxu0 %v2043
      %2401 = vmatprep.subr.bf16.mxu0 %v2048
      %2402 = vmatpush1.bf16.msra.mxu0 %v2047
      %2403 = vmatprep.mubr.bf16.mxu0 %v1208
      %2404 = vmatmul.mubr.bf16.gmra.mrb[0].mxu0 %v1207
      %v2405 = vpop.f32.mrb[0].mxu0
      %v2406 = vadd.f32 0.0, %v2405
      %v2407 = vpop.f32.mrb[0].mxu0
      %v2408 = vadd.f32 0.0, %v2407
      %v2409 = vpop.f32.mrb[0].mxu0
      %v2410 = vadd.f32 0.0, %v2409
      %v2411 = vpop.f32.mrb[0].mxu0
      %v2412 = vadd.f32 0.0, %v2411
      %2413 = vmatprep.mubr.bf16.mxu0 %v1210
      %2414 = vmatmul.mubr.bf16.gmra.mrb[0].mxu0 %v1209
      %v2415 = vpop.f32.mrb[0].mxu0
      %v2416 = vadd.f32 0.0, %v2415
      %v2417 = vpop.f32.mrb[0].mxu0
      %v2418 = vadd.f32 0.0, %v2417
      %v2419 = vpop.f32.mrb[0].mxu0
      %v2420 = vadd.f32 0.0, %v2419
      %v2421 = vpop.f32.mrb[0].mxu0
      %v2422 = vadd.f32 0.0, %v2421
      %2423 = vmatprep.mubr.bf16.mxu0 %v1212
      %2424 = vmatmul.mubr.bf16.gmra.mrb[0].mxu0 %v1211
      %v2425 = vpop.f32.mrb[0].mxu0
      %v2426 = vadd.f32 0.0, %v2425
      %v2427 = vpop.f32.mrb[0].mxu0
      %v2428 = vadd.f32 0.0, %v2427
      %v2429 = vpop.f32.mrb[0].mxu0
      %v2430 = vadd.f32 0.0, %v2429
      %v2431 = vpop.f32.mrb[0].mxu0
      %v2432 = vadd.f32 0.0, %v2431
      %2433 = vmatprep.mubr.bf16.mxu0 %v1214
      %2434 = vmatmul.mubr.bf16.gmra.mrb[0].mxu0 %v1213
      %v2435 = vpop.f32.mrb[0].mxu0
      %v2436 = vadd.f32 0.0, %v2435
      %v2437 = vpop.f32.mrb[0].mxu0
      %v2438 = vadd.f32 0.0, %v2437
      %v2439 = vpop.f32.mrb[0].mxu0
      %v2440 = vadd.f32 0.0, %v2439
      %v2441 = vpop.f32.mrb[0].mxu0
      %v2442 = vadd.f32 0.0, %v2441
      %2443 = vdwg.mxu0
      %2444 = vmatprep.subr.bf16.mxu0 %v2052
      %2445 = vmatpush1.bf16.msra.mxu0 %v2051
      %2446 = vmatprep.subr.bf16.mxu0 %v2056
      %2447 = vmatpush1.bf16.msra.mxu0 %v2055
      %2448 = vmatprep.subr.bf16.mxu0 %v2060
      %2449 = vmatpush1.bf16.msra.mxu0 %v2059
      %2450 = vmatprep.subr.bf16.mxu0 %v2064
      %2451 = vmatpush1.bf16.msra.mxu0 %v2063
      %2452 = vmatprep.subr.bf16.mxu0 %v2068
      %2453 = vmatpush1.bf16.msra.mxu0 %v2067
      %2454 = vmatprep.subr.bf16.mxu0 %v2072
      %2455 = vmatpush1.bf16.msra.mxu0 %v2071
      %2456 = vmatprep.subr.bf16.mxu0 %v2076
      %2457 = vmatpush1.bf16.msra.mxu0 %v2075
      %2458 = vmatprep.subr.bf16.mxu0 %v2080
      %2459 = vmatpush1.bf16.msra.mxu0 %v2079
      %2460 = vmatprep.subr.bf16.mxu0 %v2084
      %2461 = vmatpush1.bf16.msra.mxu0 %v2083
      %2462 = vmatprep.subr.bf16.mxu0 %v2088
      %2463 = vmatpush1.bf16.msra.mxu0 %v2087
      %2464 = vmatprep.subr.bf16.mxu0 %v2092
      %2465 = vmatpush1.bf16.msra.mxu0 %v2091
      %2466 = vmatprep.subr.bf16.mxu0 %v2096
      %2467 = vmatpush1.bf16.msra.mxu0 %v2095
      %2468 = vmatprep.subr.bf16.mxu0 %v2100
      %2469 = vmatpush1.bf16.msra.mxu0 %v2099
      %2470 = vmatprep.subr.bf16.mxu0 %v2104
      %2471 = vmatpush1.bf16.msra.mxu0 %v2103
      %2472 = vmatprep.subr.bf16.mxu0 %v2108
      %2473 = vmatpush1.bf16.msra.mxu0 %v2107
      %2474 = vmatprep.subr.bf16.mxu0 %v2112
      %2475 = vmatpush1.bf16.msra.mxu0 %v2111
      %2476 = vmatprep.mubr.bf16.mxu0 %v1210
      %2477 = vmatmul.mubr.bf16.gmra.mrb[0].mxu0 %v1209
      %v2478 = vpop.f32.mrb[0].mxu0
      %v2479 = vadd.f32 %v2406, %v2478
      %v2480 = vpop.f32.mrb[0].mxu0
      %v2481 = vadd.f32 %v2408, %v2480
      %v2482 = vpop.f32.mrb[0].mxu0
      %v2483 = vadd.f32 %v2410, %v2482
      %v2484 = vpop.f32.mrb[0].mxu0
      %v2485 = vadd.f32 %v2412, %v2484
      %2486 = vmatprep.mubr.bf16.mxu0 %v1212
      %2487 = vmatmul.mubr.bf16.gmra.mrb[0].mxu0 %v1211
      %v2488 = vpop.f32.mrb[0].mxu0
      %v2489 = vadd.f32 %v2416, %v2488
      %v2490 = vpop.f32.mrb[0].mxu0
      %v2491 = vadd.f32 %v2418, %v2490
      %v2492 = vpop.f32.mrb[0].mxu0
      %v2493 = vadd.f32 %v2420, %v2492
      %v2494 = vpop.f32.mrb[0].mxu0
      %v2495 = vadd.f32 %v2422, %v2494
      %2496 = vmatprep.mubr.bf16.mxu0 %v1214
      %2497 = vmatmul.mubr.bf16.gmra.mrb[0].mxu0 %v1213
      %v2498 = vpop.f32.mrb[0].mxu0
      %v2499 = vadd.f32 %v2426, %v2498
      %v2500 = vpop.f32.mrb[0].mxu0
      %v2501 = vadd.f32 %v2428, %v2500
      %v2502 = vpop.f32.mrb[0].mxu0
      %v2503 = vadd.f32 %v2430, %v2502
      %v2504 = vpop.f32.mrb[0].mxu0
      %v2505 = vadd.f32 %v2432, %v2504
      %2506 = vmatprep.mubr.bf16.mxu0 %v1216
      %2507 = vmatmul.mubr.bf16.gmra.mrb[0].mxu0 %v1215
      %v2508 = vpop.f32.mrb[0].mxu0
      %v2509 = vadd.f32 %v2436, %v2508
      %v2510 = vpop.f32.mrb[0].mxu0
      %v2511 = vadd.f32 %v2438, %v2510
      %v2512 = vpop.f32.mrb[0].mxu0
      %v2513 = vadd.f32 %v2440, %v2512
      %v2514 = vpop.f32.mrb[0].mxu0
      %v2515 = vadd.f32 %v2442, %v2514
      %2516 = vdwg.mxu0
      %2517 = vmatprep.subr.bf16.mxu0 %v2116
      %2518 = vmatpush1.bf16.msra.mxu0 %v2115
      %2519 = vmatprep.subr.bf16.mxu0 %v2120
      %2520 = vmatpush1.bf16.msra.mxu0 %v2119
      %2521 = vmatprep.subr.bf16.mxu0 %v2124
      %2522 = vmatpush1.bf16.msra.mxu0 %v2123
      %2523 = vmatprep.subr.bf16.mxu0 %v2128
      %2524 = vmatpush1.bf16.msra.mxu0 %v2127
      %2525 = vmatprep.subr.bf16.mxu0 %v2132
      %2526 = vmatpush1.bf16.msra.mxu0 %v2131
      %2527 = vmatprep.subr.bf16.mxu0 %v2136
      %2528 = vmatpush1.bf16.msra.mxu0 %v2135
      %2529 = vmatprep.subr.bf16.mxu0 %v2140
      %2530 = vmatpush1.bf16.msra.mxu0 %v2139
      %2531 = vmatprep.subr.bf16.mxu0 %v2144
      %2532 = vmatpush1.bf16.msra.mxu0 %v2143
      %2533 = vmatprep.subr.bf16.mxu0 %v2148
      %2534 = vmatpush1.bf16.msra.mxu0 %v2147
      %2535 = vmatprep.subr.bf16.mxu0 %v2152
      %2536 = vmatpush1.bf16.msra.mxu0 %v2151
      %2537 = vmatprep.subr.bf16.mxu0 %v2156
      %2538 = vmatpush1.bf16.msra.mxu0 %v2155
      %2539 = vmatprep.subr.bf16.mxu0 %v2160
      %2540 = vmatpush1.bf16.msra.mxu0 %v2159
      %2541 = vmatprep.subr.bf16.mxu0 %v2164
      %2542 = vmatpush1.bf16.msra.mxu0 %v2163
      %2543 = vmatprep.subr.bf16.mxu0 %v2168
      %2544 = vmatpush1.bf16.msra.mxu0 %v2167
      %2545 = vmatprep.subr.bf16.mxu0 %v2172
      %2546 = vmatpush1.bf16.msra.mxu0 %v2171
      %2547 = vmatprep.subr.bf16.mxu0 %v2176
      %2548 = vmatpush1.bf16.msra.mxu0 %v2175
      %2549 = vmatprep.mubr.bf16.mxu0 %v1212
      %2550 = vmatmul.mubr.bf16.gmra.mrb[0].mxu0 %v1211
      %v2551 = vpop.f32.mrb[0].mxu0
      %v2552 = vadd.f32 %v2479, %v2551
      %v2553 = vpop.f32.mrb[0].mxu0
      %v2554 = vadd.f32 %v2481, %v2553
      %v2555 = vpop.f32.mrb[0].mxu0
      %v2556 = vadd.f32 %v2483, %v2555
      %v2557 = vpop.f32.mrb[0].mxu0
      %v2558 = vadd.f32 %v2485, %v2557
      %2559 = vmatprep.mubr.bf16.mxu0 %v1214
      %2560 = vmatmul.mubr.bf16.gmra.mrb[0].mxu0 %v1213
      %v2561 = vpop.f32.mrb[0].mxu0
      %v2562 = vadd.f32 %v2489, %v2561
      %v2563 = vpop.f32.mrb[0].mxu0
      %v2564 = vadd.f32 %v2491, %v2563
      %v2565 = vpop.f32.mrb[0].mxu0
      %v2566 = vadd.f32 %v2493, %v2565
      %v2567 = vpop.f32.mrb[0].mxu0
      %v2568 = vadd.f32 %v2495, %v2567
      %2569 = vmatprep.mubr.bf16.mxu0 %v1216
      %2570 = vmatmul.mubr.bf16.gmra.mrb[0].mxu0 %v1215
      %v2571 = vpop.f32.mrb[0].mxu0
      %v2572 = vadd.f32 %v2499, %v2571
      %v2573 = vpop.f32.mrb[0].mxu0
      %v2574 = vadd.f32 %v2501, %v2573
      %v2575 = vpop.f32.mrb[0].mxu0
      %v2576 = vadd.f32 %v2503, %v2575
      %v2577 = vpop.f32.mrb[0].mxu0
      %v2578 = vadd.f32 %v2505, %v2577
      %2579 = vmatprep.mubr.bf16.mxu0 %v1218
      %2580 = vmatmul.mubr.bf16.gmra.mrb[0].mxu0 %v1217
      %v2581 = vpop.f32.mrb[0].mxu0
      %v2582 = vadd.f32 %v2509, %v2581
      %v2583 = vpop.f32.mrb[0].mxu0
      %v2584 = vadd.f32 %v2511, %v2583
      %v2585 = vpop.f32.mrb[0].mxu0
      %v2586 = vadd.f32 %v2513, %v2585
      %v2587 = vpop.f32.mrb[0].mxu0
      %v2588 = vadd.f32 %v2515, %v2587
      %2589 = vdwg.mxu0
      %2590 = vmatprep.subr.bf16.mxu0 %v1990
      %2591 = vmatpush1.bf16.msra.mxu0 %v1989
      %2592 = vmatprep.subr.bf16.mxu0 %v1994
      %2593 = vmatpush1.bf16.msra.mxu0 %v1993
      %2594 = vmatprep.subr.bf16.mxu0 %v1998
      %2595 = vmatpush1.bf16.msra.mxu0 %v1997
      %2596 = vmatprep.subr.bf16.mxu0 %v2002
      %2597 = vmatpush1.bf16.msra.mxu0 %v2001
      %2598 = vmatprep.subr.bf16.mxu0 %v2006
      %2599 = vmatpush1.bf16.msra.mxu0 %v2005
      %2600 = vmatprep.subr.bf16.mxu0 %v2010
      %2601 = vmatpush1.bf16.msra.mxu0 %v2009
      %2602 = vmatprep.subr.bf16.mxu0 %v2014
      %2603 = vmatpush1.bf16.msra.mxu0 %v2013
      %2604 = vmatprep.subr.bf16.mxu0 %v2018
      %2605 = vmatpush1.bf16.msra.mxu0 %v2017
      %2606 = vmatprep.subr.bf16.mxu0 %v2022
      %2607 = vmatpush1.bf16.msra.mxu0 %v2021
      %2608 = vmatprep.subr.bf16.mxu0 %v2026
      %2609 = vmatpush1.bf16.msra.mxu0 %v2025
      %2610 = vmatprep.subr.bf16.mxu0 %v2030
      %2611 = vmatpush1.bf16.msra.mxu0 %v2029
      %2612 = vmatprep.subr.bf16.mxu0 %v2034
      %2613 = vmatpush1.bf16.msra.mxu0 %v2033
      %2614 = vmatprep.subr.bf16.mxu0 %v2038
      %2615 = vmatpush1.bf16.msra.mxu0 %v2037
      %2616 = vmatprep.subr.bf16.mxu0 %v2042
      %2617 = vmatpush1.bf16.msra.mxu0 %v2041
      %2618 = vmatprep.subr.bf16.mxu0 %v2046
      %2619 = vmatpush1.bf16.msra.mxu0 %v2045
      %2620 = vmatprep.subr.bf16.mxu0 %v2050
      %2621 = vmatpush1.bf16.msra.mxu0 %v2049
      %2622 = vmatprep.mubr.bf16.mxu0 %v1208
      %2623 = vmatmul.mubr.bf16.gmra.mrb[0].mxu0 %v1207
      %v2624 = vpop.f32.mrb[0].mxu0
      %v2625 = vadd.f32 0.0, %v2624
      %v2626 = vpop.f32.mrb[0].mxu0
      %v2627 = vadd.f32 0.0, %v2626
      %v2628 = vpop.f32.mrb[0].mxu0
      %v2629 = vadd.f32 0.0, %v2628
      %v2630 = vpop.f32.mrb[0].mxu0
      %v2631 = vadd.f32 0.0, %v2630
      %2632 = vmatprep.mubr.bf16.mxu0 %v1210
      %2633 = vmatmul.mubr.bf16.gmra.mrb[0].mxu0 %v1209
      %v2634 = vpop.f32.mrb[0].mxu0
      %v2635 = vadd.f32 0.0, %v2634
      %v2636 = vpop.f32.mrb[0].mxu0
      %v2637 = vadd.f32 0.0, %v2636
      %v2638 = vpop.f32.mrb[0].mxu0
      %v2639 = vadd.f32 0.0, %v2638
      %v2640 = vpop.f32.mrb[0].mxu0
      %v2641 = vadd.f32 0.0, %v2640
      %2642 = vmatprep.mubr.bf16.mxu0 %v1212
      %2643 = vmatmul.mubr.bf16.gmra.mrb[0].mxu0 %v1211
      %v2644 = vpop.f32.mrb[0].mxu0
      %v2645 = vadd.f32 0.0, %v2644
      %v2646 = vpop.f32.mrb[0].mxu0
      %v2647 = vadd.f32 0.0, %v2646
      %v2648 = vpop.f32.mrb[0].mxu0
      %v2649 = vadd.f32 0.0, %v2648
      %v2650 = vpop.f32.mrb[0].mxu0
      %v2651 = vadd.f32 0.0, %v2650
      %2652 = vmatprep.mubr.bf16.mxu0 %v1214
      %2653 = vmatmul.mubr.bf16.gmra.mrb[0].mxu0 %v1213
      %v2654 = vpop.f32.mrb[0].mxu0
      %v2655 = vadd.f32 0.0, %v2654
      %v2656 = vpop.f32.mrb[0].mxu0
      %v2657 = vadd.f32 0.0, %v2656
      %v2658 = vpop.f32.mrb[0].mxu0
      %v2659 = vadd.f32 0.0, %v2658
      %v2660 = vpop.f32.mrb[0].mxu0
      %v2661 = vadd.f32 0.0, %v2660
      %2662 = vdwg.mxu0
      %2663 = vmatprep.subr.bf16.mxu0 %v2054
      %2664 = vmatpush1.bf16.msra.mxu0 %v2053
      %2665 = vmatprep.subr.bf16.mxu0 %v2058
      %2666 = vmatpush1.bf16.msra.mxu0 %v2057
      %2667 = vmatprep.subr.bf16.mxu0 %v2062
      %2668 = vmatpush1.bf16.msra.mxu0 %v2061
      %2669 = vmatprep.subr.bf16.mxu0 %v2066
      %2670 = vmatpush1.bf16.msra.mxu0 %v2065
      %2671 = vmatprep.subr.bf16.mxu0 %v2070
      %2672 = vmatpush1.bf16.msra.mxu0 %v2069
      %2673 = vmatprep.subr.bf16.mxu0 %v2074
      %2674 = vmatpush1.bf16.msra.mxu0 %v2073
      %2675 = vmatprep.subr.bf16.mxu0 %v2078
      %2676 = vmatpush1.bf16.msra.mxu0 %v2077
      %2677 = vmatprep.subr.bf16.mxu0 %v2082
      %2678 = vmatpush1.bf16.msra.mxu0 %v2081
      %2679 = vmatprep.subr.bf16.mxu0 %v2086
      %2680 = vmatpush1.bf16.msra.mxu0 %v2085
      %2681 = vmatprep.subr.bf16.mxu0 %v2090
      %2682 = vmatpush1.bf16.msra.mxu0 %v2089
      %2683 = vmatprep.subr.bf16.mxu0 %v2094
      %2684 = vmatpush1.bf16.msra.mxu0 %v2093
      %2685 = vmatprep.subr.bf16.mxu0 %v2098
      %2686 = vmatpush1.bf16.msra.mxu0 %v2097
      %2687 = vmatprep.subr.bf16.mxu0 %v2102
      %2688 = vmatpush1.bf16.msra.mxu0 %v2101
      %2689 = vmatprep.subr.bf16.mxu0 %v2106
      %2690 = vmatpush1.bf16.msra.mxu0 %v2105
      %2691 = vmatprep.subr.bf16.mxu0 %v2110
      %2692 = vmatpush1.bf16.msra.mxu0 %v2109
      %2693 = vmatprep.subr.bf16.mxu0 %v2114
      %2694 = vmatpush1.bf16.msra.mxu0 %v2113
      %2695 = vmatprep.mubr.bf16.mxu0 %v1210
      %2696 = vmatmul.mubr.bf16.gmra.mrb[0].mxu0 %v1209
      %v2697 = vpop.f32.mrb[0].mxu0
      %v2698 = vadd.f32 %v2625, %v2697
      %v2699 = vpop.f32.mrb[0].mxu0
      %v2700 = vadd.f32 %v2627, %v2699
      %v2701 = vpop.f32.mrb[0].mxu0
      %v2702 = vadd.f32 %v2629, %v2701
      %v2703 = vpop.f32.mrb[0].mxu0
      %v2704 = vadd.f32 %v2631, %v2703
      %2705 = vmatprep.mubr.bf16.mxu0 %v1212
      %2706 = vmatmul.mubr.bf16.gmra.mrb[0].mxu0 %v1211
      %v2707 = vpop.f32.mrb[0].mxu0
      %v2708 = vadd.f32 %v2635, %v2707
      %v2709 = vpop.f32.mrb[0].mxu0
      %v2710 = vadd.f32 %v2637, %v2709
      %v2711 = vpop.f32.mrb[0].mxu0
      %v2712 = vadd.f32 %v2639, %v2711
      %v2713 = vpop.f32.mrb[0].mxu0
      %v2714 = vadd.f32 %v2641, %v2713
      %2715 = vmatprep.mubr.bf16.mxu0 %v1214
      %2716 = vmatmul.mubr.bf16.gmra.mrb[0].mxu0 %v1213
      %v2717 = vpop.f32.mrb[0].mxu0
      %v2718 = vadd.f32 %v2645, %v2717
      %v2719 = vpop.f32.mrb[0].mxu0
      %v2720 = vadd.f32 %v2647, %v2719
      %v2721 = vpop.f32.mrb[0].mxu0
      %v2722 = vadd.f32 %v2649, %v2721
      %v2723 = vpop.f32.mrb[0].mxu0
      %v2724 = vadd.f32 %v2651, %v2723
      %2725 = vmatprep.mubr.bf16.mxu0 %v1216
      %2726 = vmatmul.mubr.bf16.gmra.mrb[0].mxu0 %v1215
      %v2727 = vpop.f32.mrb[0].mxu0
      %v2728 = vadd.f32 %v2655, %v2727
      %v2729 = vpop.f32.mrb[0].mxu0
      %v2730 = vadd.f32 %v2657, %v2729
      %v2731 = vpop.f32.mrb[0].mxu0
      %v2732 = vadd.f32 %v2659, %v2731
      %v2733 = vpop.f32.mrb[0].mxu0
      %v2734 = vadd.f32 %v2661, %v2733
      %2735 = vdwg.mxu0
      %2736 = vmatprep.subr.bf16.mxu0 %v2118
      %2737 = vmatpush1.bf16.msra.mxu0 %v2117
      %2738 = vmatprep.subr.bf16.mxu0 %v2122
      %2739 = vmatpush1.bf16.msra.mxu0 %v2121
      %2740 = vmatprep.subr.bf16.mxu0 %v2126
      %2741 = vmatpush1.bf16.msra.mxu0 %v2125
      %2742 = vmatprep.subr.bf16.mxu0 %v2130
      %2743 = vmatpush1.bf16.msra.mxu0 %v2129
      %2744 = vmatprep.subr.bf16.mxu0 %v2134
      %2745 = vmatpush1.bf16.msra.mxu0 %v2133
      %2746 = vmatprep.subr.bf16.mxu0 %v2138
      %2747 = vmatpush1.bf16.msra.mxu0 %v2137
      %2748 = vmatprep.subr.bf16.mxu0 %v2142
      %2749 = vmatpush1.bf16.msra.mxu0 %v2141
      %2750 = vmatprep.subr.bf16.mxu0 %v2146
      %2751 = vmatpush1.bf16.msra.mxu0 %v2145
      %2752 = vmatprep.subr.bf16.mxu0 %v2150
      %2753 = vmatpush1.bf16.msra.mxu0 %v2149
      %2754 = vmatprep.subr.bf16.mxu0 %v2154
      %2755 = vmatpush1.bf16.msra.mxu0 %v2153
      %2756 = vmatprep.subr.bf16.mxu0 %v2158
      %2757 = vmatpush1.bf16.msra.mxu0 %v2157
      %2758 = vmatprep.subr.bf16.mxu0 %v2162
      %2759 = vmatpush1.bf16.msra.mxu0 %v2161
      %2760 = vmatprep.subr.bf16.mxu0 %v2166
      %2761 = vmatpush1.bf16.msra.mxu0 %v2165
      %2762 = vmatprep.subr.bf16.mxu0 %v2170
      %2763 = vmatpush1.bf16.msra.mxu0 %v2169
      %2764 = vmatprep.subr.bf16.mxu0 %v2174
      %2765 = vmatpush1.bf16.msra.mxu0 %v2173
      %2766 = vmatprep.subr.bf16.mxu0 %v2178
      %2767 = vmatpush1.bf16.msra.mxu0 %v2177
      %2768 = vmatprep.mubr.bf16.mxu0 %v1212
      %2769 = vmatmul.mubr.bf16.gmra.mrb[0].mxu0 %v1211
      %v2770 = vpop.f32.mrb[0].mxu0
      %v2771 = vadd.f32 %v2698, %v2770
      %v2772 = vpop.f32.mrb[0].mxu0
      %v2773 = vadd.f32 %v2700, %v2772
      %v2774 = vpop.f32.mrb[0].mxu0
      %v2775 = vadd.f32 %v2702, %v2774
      %v2776 = vpop.f32.mrb[0].mxu0
      %v2777 = vadd.f32 %v2704, %v2776
      %2778 = vmatprep.mubr.bf16.mxu0 %v1214
      %2779 = vmatmul.mubr.bf16.gmra.mrb[0].mxu0 %v1213
      %v2780 = vpop.f32.mrb[0].mxu0
      %v2781 = vadd.f32 %v2708, %v2780
      %v2782 = vpop.f32.mrb[0].mxu0
      %v2783 = vadd.f32 %v2710, %v2782
      %v2784 = vpop.f32.mrb[0].mxu0
      %v2785 = vadd.f32 %v2712, %v2784
      %v2786 = vpop.f32.mrb[0].mxu0
      %v2787 = vadd.f32 %v2714, %v2786
      %2788 = vmatprep.mubr.bf16.mxu0 %v1216
      %2789 = vmatmul.mubr.bf16.gmra.mrb[0].mxu0 %v1215
      %v2790 = vpop.f32.mrb[0].mxu0
      %v2791 = vadd.f32 %v2718, %v2790
      %v2792 = vpop.f32.mrb[0].mxu0
      %v2793 = vadd.f32 %v2720, %v2792
      %v2794 = vpop.f32.mrb[0].mxu0
      %v2795 = vadd.f32 %v2722, %v2794
      %v2796 = vpop.f32.mrb[0].mxu0
      %v2797 = vadd.f32 %v2724, %v2796
      %2798 = vmatprep.mubr.bf16.mxu0 %v1218
      %2799 = vmatmul.mubr.bf16.gmra.mrb[0].mxu0 %v1217
      %v2800 = vpop.f32.mrb[0].mxu0
      %v2801 = vadd.f32 %v2728, %v2800
      %v2802 = vpop.f32.mrb[0].mxu0
      %v2803 = vadd.f32 %v2730, %v2802
      %v2804 = vpop.f32.mrb[0].mxu0
      %v2805 = vadd.f32 %v2732, %v2804
      %v2806 = vpop.f32.mrb[0].mxu0
      %v2807 = vadd.f32 %v2734, %v2806
      %2808 = vdwg.mxu0
      %v2809 = vmax.f32 %v2552, %v2554
      %v2810 = vmax.f32 %v2556, %v2558
      %v2811 = vmax.f32 %v2562, %v2564
      %v2812 = vmax.f32 %v2566, %v2568
      %v2813 = vmax.f32 %v2572, %v2574
      %v2814 = vmax.f32 %v2576, %v2578
      %v2815 = vmax.f32 %v2582, %v2584
      %v2816 = vmax.f32 %v2586, %v2588
      %v2817 = vmax.f32 %v2771, %v2773
      %v2818 = vmax.f32 %v2775, %v2777
      %v2819 = vmax.f32 %v2781, %v2783
      %v2820 = vmax.f32 %v2785, %v2787
      %v2821 = vmax.f32 %v2791, %v2793
      %v2822 = vmax.f32 %v2795, %v2797
      %v2823 = vmax.f32 %v2801, %v2803
      %v2824 = vmax.f32 %v2805, %v2807
      %v2825 = vmax.f32 %v2809, %v2817
      %v2826 = vmax.f32 %v2810, %v2818
      %v2827 = vmax.f32 %v2811, %v2819
      %v2828 = vmax.f32 %v2812, %v2820
      %v2829 = vmax.f32 %v2813, %v2821
      %v2830 = vmax.f32 %v2814, %v2822
      %v2831 = vmax.f32 %v2815, %v2823
      %v2832 = vmax.f32 %v2816, %v2824
      %v2833 = vld [vmem:[%s6] sm:$0x1]
      %v2835 = vlaneseq
      %v2836 = vshrl.u32 %v2835, 7
      %v2837 = vsub.s32 0, %v2836
      %v2838 = vrot.slane %v2833, %v2837
      %v2840 = vadd.f32 %v2825, %v2838
      %v2841 = vadd.f32 %v2826, %v2838
      %v2842 = vadd.f32 %v2827, %v2838
      %v2843 = vadd.f32 %v2828, %v2838
      %v2844 = vadd.f32 %v2829, %v2838
      %v2845 = vadd.f32 %v2830, %v2838
      %v2846 = vadd.f32 %v2831, %v2838
      %v2847 = vadd.f32 %v2832, %v2838
      %v2848 = vmax.f32 %v2840, 0.0
      %v2849 = vmax.f32 %v2841, 0.0
      %v2850 = vmax.f32 %v2842, 0.0
      %v2851 = vmax.f32 %v2843, 0.0
      %v2852 = vmax.f32 %v2844, 0.0
      %v2853 = vmax.f32 %v2845, 0.0
      %v2854 = vmax.f32 %v2846, 0.0
      %v2855 = vmax.f32 %v2847, 0.0
      %v2856 = vpack.c.bf16 %v2849, %v2848
      %v2857 = vpack.c.bf16 %v2851, %v2850
      %v2858 = vpack.c.bf16 %v2853, %v2852
      %v2859 = vpack.c.bf16 %v2855, %v2854
      %v2860 = vld [vmem:[%s3] sm:$0xf]
      %v2861 = vld [vmem:[%s3 + $0x4] sm:$0xf]
      %v2862 = vld [vmem:[%s3 + $0x8] sm:$0xf]
      %v2863 = vld [vmem:[%s3 + $0xc] sm:$0xf]
      %v2864 = vld [vmem:[%s3 + $0x10] sm:$0xf]
      %v2865 = vld [vmem:[%s3 + $0x14] sm:$0xf]
      %v2866 = vld [vmem:[%s3 + $0x18] sm:$0xf]
      %v2867 = vld [vmem:[%s3 + $0x1c] sm:$0xf]
      %v2868 = vld [vmem:[%s3 + $0x20] sm:$0xf]
      %v2869 = vld [vmem:[%s3 + $0x24] sm:$0xf]
      %v2870 = vld [vmem:[%s3 + $0x28] sm:$0xf]
      %v2871 = vld [vmem:[%s3 + $0x2c] sm:$0xf]
      %v2872 = vld [vmem:[%s3 + $0x30] sm:$0xf]
      %v2873 = vld [vmem:[%s3 + $0x34] sm:$0xf]
      %v2874 = vld [vmem:[%s3 + $0x38] sm:$0xf]
      %v2875 = vld [vmem:[%s3 + $0x3c] sm:$0xf]
      %v2876 = vld [vmem:[%s3 + $0x40] sm:$0xf]
      %v2877 = vld [vmem:[%s3 + $0x44] sm:$0xf]
      %v2878 = vld [vmem:[%s3 + $0x48] sm:$0xf]
      %v2879 = vld [vmem:[%s3 + $0x4c] sm:$0xf]
      %v2880 = vld [vmem:[%s3 + $0x50] sm:$0xf]
      %v2881 = vld [vmem:[%s3 + $0x54] sm:$0xf]
      %v2882 = vld [vmem:[%s3 + $0x58] sm:$0xf]
      %v2883 = vld [vmem:[%s3 + $0x5c] sm:$0xf]
      %v2884 = vld [vmem:[%s3 + $0x60] sm:$0xf]
      %v2885 = vld [vmem:[%s3 + $0x64] sm:$0xf]
      %v2886 = vld [vmem:[%s3 + $0x68] sm:$0xf]
      %v2887 = vld [vmem:[%s3 + $0x6c] sm:$0xf]
      %v2888 = vld [vmem:[%s3 + $0x70] sm:$0xf]
      %v2889 = vld [vmem:[%s3 + $0x74] sm:$0xf]
      %v2890 = vld [vmem:[%s3 + $0x78] sm:$0xf]
      %v2891 = vld [vmem:[%s3 + $0x7c] sm:$0xf]
      %v2892 = vld [vmem:[%s3 + $0x80] sm:$0xf]
      %v2893 = vld [vmem:[%s3 + $0x84] sm:$0xf]
      %v2894 = vld [vmem:[%s3 + $0x88] sm:$0xf]
      %v2895 = vld [vmem:[%s3 + $0x8c] sm:$0xf]
      %v2896 = vld [vmem:[%s3 + $0x90] sm:$0xf]
      %v2897 = vld [vmem:[%s3 + $0x94] sm:$0xf]
      %v2898 = vld [vmem:[%s3 + $0x98] sm:$0xf]
      %v2899 = vld [vmem:[%s3 + $0x9c] sm:$0xf]
      %v2900 = vld [vmem:[%s3 + $0xa0] sm:$0xf]
      %v2901 = vld [vmem:[%s3 + $0xa4] sm:$0xf]
      %v2902 = vld [vmem:[%s3 + $0xa8] sm:$0xf]
      %v2903 = vld [vmem:[%s3 + $0xac] sm:$0xf]
      %v2904 = vld [vmem:[%s3 + $0xb0] sm:$0xf]
      %v2905 = vld [vmem:[%s3 + $0xb4] sm:$0xf]
      %v2906 = vld [vmem:[%s3 + $0xb8] sm:$0xf]
      %v2907 = vld [vmem:[%s3 + $0xbc] sm:$0xf]
      %v2908 = vld [vmem:[%s3 + $0xc0] sm:$0xf]
      %v2909 = vld [vmem:[%s3 + $0xc4] sm:$0xf]
      %v2910 = vld [vmem:[%s3 + $0xc8] sm:$0xf]
      %v2911 = vld [vmem:[%s3 + $0xcc] sm:$0xf]
      %v2912 = vld [vmem:[%s3 + $0xd0] sm:$0xf]
      %v2913 = vld [vmem:[%s3 + $0xd4] sm:$0xf]
      %v2914 = vld [vmem:[%s3 + $0xd8] sm:$0xf]
      %v2915 = vld [vmem:[%s3 + $0xdc] sm:$0xf]
      %v2916 = vld [vmem:[%s3 + $0xe0] sm:$0xf]
      %v2917 = vld [vmem:[%s3 + $0xe4] sm:$0xf]
      %v2918 = vld [vmem:[%s3 + $0xe8] sm:$0xf]
      %v2919 = vld [vmem:[%s3 + $0xec] sm:$0xf]
      %v2920 = vld [vmem:[%s3 + $0xf0] sm:$0xf]
      %v2921 = vld [vmem:[%s3 + $0xf4] sm:$0xf]
      %v2922 = vld [vmem:[%s3 + $0xf8] sm:$0xf]
      %v2923 = vld [vmem:[%s3 + $0xfc] sm:$0xf]
      %v2924 = vld [vmem:[%s7] sm:$0x1]
      %v2926 = vlaneseq
      %v2927 = vshrl.u32 %v2926, 7
      %v2928 = vsub.s32 0, %v2927
      %v2929 = vrot.slane %v2924, %v2928
      %v2995 = vunpack.c.l.b16 %v2860
      %v2996 = vunpack.c.l.b16 %v2861
      %v2997 = vunpack.c.l.b16 %v2862
      %v2998 = vunpack.c.l.b16 %v2863
      %v2999 = vunpack.c.l.b16 %v2864
      %v3000 = vunpack.c.l.b16 %v2865
      %v3001 = vunpack.c.l.b16 %v2866
      %v3002 = vunpack.c.l.b16 %v2867
      %v3003 = vunpack.c.l.b16 %v2868
      %v3004 = vunpack.c.l.b16 %v2869
      %v3005 = vunpack.c.l.b16 %v2870
      %v3006 = vunpack.c.l.b16 %v2871
      %v3007 = vunpack.c.l.b16 %v2872
      %v3008 = vunpack.c.l.b16 %v2873
      %v3009 = vunpack.c.l.b16 %v2874
      %v3010 = vunpack.c.l.b16 %v2875
      %v3011 = vunpack.c.l.b16 %v2876
      %v3012 = vunpack.c.l.b16 %v2877
      %v3013 = vunpack.c.l.b16 %v2878
      %v3014 = vunpack.c.l.b16 %v2879
      %v3015 = vunpack.c.l.b16 %v2880
      %v3016 = vunpack.c.l.b16 %v2881
      %v3017 = vunpack.c.l.b16 %v2882
      %v3018 = vunpack.c.l.b16 %v2883
      %v3019 = vunpack.c.l.b16 %v2884
      %v3020 = vunpack.c.l.b16 %v2885
      %v3021 = vunpack.c.l.b16 %v2886
      %v3022 = vunpack.c.l.b16 %v2887
      %v3023 = vunpack.c.l.b16 %v2888
      %v3024 = vunpack.c.l.b16 %v2889
      %v3025 = vunpack.c.l.b16 %v2890
      %v3026 = vunpack.c.l.b16 %v2891
      %v3027 = vunpack.c.l.b16 %v2892
      %v3028 = vunpack.c.l.b16 %v2893
      %v3029 = vunpack.c.l.b16 %v2894
      %v3030 = vunpack.c.l.b16 %v2895
      %v3031 = vunpack.c.l.b16 %v2896
      %v3032 = vunpack.c.l.b16 %v2897
      %v3033 = vunpack.c.l.b16 %v2898
      %v3034 = vunpack.c.l.b16 %v2899
      %v3035 = vunpack.c.l.b16 %v2900
      %v3036 = vunpack.c.l.b16 %v2901
      %v3037 = vunpack.c.l.b16 %v2902
      %v3038 = vunpack.c.l.b16 %v2903
      %v3039 = vunpack.c.l.b16 %v2904
      %v3040 = vunpack.c.l.b16 %v2905
      %v3041 = vunpack.c.l.b16 %v2906
      %v3042 = vunpack.c.l.b16 %v2907
      %v3043 = vunpack.c.l.b16 %v2908
      %v3044 = vunpack.c.l.b16 %v2909
      %v3045 = vunpack.c.l.b16 %v2910
      %v3046 = vunpack.c.l.b16 %v2911
      %v3047 = vunpack.c.l.b16 %v2912
      %v3048 = vunpack.c.l.b16 %v2913
      %v3049 = vunpack.c.l.b16 %v2914
      %v3050 = vunpack.c.l.b16 %v2915
      %v3051 = vunpack.c.l.b16 %v2916
      %v3052 = vunpack.c.l.b16 %v2917
      %v3053 = vunpack.c.l.b16 %v2918
      %v3054 = vunpack.c.l.b16 %v2919
      %v3055 = vunpack.c.l.b16 %v2920
      %v3056 = vunpack.c.l.b16 %v2921
      %v3057 = vunpack.c.l.b16 %v2922
      %v3058 = vunpack.c.l.b16 %v2923
      %v3059 = vpack.c.b16 %v2996, %v2995
      %v3060 = vpack.c.b16 %v2998, %v2997
      %v3061 = vpack.c.b16 %v3000, %v2999
      %v3062 = vpack.c.b16 %v3002, %v3001
      %v3063 = vpack.c.b16 %v3004, %v3003
      %v3064 = vpack.c.b16 %v3006, %v3005
      %v3065 = vpack.c.b16 %v3008, %v3007
      %v3066 = vpack.c.b16 %v3010, %v3009
      %v3067 = vpack.c.b16 %v3012, %v3011
      %v3068 = vpack.c.b16 %v3014, %v3013
      %v3069 = vpack.c.b16 %v3016, %v3015
      %v3070 = vpack.c.b16 %v3018, %v3017
      %v3071 = vpack.c.b16 %v3020, %v3019
      %v3072 = vpack.c.b16 %v3022, %v3021
      %v3073 = vpack.c.b16 %v3024, %v3023
      %v3074 = vpack.c.b16 %v3026, %v3025
      %v3075 = vpack.c.b16 %v3028, %v3027
      %v3076 = vpack.c.b16 %v3030, %v3029
      %v3077 = vpack.c.b16 %v3032, %v3031
      %v3078 = vpack.c.b16 %v3034, %v3033
      %v3079 = vpack.c.b16 %v3036, %v3035
      %v3080 = vpack.c.b16 %v3038, %v3037
      %v3081 = vpack.c.b16 %v3040, %v3039
      %v3082 = vpack.c.b16 %v3042, %v3041
      %v3083 = vpack.c.b16 %v3044, %v3043
      %v3084 = vpack.c.b16 %v3046, %v3045
      %v3085 = vpack.c.b16 %v3048, %v3047
      %v3086 = vpack.c.b16 %v3050, %v3049
      %v3087 = vpack.c.b16 %v3052, %v3051
      %v3088 = vpack.c.b16 %v3054, %v3053
      %v3089 = vpack.c.b16 %v3056, %v3055
      %v3090 = vpack.c.b16 %v3058, %v3057
      %3123 = vmatprep.subr.bf16.mxu0 0
      %3124 = vmatpush1.bf16.msra.mxu0 %v3059
      %3125 = vmatprep.subr.bf16.mxu0 0
      %3126 = vmatpush1.bf16.msra.mxu0 %v3060
      %3127 = vmatprep.subr.bf16.mxu0 0
      %3128 = vmatpush1.bf16.msra.mxu0 %v3061
      %3129 = vmatprep.subr.bf16.mxu0 0
      %3130 = vmatpush1.bf16.msra.mxu0 %v3062
      %3131 = vmatprep.subr.bf16.mxu0 0
      %3132 = vmatpush1.bf16.msra.mxu0 %v3063
      %3133 = vmatprep.subr.bf16.mxu0 0
      %3134 = vmatpush1.bf16.msra.mxu0 %v3064
      %3135 = vmatprep.subr.bf16.mxu0 0
      %3136 = vmatpush1.bf16.msra.mxu0 %v3065
      %3137 = vmatprep.subr.bf16.mxu0 0
      %3138 = vmatpush1.bf16.msra.mxu0 %v3066
      %3139 = vmatprep.subr.bf16.mxu0 0
      %3140 = vmatpush1.bf16.msra.mxu0 %v3067
      %3141 = vmatprep.subr.bf16.mxu0 0
      %3142 = vmatpush1.bf16.msra.mxu0 %v3068
      %3143 = vmatprep.subr.bf16.mxu0 0
      %3144 = vmatpush1.bf16.msra.mxu0 %v3069
      %3145 = vmatprep.subr.bf16.mxu0 0
      %3146 = vmatpush1.bf16.msra.mxu0 %v3070
      %3147 = vmatprep.subr.bf16.mxu0 0
      %3148 = vmatpush1.bf16.msra.mxu0 %v3071
      %3149 = vmatprep.subr.bf16.mxu0 0
      %3150 = vmatpush1.bf16.msra.mxu0 %v3072
      %3151 = vmatprep.subr.bf16.mxu0 0
      %3152 = vmatpush1.bf16.msra.mxu0 %v3073
      %3153 = vmatprep.subr.bf16.mxu0 0
      %3154 = vmatpush1.bf16.msra.mxu0 %v3074
      %3155 = vmatprep.mubr.bf16.mxu0 %v2857
      %3156 = vmatmul.mubr.bf16.gmra.mrb[0].mxu0 %v2856
      %v3157 = vpop.f32.mrb[0].mxu0
      %v3158 = vadd.f32 %v2929, %v3157
      %v3159 = vpop.f32.mrb[0].mxu0
      %v3160 = vpop.f32.mrb[0].mxu0
      %v3161 = vadd.f32 %v2929, %v3160
      %v3162 = vpop.f32.mrb[0].mxu0
      %3163 = vdwg.mxu0
      %3164 = vmatprep.subr.bf16.mxu0 0
      %3165 = vmatpush1.bf16.msra.mxu0 %v3075
      %3166 = vmatprep.subr.bf16.mxu0 0
      %3167 = vmatpush1.bf16.msra.mxu0 %v3076
      %3168 = vmatprep.subr.bf16.mxu0 0
      %3169 = vmatpush1.bf16.msra.mxu0 %v3077
      %3170 = vmatprep.subr.bf16.mxu0 0
      %3171 = vmatpush1.bf16.msra.mxu0 %v3078
      %3172 = vmatprep.subr.bf16.mxu0 0
      %3173 = vmatpush1.bf16.msra.mxu0 %v3079
      %3174 = vmatprep.subr.bf16.mxu0 0
      %3175 = vmatpush1.bf16.msra.mxu0 %v3080
      %3176 = vmatprep.subr.bf16.mxu0 0
      %3177 = vmatpush1.bf16.msra.mxu0 %v3081
      %3178 = vmatprep.subr.bf16.mxu0 0
      %3179 = vmatpush1.bf16.msra.mxu0 %v3082
      %3180 = vmatprep.subr.bf16.mxu0 0
      %3181 = vmatpush1.bf16.msra.mxu0 %v3083
      %3182 = vmatprep.subr.bf16.mxu0 0
      %3183 = vmatpush1.bf16.msra.mxu0 %v3084
      %3184 = vmatprep.subr.bf16.mxu0 0
      %3185 = vmatpush1.bf16.msra.mxu0 %v3085
      %3186 = vmatprep.subr.bf16.mxu0 0
      %3187 = vmatpush1.bf16.msra.mxu0 %v3086
      %3188 = vmatprep.subr.bf16.mxu0 0
      %3189 = vmatpush1.bf16.msra.mxu0 %v3087
      %3190 = vmatprep.subr.bf16.mxu0 0
      %3191 = vmatpush1.bf16.msra.mxu0 %v3088
      %3192 = vmatprep.subr.bf16.mxu0 0
      %3193 = vmatpush1.bf16.msra.mxu0 %v3089
      %3194 = vmatprep.subr.bf16.mxu0 0
      %3195 = vmatpush1.bf16.msra.mxu0 %v3090
      %3196 = vmatprep.mubr.bf16.mxu0 %v2859
      %3197 = vmatmul.mubr.bf16.gmra.mrb[0].mxu0 %v2858
      %v3198 = vpop.f32.mrb[0].mxu0
      %v3199 = vadd.f32 %v3158, %v3198
      %v3200 = vpop.f32.mrb[0].mxu0
      %v3201 = vpop.f32.mrb[0].mxu0
      %v3202 = vadd.f32 %v3161, %v3201
      %v3203 = vpop.f32.mrb[0].mxu0
      %3204 = vdwg.mxu0
      %v3205 = vmax.f32 %v3199, 0.0
      %v3206 = vmax.f32 %v3202, 0.0
      %v3207 = vpack.c.bf16 %v3206, %v3205
      %v3208 = vld [vmem:[%s4] sm:$0xf]
      %v3209 = vld [vmem:[%s4 + $0x4] sm:$0xf]
      %v3210 = vld [vmem:[%s4 + $0x8] sm:$0xf]
      %v3211 = vld [vmem:[%s4 + $0xc] sm:$0xf]
      %v3212 = vld [vmem:[%s4 + $0x10] sm:$0xf]
      %v3213 = vld [vmem:[%s4 + $0x14] sm:$0xf]
      %v3214 = vld [vmem:[%s4 + $0x18] sm:$0xf]
      %v3215 = vld [vmem:[%s4 + $0x1c] sm:$0xf]
      %v3216 = vld [vmem:[%s4 + $0x20] sm:$0xf]
      %v3217 = vld [vmem:[%s4 + $0x24] sm:$0xf]
      %v3218 = vld [vmem:[%s4 + $0x28] sm:$0xf]
      %v3219 = vld [vmem:[%s4 + $0x2c] sm:$0xf]
      %v3220 = vld [vmem:[%s4 + $0x30] sm:$0xf]
      %v3221 = vld [vmem:[%s4 + $0x34] sm:$0xf]
      %v3222 = vld [vmem:[%s4 + $0x38] sm:$0xf]
      %v3223 = vld [vmem:[%s4 + $0x3c] sm:$0xf]
      %v3224 = vld [vmem:[%s8] sm:$0x1]
      %v3226 = vlaneseq
      %v3227 = vshrl.u32 %v3226, 7
      %v3228 = vsub.s32 0, %v3227
      %v3229 = vrot.slane %v3224, %v3228
      %v3247 = vunpack.c.l.b16 %v3208
      %v3248 = vunpack.c.l.b16 %v3209
      %v3249 = vunpack.c.l.b16 %v3210
      %v3250 = vunpack.c.l.b16 %v3211
      %v3251 = vunpack.c.l.b16 %v3212
      %v3252 = vunpack.c.l.b16 %v3213
      %v3253 = vunpack.c.l.b16 %v3214
      %v3254 = vunpack.c.l.b16 %v3215
      %v3255 = vunpack.c.l.b16 %v3216
      %v3256 = vunpack.c.l.b16 %v3217
      %v3257 = vunpack.c.l.b16 %v3218
      %v3258 = vunpack.c.l.b16 %v3219
      %v3259 = vunpack.c.l.b16 %v3220
      %v3260 = vunpack.c.l.b16 %v3221
      %v3261 = vunpack.c.l.b16 %v3222
      %v3262 = vunpack.c.l.b16 %v3223
      %v3263 = vpack.c.b16 %v3248, %v3247
      %v3264 = vpack.c.b16 %v3250, %v3249
      %v3265 = vpack.c.b16 %v3252, %v3251
      %v3266 = vpack.c.b16 %v3254, %v3253
      %v3267 = vpack.c.b16 %v3256, %v3255
      %v3268 = vpack.c.b16 %v3258, %v3257
      %v3269 = vpack.c.b16 %v3260, %v3259
      %v3270 = vpack.c.b16 %v3262, %v3261
      %3279 = vmatprep.subr.bf16.mxu0 0
      %3280 = vmatpush1.bf16.msra.mxu0 %v3263
      %3281 = vmatprep.subr.bf16.mxu0 0
      %3282 = vmatpush1.bf16.msra.mxu0 %v3264
      %3283 = vmatprep.subr.bf16.mxu0 0
      %3284 = vmatpush1.bf16.msra.mxu0 %v3265
      %3285 = vmatprep.subr.bf16.mxu0 0
      %3286 = vmatpush1.bf16.msra.mxu0 %v3266
      %3287 = vmatprep.subr.bf16.mxu0 0
      %3288 = vmatpush1.bf16.msra.mxu0 %v3267
      %3289 = vmatprep.subr.bf16.mxu0 0
      %3290 = vmatpush1.bf16.msra.mxu0 %v3268
      %3291 = vmatprep.subr.bf16.mxu0 0
      %3292 = vmatpush1.bf16.msra.mxu0 %v3269
      %3293 = vmatprep.subr.bf16.mxu0 0
      %3294 = vmatpush1.bf16.msra.mxu0 %v3270
      %3295 = vmatprep.subr.bf16.mxu0 0
      %3296 = vmatpush1.bf16.msra.mxu0 0
      %3297 = vmatprep.subr.bf16.mxu0 0
      %3298 = vmatpush1.bf16.msra.mxu0 0
      %3299 = vmatprep.subr.bf16.mxu0 0
      %3300 = vmatpush1.bf16.msra.mxu0 0
      %3301 = vmatprep.subr.bf16.mxu0 0
      %3302 = vmatpush1.bf16.msra.mxu0 0
      %3303 = vmatprep.subr.bf16.mxu0 0
      %3304 = vmatpush1.bf16.msra.mxu0 0
      %3305 = vmatprep.subr.bf16.mxu0 0
      %3306 = vmatpush1.bf16.msra.mxu0 0
      %3307 = vmatprep.subr.bf16.mxu0 0
      %3308 = vmatpush1.bf16.msra.mxu0 0
      %3309 = vmatprep.subr.bf16.mxu0 0
      %3310 = vmatpush1.bf16.msra.mxu0 0
      %3311 = vmatprep.mubr.bf16.mxu0 0
      %3312 = vmatmul.mubr.bf16.gmra.mrb[0].mxu0 %v3207
      %v3313 = vpop.f32.mrb[0].mxu0
      %v3314 = vadd.f32 %v3229, %v3313
      %v3315 = vpop.f32.mrb[0].mxu0
      %v3316 = vpop.f32.mrb[0].mxu0
      %v3317 = vadd.f32 %v3229, %v3316
      %v3318 = vpop.f32.mrb[0].mxu0
      %3319 = vdwg.mxu0
      %3320 = vmax.xlane.f32.xlu0 %v3314
      %v3321 = vpop.xlane.xlu0 %3320
      %3322 = vmax.xlane.f32.xlu0 %v3317
      %v3323 = vpop.xlane.xlu0 %3322
      %v3324 = vsub.f32 %v3314, %v3321
      %v3325 = vsub.f32 %v3317, %v3323
      %v3326 = vmul.f32 %v3324, 1.442695
      %v3327 = vpow.pop %v3326
      %v3328 = vmul.f32 %v3325, 1.442695
      %v3329 = vpow.pop %v3328
      %3330 = vadd.xlane.f32.xlu0 %v3327
      %v3331 = vpop.xlane.xlu0 %3330
      %3332 = vadd.xlane.f32.xlu0 %v3329
      %v3333 = vpop.xlane.xlu0 %3332
      %v3334 = vlog2.pop %v3331
      %v3335 = vmul.f32 %v3334, 0.6931472
      %v3336 = vlog2.pop %v3333
      %v3337 = vmul.f32 %v3336, 0.6931472
      %v3338 = vsub.f32 %v3324, %v3335
      %v3339 = vsub.f32 %v3325, %v3337
      %3340 = vst [vmem:[%s337] sm:$0xff] %v3338
      %3341 = vst [vmem:[%s337 + $0x8] sm:$0xff] %v3339
      %s3342 = smul.u32 2, %s20
      %p3343 = scmp.lt.s32.totalorder %s3342, 3
      %s3344 = scalar_select %p3343, %s3342, 3
      %s3345 = smul.addr %s3344, 8
      %s3346 = scalar_lea.vmem %s9, %s3345
      // Predicated region
      $region57: #{_lambda_.1} parent=55 // pred_check
        %p3347 = pneg %p232
      $region58: #{_lambda_.1} parent=55 // pred_check_branch
        %3349 = sbr.rel (%p3347) target = $region60
      $region59: #{_lambda_.1} parent=55 // pred_region
        %s3350 = smul.u32 2, %s20
      $region60: #{_lambda_.1} parent=55 // pred_fallthru
        _
    $region56: #{_lambda_.1} parent=5 // pred_fallthru
      _
    %p3351 = scmp.le.s32.totalorder 2, %s15
    // Predicated region
    $region61: #{_lambda_.1} parent=5 // pred_check
      %p3352 = pneg %p3351
    $region62: #{_lambda_.1} parent=5 // pred_check_branch
      %3354 = sbr.rel (%p3352) target = $region64
    $region63: #{_lambda_.1} parent=5 // pred_region
      %s3355 = ssub.s32 %s15, 2
      // Predicated region
      $region65: #{_lambda_.1} parent=63 // pred_check
        %p3356 = pneg %p238
      $region66: #{_lambda_.1} parent=63 // pred_check_branch
        %3358 = sbr.rel (%p3356) target = $region68
      $region67: #{_lambda_.1} parent=63 // pred_region
        %s3359 = smul.u32 2, %s21
        %p3360 = scmp.lt.s32.totalorder %s3359, 3
        %s3361 = scalar_select %p3360, %s3359, 3
        %s3362 = smul.addr %s3361, 8
        %s3363 = scalar_lea.vmem %s9, %s3362
      $region68: #{_lambda_.1} parent=63 // pred_fallthru
        _
    $region64: #{_lambda_.1} parent=5 // pred_fallthru
      _
  $region6: #{_lambda_.1} parent=0 // loop_footer
    %s19 = sadd.s32 1, %s15
  $region7: #{_lambda_.1} parent=0 // loop_footer_branch
    %14 = sbr.rel target = $region3
  $region8: #{_lambda_.1} parent=0 // loop_exit
    _

</llo_original>
